<compile_context>
chip_gen: v7x
topology: tpu7x:2x2x1
jax: 0.10.0
libtpu: 0.0.40
codegen_flags: <defaults>
</compile_context>

<pallas_src>
import functools

import jax
import jax.numpy as jnp
from jax.experimental import pallas as pl
from jax.experimental.pallas import tpu as pltpu

NUM_HEADS = 8        # Transformer(dim_embedding, 8, num_layers)
MLP_RATIO = 2.0      # Transformer default mlp_ratio
LN_EPS = 1e-5        # nn.LayerNorm default eps
NEG_INF = -1e30


def _round_up(v, m):
    return ((v + m - 1) // m) * m


# ---------------------------------------------------------------------------
# Kernel 1: initial linear projection  y = x @ W + b   (single step, whole arrays)
# ---------------------------------------------------------------------------
def _linear_kernel(x_ref, w_ref, b_ref, o_ref):
    o_ref[...] = (jnp.dot(x_ref[...], w_ref[...],
                          preferred_element_type=jnp.float32)
                  + b_ref[...]).astype(o_ref.dtype)


def pallas_linear(x, w, b):
    """x: (B, Din) bf16, w: (Din, Dout) bf16, b: (1, Dout) f32 -> (B, Dout) bf16."""
    B = x.shape[0]
    Dout = w.shape[1]
    # Tiny problem: one grid step, whole arrays resident in VMEM, lane-dense output store.
    return pl.pallas_call(
        _linear_kernel,
        out_shape=jax.ShapeDtypeStruct((B, Dout), jnp.bfloat16),
    )(x, w, b)


# ---------------------------------------------------------------------------
# Kernel 2: the whole transformer stack (pre-norm self-attention + relu MLP),
# all layers fused into one pallas_call.
#   per layer:  x = x + proj(MHA(LN1(x)));  x = x + MLP(LN2(x))
# Grid = (batch_tiles, num_layers); the f32 residual is carried across the layer
# axis in a VMEM scratch, and layer-l weights are streamed in per grid step.
# ---------------------------------------------------------------------------
def _layers_kernel(x_ref, vecs_ref, b1_ref, wqkv_ref, wproj_ref, w1_ref, w2_ref,
                   o_ref, res_ref, *, num_heads, seq_valid):
    TB, S, C = x_ref.shape
    d = C // num_heads
    BH = TB * num_heads
    scale = float(d) ** -0.5
    layer = pl.program_id(1)

    # Layer 0: load the bf16 input block into the f32 residual carry (stays in VMEM
    # across the whole layer axis for this batch tile).
    @pl.when(layer == 0)
    def _():
        res_ref[...] = x_ref[...].astype(jnp.float32).reshape(TB * S, C)

    x = res_ref[...]                               # (TB*S, C) f32 residual stream

    vecs = vecs_ref[0]                             # (8, C) f32 packed per-layer vectors
    ln1w, ln1b = vecs[0:1], vecs[1:2]
    ln2w, ln2b = vecs[2:3], vecs[3:4]
    bproj, b2 = vecs[4:5], vecs[5:6]
    b1 = b1_ref[0]                                 # (1, H) f32

    # ---- LayerNorm 1 (f32 elementwise) ----
    mu = jnp.mean(x, axis=-1, keepdims=True)
    var = jnp.mean(jnp.square(x - mu), axis=-1, keepdims=True)
    xn = ((x - mu) * jax.lax.rsqrt(var + LN_EPS)) * ln1w + ln1b

    # ---- fused QKV projection (bias=False): one (TB*S, C) x (C, 3C) MXU matmul ----
    qkv = jnp.dot(xn.astype(jnp.bfloat16), wqkv_ref[0],
                  preferred_element_type=jnp.float32)            # (TB*S, 3C) f32
    q = qkv[:, :C].astype(jnp.bfloat16)            # 128-aligned lane slices
    k = qkv[:, C:2 * C].astype(jnp.bfloat16)
    v = qkv[:, 2 * C:].astype(jnp.bfloat16)

    # ---- attention: all (batch, head) pairs batched through one 3-D einsum ----
    def split_heads(t):                            # (TB*S, C) -> (TB*H, S, d)
        t = t.reshape(TB, S, num_heads, d)
        return jnp.swapaxes(t, 1, 2).reshape(BH, S, d)

    qh, kh, vh = split_heads(q), split_heads(k), split_heads(v)
    s = jnp.einsum('bqd,bkd->bqk', qh, kh,
                   preferred_element_type=jnp.float32) * scale    # (TB*H, S, S) f32
    if seq_valid < S:                              # static: mask padded key columns
        kidx = jax.lax.broadcasted_iota(jnp.int32, (1, 1, S), 2)
        s = jnp.where(kidx < seq_valid, s, NEG_INF)
    s = s - jnp.max(s, axis=-1, keepdims=True)     # softmax over keys (torch dim=2)
    p = jnp.exp(s)
    p = p * pl.reciprocal(jnp.sum(p, axis=-1, keepdims=True), approx=True)
    ob = jnp.einsum('bqk,bkd->bqd', p.astype(jnp.bfloat16), vh,
                    preferred_element_type=jnp.float32)           # (TB*H, S, d) f32
    attn = jnp.swapaxes(ob.reshape(TB, num_heads, S, d), 1, 2).reshape(TB * S, C)

    # ---- output projection (bias=True) + residual ----
    x = x + jnp.dot(attn.astype(jnp.bfloat16), wproj_ref[0],
                    preferred_element_type=jnp.float32) + bproj

    # ---- LayerNorm 2 + MLP (fc1 -> relu -> fc2) + residual ----
    mu2 = jnp.mean(x, axis=-1, keepdims=True)
    var2 = jnp.mean(jnp.square(x - mu2), axis=-1, keepdims=True)
    xn2 = ((x - mu2) * jax.lax.rsqrt(var2 + LN_EPS)) * ln2w + ln2b
    hid = jnp.dot(xn2.astype(jnp.bfloat16), w1_ref[0],
                  preferred_element_type=jnp.float32) + b1
    hid = jnp.maximum(hid, 0.0).astype(jnp.bfloat16)
    x = x + jnp.dot(hid, w2_ref[0], preferred_element_type=jnp.float32) + b2

    res_ref[...] = x                               # carry to the next layer

    @pl.when(layer == pl.num_programs(1) - 1)
    def _():
        o_ref[...] = x.reshape(TB, S, C)           # single f32 writeback per batch tile


def _layers_vmem_limit(TB, S, C, H):
    # double-buffered per-layer weights + input/output blocks + carry + generous temporaries
    w_layer = (3 * C * C + C * C + C * H + H * C) * 2 + (8 * C + H) * 4
    act = TB * S * C * (2 + 4)
    scratch = TB * S * C * 4
    tmp = TB * S * C * 4 * 6
    total = 2 * w_layer + 2 * act + scratch + tmp
    return int(min(48 * 2 ** 20, max(16 * 2 ** 20, 2 * total)))


def pallas_transformer(x, stacked, *, seq_valid, batch_tile):
    vecs, b1, wqkv, wproj, w1, w2 = stacked
    B, S, C = x.shape
    L = wqkv.shape[0]
    H = w1.shape[2]
    TB = batch_tile
    assert B % TB == 0
    kernel = functools.partial(_layers_kernel, num_heads=NUM_HEADS, seq_valid=seq_valid)

    def wspec(shape):
        # Per-layer weight block; index depends only on the innermost (layer) axis, so
        # default double-buffering prefetches layer l+1 weights while layer l computes.
        return pl.BlockSpec((1,) + shape, lambda b, l: (l, 0, 0))

    return pl.pallas_call(
        kernel,
        out_shape=jax.ShapeDtypeStruct((B, S, C), jnp.float32),
        grid=(B // TB, L),
        in_specs=[pl.BlockSpec((TB, S, C), lambda b, l: (b, 0, 0)),  # resident per batch tile
                  wspec((8, C)),            # [ln1w, ln1b, ln2w, ln2b, bproj, b2, 0, 0]
                  wspec((1, H)),            # fc1 bias
                  wspec((C, 3 * C)),        # fused Wq|Wk|Wv
                  wspec((C, C)),            # Wproj
                  wspec((C, H)),            # fc1 weight
                  wspec((H, C))],           # fc2 weight
        out_specs=pl.BlockSpec((TB, S, C), lambda b, l: (b, 0, 0)),
        scratch_shapes=[pltpu.VMEM((TB * S, C), jnp.float32)],       # f32 residual carry
        compiler_params=pltpu.CompilerParams(
            dimension_semantics=("parallel", "arbitrary"),
            vmem_limit_bytes=_layers_vmem_limit(TB, S, C, H)),
    )(x, vecs, b1, wqkv, wproj, w1, w2)


def _choose_batch_tile(B, S_pad):
    # Fill the MXU M dimension: target ~256 fused rows (TB*S) per grid step.  v5e/v6e have
    # a single TensorCore, so we no longer force multiple batch grid steps.
    # TODO(synk): on v7x (2 TCs, 64 MiB VMEM) prefer an even number of batch steps when B allows.
    return max(1, min(B, 256 // S_pad))


# ---------------------------------------------------------------------------
# Parameter construction (deterministic, synthetic) and full forward
# ---------------------------------------------------------------------------
def init_params(key, dim_clip, dim_embedding, prefix_length, clip_length, num_layers):
    C = dim_embedding
    H = int(C * MLP_RATIO)
    L = num_layers
    keys = jax.random.split(key, 12)

    lin_w = (0.02 * jax.random.normal(keys[0], (dim_clip, clip_length * C),
                                      jnp.float32)).astype(jnp.bfloat16)
    lin_b = 0.02 * jax.random.normal(keys[1], (1, clip_length * C), jnp.float32)
    prefix_const = jax.random.normal(keys[2], (prefix_length, C), jnp.float32)

    # Per-layer weights stacked on a leading layer axis for the fused kernel.
    wq = 0.05 * jax.random.normal(keys[3], (L, C, C), jnp.float32)
    wk = 0.05 * jax.random.normal(keys[4], (L, C, C), jnp.float32)
    wv = 0.05 * jax.random.normal(keys[5], (L, C, C), jnp.float32)
    wqkv = jnp.concatenate([wq, wk, wv], axis=-1).astype(jnp.bfloat16)       # (L, C, 3C)
    wproj = (0.05 * jax.random.normal(keys[6], (L, C, C), jnp.float32)).astype(jnp.bfloat16)
    bproj = 0.05 * jax.random.normal(keys[7], (L, C), jnp.float32)
    w1 = (0.05 * jax.random.normal(keys[8], (L, C, H), jnp.float32)).astype(jnp.bfloat16)
    b1 = 0.05 * jax.random.normal(keys[9], (L, 1, H), jnp.float32)
    w2 = (0.05 * jax.random.normal(keys[10], (L, H, C), jnp.float32)).astype(jnp.bfloat16)
    b2 = 0.05 * jax.random.normal(keys[11], (L, C), jnp.float32)

    ln1w = jnp.ones((L, C), jnp.float32)
    ln1b = jnp.zeros((L, C), jnp.float32)
    ln2w = jnp.ones((L, C), jnp.float32)
    ln2b = jnp.zeros((L, C), jnp.float32)
    zeros = jnp.zeros((L, C), jnp.float32)
    # Pack the six per-layer C-wide f32 vectors into one sublane-dense (L, 8, C) slab.
    vecs = jnp.stack([ln1w, ln1b, ln2w, ln2b, bproj, b2, zeros, zeros], axis=1)

    stacked = (vecs, b1, wqkv, wproj, w1, w2)
    return lin_w, lin_b, prefix_const, stacked


@functools.partial(jax.jit, static_argnames=("clip_length",))
def transformer_mapper_forward(x, params, *, clip_length):
    lin_w, lin_b, prefix_const, stacked = params
    B = x.shape[0]
    P, C = prefix_const.shape
    S_real = clip_length + P
    S_pad = _round_up(S_real, 8)
    tb = _choose_batch_tile(B, S_pad)
    B_pad = _round_up(B, tb)

    # self.linear(x).view(B, clip_length, C)
    t = pallas_linear(x.astype(jnp.bfloat16), lin_w, lin_b).reshape(B, clip_length, C)

    # prefix_const.unsqueeze(0).expand(B, ...) ; cat((x, prefix), dim=1)
    prefix = jnp.broadcast_to(prefix_const[None].astype(jnp.bfloat16), (B, P, C))
    seq = jnp.concatenate([t, prefix], axis=1)              # (B, S_real, C) bf16

    # Pad batch / sequence to tile-friendly sizes (padded keys are masked in-kernel).
    if S_pad > S_real or B_pad > B:
        seq = jnp.pad(seq, ((0, B_pad - B), (0, S_pad - S_real), (0, 0)))

    # Full transformer stack (non enc_dec: every layer is self-attention, no mask).
    out = pallas_transformer(seq, stacked, seq_valid=S_real, batch_tile=tb)

    # transformer(prefix)[:, clip_length:]
    return out[:B, clip_length:S_real, :]


if __name__ == "__main__":
    B = 2
    dim_clip = 64
    dim_embedding = 128       # 8 heads -> head_dim 16; lane-aligned feature dim
    clip_length = 4
    prefix_length = 4
    num_layers = 2

    key = jax.random.PRNGKey(0)
    pkey, xkey = jax.random.split(key)
    params = init_params(pkey, dim_clip, dim_embedding, prefix_length,
                         clip_length, num_layers)
    x = jax.random.normal(xkey, (B, dim_clip), jnp.float32)

    out = transformer_mapper_forward(x, params, clip_length=clip_length)
    out = jax.block_until_ready(out)
    assert out.shape == (B, prefix_length, dim_embedding), out.shape
    assert bool(jnp.all(jnp.isfinite(out)))
    print("KERNEL_OK")
</pallas_src>

<mosaic_0001>
module attributes {stable_mosaic.version = 11 : i64} {
  func.func @_linear_kernel(%arg0: memref<2x64xbf16, #tpu.memory_space<vmem>>, %arg1: memref<64x512xbf16, #tpu.memory_space<vmem>>, %arg2: memref<1x512xf32, #tpu.memory_space<vmem>>, %arg3: memref<2x512xbf16, #tpu.memory_space<vmem>>) attributes {dimension_semantics = [], scalar_prefetch = 0 : i64, scratch_operands = 0 : i64, tpu.core_type = #tpu.core_type<tc>} {
    %c0 = arith.constant 0 : index
    %c0_0 = arith.constant 0 : index
    %0 = vector.load %arg0[%c0, %c0_0] : memref<2x64xbf16, #tpu.memory_space<vmem>>, vector<2x64xbf16>
    %c0_1 = arith.constant 0 : index
    %c0_2 = arith.constant 0 : index
    %1 = vector.load %arg1[%c0_1, %c0_2] : memref<64x512xbf16, #tpu.memory_space<vmem>>, vector<64x512xbf16>
    %cst = arith.constant dense<0.000000e+00> : vector<2x512xf32>
    %2 = tpu.matmul %0, %1, %cst {dimension_numbers = #tpu.dot_dimension_numbers<[1], [0], [0], [1], [0, 0, 1, 1], [], []>} : vector<2x64xbf16>, vector<64x512xbf16>, vector<2x512xf32> -> vector<2x512xf32>
    %c0_3 = arith.constant 0 : index
    %c0_4 = arith.constant 0 : index
    %3 = vector.load %arg2[%c0_3, %c0_4] : memref<1x512xf32, #tpu.memory_space<vmem>>, vector<1x512xf32>
    %4 = vector.broadcast %3 : vector<1x512xf32> to vector<2x512xf32>
    %5 = arith.addf %2, %4 : vector<2x512xf32>
    %6 = arith.truncf %5 : vector<2x512xf32> to vector<2x512xbf16>
    %c0_5 = arith.constant 0 : index
    %c0_6 = arith.constant 0 : index
    %7 = vector.load %arg3[%c0_5, %c0_6] : memref<2x512xbf16, #tpu.memory_space<vmem>>, vector<2x512xbf16>
    tpu.vector_store %arg3[%c0_5, %c0_6], %6 {strides = array<i32>} : memref<2x512xbf16, #tpu.memory_space<vmem>>, vector<2x512xbf16>,
    return
  }
}

module attributes {stable_mosaic.version = 11 : i64} {
  func.func @_layers_kernel(%arg0: i32, %arg1: i32, %arg2: memref<2x8x128xbf16, #tpu.memory_space<vmem>>, %arg3: memref<1x8x128xf32, #tpu.memory_space<vmem>>, %arg4: memref<1x1x256xf32, #tpu.memory_space<vmem>>, %arg5: memref<1x128x384xbf16, #tpu.memory_space<vmem>>, %arg6: memref<1x128x128xbf16, #tpu.memory_space<vmem>>, %arg7: memref<1x128x256xbf16, #tpu.memory_space<vmem>>, %arg8: memref<1x256x128xbf16, #tpu.memory_space<vmem>>, %arg9: memref<2x8x128xf32, #tpu.memory_space<vmem>>, %arg10: memref<16x128xf32, #tpu.memory_space<vmem>>) attributes {dimension_semantics = [#tpu.dimension_semantics<parallel>, #tpu.dimension_semantics<arbitrary>], iteration_bounds = array<i64: 1, 2>, scalar_prefetch = 0 : i64, scratch_operands = 1 : i64, tpu.core_type = #tpu.core_type<tc>, window_params = [{transform_indices = @transform_0, window_bounds = array<i64: 2, 8, 128>}, {transform_indices = @transform_1, window_bounds = array<i64: 1, 8, 128>}, {transform_indices = @transform_2, window_bounds = array<i64: 1, 1, 256>}, {transform_indices = @transform_3, window_bounds = array<i64: 1, 128, 384>}, {transform_indices = @transform_4, window_bounds = array<i64: 1, 128, 128>}, {transform_indices = @transform_5, window_bounds = array<i64: 1, 128, 256>}, {transform_indices = @transform_6, window_bounds = array<i64: 1, 256, 128>}, {transform_indices = @transform_7, window_bounds = array<i64: 2, 8, 128>}]} {
    %c0_i32 = arith.constant 0 : i32
    %0 = arith.cmpi eq, %arg1, %c0_i32 : i32
    %1 = arith.extui %0 : i1 to i32
    %c0_i32_0 = arith.constant 0 : i32
    %2 = arith.cmpi ne, %1, %c0_i32_0 : i32
    scf.if %2 {
      %c0_42 = arith.constant 0 : index
      %c0_43 = arith.constant 0 : index
      %c0_44 = arith.constant 0 : index
      %121 = vector.load %arg2[%c0_42, %c0_43, %c0_44] : memref<2x8x128xbf16, #tpu.memory_space<vmem>>, vector<2x8x128xbf16>
      %122 = arith.extf %121 : vector<2x8x128xbf16> to vector<2x8x128xf32>
      %123 = vector.shape_cast %122 : vector<2x8x128xf32> to vector<16x128xf32>
      %c0_45 = arith.constant 0 : index
      %c0_46 = arith.constant 0 : index
      %124 = vector.load %arg10[%c0_45, %c0_46] : memref<16x128xf32, #tpu.memory_space<vmem>>, vector<16x128xf32>
      tpu.vector_store %arg10[%c0_45, %c0_46], %123 {strides = array<i32>} : memref<16x128xf32, #tpu.memory_space<vmem>>, vector<16x128xf32>,
    } else {
    }
    %c0 = arith.constant 0 : index
    %c0_1 = arith.constant 0 : index
    %3 = vector.load %arg10[%c0, %c0_1] : memref<16x128xf32, #tpu.memory_space<vmem>>, vector<16x128xf32>
    %c0_2 = arith.constant 0 : index
    %c0_3 = arith.constant 0 : index
    %c0_4 = arith.constant 0 : index
    %4 = vector.load %arg3[%c0_2, %c0_3, %c0_4] : memref<1x8x128xf32, #tpu.memory_space<vmem>>, vector<1x8x128xf32>
    %5 = vector.shape_cast %4 : vector<1x8x128xf32> to vector<8x128xf32>
    %6 = vector.extract_strided_slice %5 {offsets = [0, 0], sizes = [1, 128], strides = [1, 1]} : vector<8x128xf32> to vector<1x128xf32>
    %7 = vector.extract_strided_slice %5 {offsets = [1, 0], sizes = [1, 128], strides = [1, 1]} : vector<8x128xf32> to vector<1x128xf32>
    %8 = vector.extract_strided_slice %5 {offsets = [2, 0], sizes = [1, 128], strides = [1, 1]} : vector<8x128xf32> to vector<1x128xf32>
    %9 = vector.extract_strided_slice %5 {offsets = [3, 0], sizes = [1, 128], strides = [1, 1]} : vector<8x128xf32> to vector<1x128xf32>
    %10 = vector.extract_strided_slice %5 {offsets = [4, 0], sizes = [1, 128], strides = [1, 1]} : vector<8x128xf32> to vector<1x128xf32>
    %11 = vector.extract_strided_slice %5 {offsets = [5, 0], sizes = [1, 128], strides = [1, 1]} : vector<8x128xf32> to vector<1x128xf32>
    %c0_5 = arith.constant 0 : index
    %c0_6 = arith.constant 0 : index
    %c0_7 = arith.constant 0 : index
    %12 = vector.load %arg4[%c0_5, %c0_6, %c0_7] : memref<1x1x256xf32, #tpu.memory_space<vmem>>, vector<1x1x256xf32>
    %13 = vector.shape_cast %12 : vector<1x1x256xf32> to vector<1x256xf32>
    %cst = arith.constant dense<0.000000e+00> : vector<16xf32>
    %14 = vector.multi_reduction <add>, %3, %cst [1] : vector<16x128xf32> to vector<16xf32>
    %15 = vector.shape_cast %14 : vector<16xf32> to vector<16x1xf32>
    %cst_8 = arith.constant 1.280000e+02 : f32
    %16 = vector.broadcast %cst_8 : f32 to vector<16x1xf32>
    %17 = arith.divf %15, %16 : vector<16x1xf32>
    %18 = vector.broadcast %17 : vector<16x1xf32> to vector<16x128xf32>
    %19 = arith.subf %3, %18 : vector<16x128xf32>
    %20 = arith.mulf %19, %19 : vector<16x128xf32>
    %cst_9 = arith.constant dense<0.000000e+00> : vector<16xf32>
    %21 = vector.multi_reduction <add>, %20, %cst_9 [1] : vector<16x128xf32> to vector<16xf32>
    %22 = vector.shape_cast %21 : vector<16xf32> to vector<16x1xf32>
    %cst_10 = arith.constant 1.280000e+02 : f32
    %23 = vector.broadcast %cst_10 : f32 to vector<16x1xf32>
    %24 = arith.divf %22, %23 : vector<16x1xf32>
    %25 = vector.broadcast %17 : vector<16x1xf32> to vector<16x128xf32>
    %26 = arith.subf %3, %25 : vector<16x128xf32>
    %cst_11 = arith.constant 9.99999974E-6 : f32
    %27 = vector.broadcast %cst_11 : f32 to vector<16x1xf32>
    %28 = arith.addf %24, %27 : vector<16x1xf32>
    %29 = math.rsqrt %28 : vector<16x1xf32>
    %30 = vector.broadcast %29 : vector<16x1xf32> to vector<16x128xf32>
    %31 = arith.mulf %26, %30 : vector<16x128xf32>
    %32 = vector.broadcast %6 : vector<1x128xf32> to vector<16x128xf32>
    %33 = arith.mulf %31, %32 : vector<16x128xf32>
    %34 = vector.broadcast %7 : vector<1x128xf32> to vector<16x128xf32>
    %35 = arith.addf %33, %34 : vector<16x128xf32>
    %36 = arith.truncf %35 : vector<16x128xf32> to vector<16x128xbf16>
    %c0_12 = arith.constant 0 : index
    %c0_13 = arith.constant 0 : index
    %c0_14 = arith.constant 0 : index
    %37 = vector.load %arg5[%c0_12, %c0_13, %c0_14] : memref<1x128x384xbf16, #tpu.memory_space<vmem>>, vector<1x128x384xbf16>
    %38 = vector.shape_cast %37 : vector<1x128x384xbf16> to vector<128x384xbf16>
    %cst_15 = arith.constant dense<0.000000e+00> : vector<16x384xf32>
    %39 = tpu.matmul %36, %38, %cst_15 {dimension_numbers = #tpu.dot_dimension_numbers<[1], [0], [0], [1], [0, 0, 1, 1], [], []>} : vector<16x128xbf16>, vector<128x384xbf16>, vector<16x384xf32> -> vector<16x384xf32>
    %40 = vector.extract_strided_slice %39 {offsets = [0, 0], sizes = [16, 128], strides = [1, 1]} : vector<16x384xf32> to vector<16x128xf32>
    %41 = arith.truncf %40 : vector<16x128xf32> to vector<16x128xbf16>
    %42 = vector.extract_strided_slice %39 {offsets = [0, 128], sizes = [16, 128], strides = [1, 1]} : vector<16x384xf32> to vector<16x128xf32>
    %43 = arith.truncf %42 : vector<16x128xf32> to vector<16x128xbf16>
    %44 = vector.extract_strided_slice %39 {offsets = [0, 256], sizes = [16, 128], strides = [1, 1]} : vector<16x384xf32> to vector<16x128xf32>
    %45 = arith.truncf %44 : vector<16x128xf32> to vector<16x128xbf16>
    %46 = vector.shape_cast %41 : vector<16x128xbf16> to vector<2x8x8x16xbf16>
    %47 = tpu.transpose %46, [0, 2, 1, 3] : vector<2x8x8x16xbf16> -> vector<2x8x8x16xbf16>
    %48 = vector.shape_cast %47 : vector<2x8x8x16xbf16> to vector<16x8x16xbf16>
    %49 = vector.shape_cast %43 : vector<16x128xbf16> to vector<2x8x8x16xbf16>
    %50 = tpu.transpose %49, [0, 2, 1, 3] : vector<2x8x8x16xbf16> -> vector<2x8x8x16xbf16>
    %51 = vector.shape_cast %50 : vector<2x8x8x16xbf16> to vector<16x8x16xbf16>
    %52 = vector.shape_cast %45 : vector<16x128xbf16> to vector<2x8x8x16xbf16>
    %53 = tpu.transpose %52, [0, 2, 1, 3] : vector<2x8x8x16xbf16> -> vector<2x8x8x16xbf16>
    %54 = vector.shape_cast %53 : vector<2x8x8x16xbf16> to vector<16x8x16xbf16>
    "tpu.trace_start"() <{level = 10 : i32, message = "bqd,bkd->bqk"}> : () -> ()
    %cst_16 = arith.constant dense<0.000000e+00> : vector<16x8x8xf32>
    %55 = tpu.matmul %48, %51, %cst_16 {dimension_numbers = #tpu.dot_dimension_numbers<[2], [2], [1], [1], [0, 0, 0, 1, 1, 1], [0], [0]>} : vector<16x8x16xbf16>, vector<16x8x16xbf16>, vector<16x8x8xf32> -> vector<16x8x8xf32>
    "tpu.trace_stop"() : () -> ()
    %cst_17 = arith.constant 2.500000e-01 : f32
    %56 = vector.broadcast %cst_17 : f32 to vector<16x8x8xf32>
    %57 = arith.mulf %55, %56 : vector<16x8x8xf32>
    %cst_18 = arith.constant dense<0xFF800000> : vector<16x8xf32>
    %58 = vector.multi_reduction <maximumf>, %57, %cst_18 [2] : vector<16x8x8xf32> to vector<16x8xf32>
    %59 = vector.shape_cast %58 : vector<16x8xf32> to vector<16x8x1xf32>
    %60 = vector.broadcast %59 : vector<16x8x1xf32> to vector<16x8x8xf32>
    %61 = arith.subf %57, %60 : vector<16x8x8xf32>
    %62 = math.exp %61 : vector<16x8x8xf32>
    %cst_19 = arith.constant dense<0.000000e+00> : vector<16x8xf32>
    %63 = vector.multi_reduction <add>, %62, %cst_19 [2] : vector<16x8x8xf32> to vector<16x8xf32>
    %64 = vector.shape_cast %63 : vector<16x8xf32> to vector<16x8x1xf32>
    %65 = tpu.reciprocal %64 {approx = true} : vector<16x8x1xf32> -> vector<16x8x1xf32>
    %66 = vector.broadcast %65 : vector<16x8x1xf32> to vector<16x8x8xf32>
    %67 = arith.mulf %62, %66 : vector<16x8x8xf32>
    %68 = arith.truncf %67 : vector<16x8x8xf32> to vector<16x8x8xbf16>
    "tpu.trace_start"() <{level = 10 : i32, message = "bqk,bkd->bqd"}> : () -> ()
    %cst_20 = arith.constant dense<0.000000e+00> : vector<16x8x16xf32>
    %69 = tpu.matmul %68, %54, %cst_20 {dimension_numbers = #tpu.dot_dimension_numbers<[2], [1], [1], [2], [0, 0, 0, 1, 1, 2], [0], [0]>} : vector<16x8x8xbf16>, vector<16x8x16xbf16>, vector<16x8x16xf32> -> vector<16x8x16xf32>
    "tpu.trace_stop"() : () -> ()
    %70 = vector.shape_cast %69 : vector<16x8x16xf32> to vector<2x8x8x16xf32>
    %71 = tpu.transpose %70, [0, 2, 1, 3] : vector<2x8x8x16xf32> -> vector<2x8x8x16xf32>
    %72 = vector.shape_cast %71 : vector<2x8x8x16xf32> to vector<16x128xf32>
    %73 = arith.truncf %72 : vector<16x128xf32> to vector<16x128xbf16>
    %c0_21 = arith.constant 0 : index
    %c0_22 = arith.constant 0 : index
    %c0_23 = arith.constant 0 : index
    %74 = vector.load %arg6[%c0_21, %c0_22, %c0_23] : memref<1x128x128xbf16, #tpu.memory_space<vmem>>, vector<1x128x128xbf16>
    %75 = vector.shape_cast %74 : vector<1x128x128xbf16> to vector<128x128xbf16>
    %cst_24 = arith.constant dense<0.000000e+00> : vector<16x128xf32>
    %76 = tpu.matmul %73, %75, %cst_24 {dimension_numbers = #tpu.dot_dimension_numbers<[1], [0], [0], [1], [0, 0, 1, 1], [], []>} : vector<16x128xbf16>, vector<128x128xbf16>, vector<16x128xf32> -> vector<16x128xf32>
    %77 = arith.addf %3, %76 : vector<16x128xf32>
    %78 = vector.broadcast %10 : vector<1x128xf32> to vector<16x128xf32>
    %79 = arith.addf %77, %78 : vector<16x128xf32>
    %cst_25 = arith.constant dense<0.000000e+00> : vector<16xf32>
    %80 = vector.multi_reduction <add>, %79, %cst_25 [1] : vector<16x128xf32> to vector<16xf32>
    %81 = vector.shape_cast %80 : vector<16xf32> to vector<16x1xf32>
    %cst_26 = arith.constant 1.280000e+02 : f32
    %82 = vector.broadcast %cst_26 : f32 to vector<16x1xf32>
    %83 = arith.divf %81, %82 : vector<16x1xf32>
    %84 = vector.broadcast %83 : vector<16x1xf32> to vector<16x128xf32>
    %85 = arith.subf %79, %84 : vector<16x128xf32>
    %86 = arith.mulf %85, %85 : vector<16x128xf32>
    %cst_27 = arith.constant dense<0.000000e+00> : vector<16xf32>
    %87 = vector.multi_reduction <add>, %86, %cst_27 [1] : vector<16x128xf32> to vector<16xf32>
    %88 = vector.shape_cast %87 : vector<16xf32> to vector<16x1xf32>
    %cst_28 = arith.constant 1.280000e+02 : f32
    %89 = vector.broadcast %cst_28 : f32 to vector<16x1xf32>
    %90 = arith.divf %88, %89 : vector<16x1xf32>
    %91 = vector.broadcast %83 : vector<16x1xf32> to vector<16x128xf32>
    %92 = arith.subf %79, %91 : vector<16x128xf32>
    %cst_29 = arith.constant 9.99999974E-6 : f32
    %93 = vector.broadcast %cst_29 : f32 to vector<16x1xf32>
    %94 = arith.addf %90, %93 : vector<16x1xf32>
    %95 = math.rsqrt %94 : vector<16x1xf32>
    %96 = vector.broadcast %95 : vector<16x1xf32> to vector<16x128xf32>
    %97 = arith.mulf %92, %96 : vector<16x128xf32>
    %98 = vector.broadcast %8 : vector<1x128xf32> to vector<16x128xf32>
    %99 = arith.mulf %97, %98 : vector<16x128xf32>
    %100 = vector.broadcast %9 : vector<1x128xf32> to vector<16x128xf32>
    %101 = arith.addf %99, %100 : vector<16x128xf32>
    %102 = arith.truncf %101 : vector<16x128xf32> to vector<16x128xbf16>
    %c0_30 = arith.constant 0 : index
    %c0_31 = arith.constant 0 : index
    %c0_32 = arith.constant 0 : index
    %103 = vector.load %arg7[%c0_30, %c0_31, %c0_32] : memref<1x128x256xbf16, #tpu.memory_space<vmem>>, vector<1x128x256xbf16>
    %104 = vector.shape_cast %103 : vector<1x128x256xbf16> to vector<128x256xbf16>
    %cst_33 = arith.constant dense<0.000000e+00> : vector<16x256xf32>
    %105 = tpu.matmul %102, %104, %cst_33 {dimension_numbers = #tpu.dot_dimension_numbers<[1], [0], [0], [1], [0, 0, 1, 1], [], []>} : vector<16x128xbf16>, vector<128x256xbf16>, vector<16x256xf32> -> vector<16x256xf32>
    %106 = vector.broadcast %13 : vector<1x256xf32> to vector<16x256xf32>
    %107 = arith.addf %105, %106 : vector<16x256xf32>
    %cst_34 = arith.constant 0.000000e+00 : f32
    %108 = vector.broadcast %cst_34 : f32 to vector<16x256xf32>
    %109 = arith.maximumf %107, %108 : vector<16x256xf32>
    %110 = arith.truncf %109 : vector<16x256xf32> to vector<16x256xbf16>
    %c0_35 = arith.constant 0 : index
    %c0_36 = arith.constant 0 : index
    %c0_37 = arith.constant 0 : index
    %111 = vector.load %arg8[%c0_35, %c0_36, %c0_37] : memref<1x256x128xbf16, #tpu.memory_space<vmem>>, vector<1x256x128xbf16>
    %112 = vector.shape_cast %111 : vector<1x256x128xbf16> to vector<256x128xbf16>
    %cst_38 = arith.constant dense<0.000000e+00> : vector<16x128xf32>
    %113 = tpu.matmul %110, %112, %cst_38 {dimension_numbers = #tpu.dot_dimension_numbers<[1], [0], [0], [1], [0, 0, 1, 1], [], []>} : vector<16x256xbf16>, vector<256x128xbf16>, vector<16x128xf32> -> vector<16x128xf32>
    %114 = arith.addf %79, %113 : vector<16x128xf32>
    %115 = vector.broadcast %11 : vector<1x128xf32> to vector<16x128xf32>
    %116 = arith.addf %114, %115 : vector<16x128xf32>
    %c0_39 = arith.constant 0 : index
    %c0_40 = arith.constant 0 : index
    %117 = vector.load %arg10[%c0_39, %c0_40] : memref<16x128xf32, #tpu.memory_space<vmem>>, vector<16x128xf32>
    tpu.vector_store %arg10[%c0_39, %c0_40], %116 {strides = array<i32>} : memref<16x128xf32, #tpu.memory_space<vmem>>, vector<16x128xf32>,
    %c1_i32 = arith.constant 1 : i32
    %118 = arith.cmpi eq, %arg1, %c1_i32 : i32
    %119 = arith.extui %118 : i1 to i32
    %c0_i32_41 = arith.constant 0 : i32
    %120 = arith.cmpi ne, %119, %c0_i32_41 : i32
    scf.if %120 {
      %121 = vector.shape_cast %116 : vector<16x128xf32> to vector<2x8x128xf32>
      %c0_42 = arith.constant 0 : index
      %c0_43 = arith.constant 0 : index
      %c0_44 = arith.constant 0 : index
      %122 = vector.load %arg9[%c0_42, %c0_43, %c0_44] : memref<2x8x128xf32, #tpu.memory_space<vmem>>, vector<2x8x128xf32>
      tpu.vector_store %arg9[%c0_42, %c0_43, %c0_44], %121 {strides = array<i32>} : memref<2x8x128xf32, #tpu.memory_space<vmem>>, vector<2x8x128xf32>,
    } else {
    }
    return
  }
  func.func @transform_0(%arg0: i32, %arg1: i32) -> (i32, i32, i32) {
    %c0_i32 = arith.constant 0 : i32
    %c0_i32_0 = arith.constant 0 : i32
    %c0_i32_1 = arith.constant 0 : i32
    return %arg0, %c0_i32, %c0_i32_0 : i32, i32, i32
  }
  func.func @transform_1(%arg0: i32, %arg1: i32) -> (i32, i32, i32) {
    %c0_i32 = arith.constant 0 : i32
    %c0_i32_0 = arith.constant 0 : i32
    %c0_i32_1 = arith.constant 0 : i32
    return %arg1, %c0_i32, %c0_i32_0 : i32, i32, i32
  }
  func.func @transform_2(%arg0: i32, %arg1: i32) -> (i32, i32, i32) {
    %c0_i32 = arith.constant 0 : i32
    %c0_i32_0 = arith.constant 0 : i32
    %c0_i32_1 = arith.constant 0 : i32
    return %arg1, %c0_i32, %c0_i32_0 : i32, i32, i32
  }
  func.func @transform_3(%arg0: i32, %arg1: i32) -> (i32, i32, i32) {
    %c0_i32 = arith.constant 0 : i32
    %c0_i32_0 = arith.constant 0 : i32
    %c0_i32_1 = arith.constant 0 : i32
    return %arg1, %c0_i32, %c0_i32_0 : i32, i32, i32
  }
  func.func @transform_4(%arg0: i32, %arg1: i32) -> (i32, i32, i32) {
    %c0_i32 = arith.constant 0 : i32
    %c0_i32_0 = arith.constant 0 : i32
    %c0_i32_1 = arith.constant 0 : i32
    return %arg1, %c0_i32, %c0_i32_0 : i32, i32, i32
  }
  func.func @transform_5(%arg0: i32, %arg1: i32) -> (i32, i32, i32) {
    %c0_i32 = arith.constant 0 : i32
    %c0_i32_0 = arith.constant 0 : i32
    %c0_i32_1 = arith.constant 0 : i32
    return %arg1, %c0_i32, %c0_i32_0 : i32, i32, i32
  }
  func.func @transform_6(%arg0: i32, %arg1: i32) -> (i32, i32, i32) {
    %c0_i32 = arith.constant 0 : i32
    %c0_i32_0 = arith.constant 0 : i32
    %c0_i32_1 = arith.constant 0 : i32
    return %arg1, %c0_i32, %c0_i32_0 : i32, i32, i32
  }
  func.func @transform_7(%arg0: i32, %arg1: i32) -> (i32, i32, i32) {
    %c0_i32 = arith.constant 0 : i32
    %c0_i32_0 = arith.constant 0 : i32
    %c0_i32_1 = arith.constant 0 : i32
    return %arg0, %c0_i32, %c0_i32_0 : i32, i32, i32
  }
}

</mosaic_0001>

<llo_original>
// kernel: transformer_mapper_forward.2
$region0: #{transformer_mapper_forward.2}
  #allocation0 [shape = 'u32[]', space=smem, size = 0x4, offset = 0x4, fixed_abs, tag = 'smem constant byte address 0x4 - core index']
  #allocation1 [shape = 'u32[144,128]{1,0:T(1,128)}', space=vmem, size = 0x12000, scoped, tag = 'internal scratch']
  %s0 = inlined_call_operand.vmem [shape: bf16[2,64], index: 0, kind: input, shape index: {}]
  %s1 = inlined_call_operand.hbm [shape: bf16[64,512], index: 1, kind: input, shape index: {}]
  %s2 = inlined_call_operand.hbm [shape: f32[1,512], index: 2, kind: input, shape index: {}]
  %s3 = inlined_call_operand.vmem [shape: bf16[2,512], index: 3, kind: output, shape index: {}]
  %s4 = sld [smem:[#allocation0]]
  $region30: #{transformer_mapper_forward.2} parent=0
    _
  %s6 = ssub.s32 1, %s4
  %s7 = scalar_select 0, %s6, %s4
  $region1: #{transformer_mapper_forward.2} parent=0
    #allocation2 [shape = 'u8[65536]{0}', space=vmem, size = 0x10000, scoped, tag = 'input window, operand 1, single buffered']
    #allocation3 [shape = 's32[1]{0}', space=sflag, size = 0x4, scoped, tag = 'scoped memory for transformer_mapper_forward.2']
    #allocation4 [shape = 'u8[2048]{0}', space=vmem, size = 0x800, scoped, tag = 'input window, operand 2, single buffered']
    #allocation5 [shape = 's32[1]{0}', space=sflag, size = 0x4, scoped, tag = 'scoped memory for transformer_mapper_forward.2']
    %8 = vsyncpa [#allocation3], 0
    %9 = vsyncpa [#allocation5], 0
    // Predicated region
    $region2: #{transformer_mapper_forward.2} parent=1 // pred_check
      _
    $region3: #{transformer_mapper_forward.2} parent=1 // pred_check_branch
      %11 = sbr.rel (0) target = $region5
    $region4: #{transformer_mapper_forward.2} parent=1 // pred_region
      _
    $region5: #{transformer_mapper_forward.2} parent=1 // pred_fallthru
      _
    // Predicated region
    $region6: #{transformer_mapper_forward.2} parent=1 // pred_check
      _
    $region7: #{transformer_mapper_forward.2} parent=1 // pred_check_branch
      %13 = sbr.rel (0) target = $region9
    $region8: #{transformer_mapper_forward.2} parent=1 // pred_region
      %s15 = ssub.s32 2048, 2048
      %16 = vsyncadd [#allocation3], %s15
      %s17 = sshll.u32 [#allocation2], 4
      %s18 = int_to_ptr.vmem [resolvable:$true] %s17
      %23 = dma.hbm_to_vmem [thread:$0]  %s1, 2048, %s18, [#allocation3], 256, 256, 16
    $region9: #{transformer_mapper_forward.2} parent=1 // pred_fallthru
      _
    // Predicated region
    $region10: #{transformer_mapper_forward.2} parent=1 // pred_check
      _
    $region11: #{transformer_mapper_forward.2} parent=1 // pred_check_branch
      %25 = sbr.rel (0) target = $region13
    $region12: #{transformer_mapper_forward.2} parent=1 // pred_region
      %s27 = ssub.s32 64, 64
      %28 = vsyncadd [#allocation5], %s27
      %s30 = sshll.u32 [#allocation4], 4
      %s31 = int_to_ptr.vmem [resolvable:$true] %s30
      %33 = dma.hbm_to_vmem [thread:$0]  %s2, 64, %s31, [#allocation5]
    $region13: #{transformer_mapper_forward.2} parent=1 // pred_fallthru
      _
    // Predicated region
    $region14: #{transformer_mapper_forward.2} parent=1 // pred_check
      _
    $region15: #{transformer_mapper_forward.2} parent=1 // pred_check_branch
      %35 = sbr.rel (0) target = $region17
    $region16: #{transformer_mapper_forward.2} parent=1 // pred_region
      %36 = dma.done [#allocation3], 2048
    $region17: #{transformer_mapper_forward.2} parent=1 // pred_fallthru
      _
    // Predicated region
    $region18: #{transformer_mapper_forward.2} parent=1 // pred_check
      _
    $region19: #{transformer_mapper_forward.2} parent=1 // pred_check_branch
      %38 = sbr.rel (0) target = $region21
    $region20: #{transformer_mapper_forward.2} parent=1 // pred_region
      %39 = dma.done [#allocation5], 64
    $region21: #{transformer_mapper_forward.2} parent=1 // pred_fallthru
      _
    %v41 = vld [vmem:[%s0] sm:$0x1]
    %v42 = vld [vmem:[#allocation2] sm:$0xff]
    %v43 = vld [vmem:[#allocation2 + $0x8] sm:$0xff]
    %v44 = vld [vmem:[#allocation2 + $0x10] sm:$0xff]
    %v45 = vld [vmem:[#allocation2 + $0x18] sm:$0xff]
    %v46 = vld [vmem:[#allocation2 + $0x20] sm:$0xff]
    %v47 = vld [vmem:[#allocation2 + $0x28] sm:$0xff]
    %v48 = vld [vmem:[#allocation2 + $0x30] sm:$0xff]
    %v49 = vld [vmem:[#allocation2 + $0x38] sm:$0xff]
    %v50 = vld [vmem:[#allocation2 + $0x40] sm:$0xff]
    %v51 = vld [vmem:[#allocation2 + $0x48] sm:$0xff]
    %v52 = vld [vmem:[#allocation2 + $0x50] sm:$0xff]
    %v53 = vld [vmem:[#allocation2 + $0x58] sm:$0xff]
    %v54 = vld [vmem:[#allocation2 + $0x60] sm:$0xff]
    %v55 = vld [vmem:[#allocation2 + $0x68] sm:$0xff]
    %v56 = vld [vmem:[#allocation2 + $0x70] sm:$0xff]
    %v57 = vld [vmem:[#allocation2 + $0x78] sm:$0xff]
    %v58 = vld [vmem:[#allocation4] sm:$0xf]
    %v60 = vlaneseq
    %v61 = vshrl.u32 %v60, 7
    %v62 = vsub.s32 0, %v61
    %v63 = vrot.slane %v58, %v62
    %v64 = vlaneseq
    %v65 = vshrl.u32 %v64, 7
    %v66 = vsub.s32 1, %v65
    %v67 = vrot.slane %v58, %v66
    %v68 = vlaneseq
    %v69 = vshrl.u32 %v68, 7
    %v70 = vsub.s32 2, %v69
    %v71 = vrot.slane %v58, %v70
    %v72 = vlaneseq
    %v73 = vshrl.u32 %v72, 7
    %v74 = vsub.s32 3, %v73
    %v75 = vrot.slane %v58, %v74
    %v96 = vunpack.c.l.b16 %v42
    %v97 = vunpack.c.h.b16 %v42
    %v98 = vunpack.c.l.b16 %v43
    %v99 = vunpack.c.h.b16 %v43
    %v100 = vunpack.c.l.b16 %v44
    %v101 = vunpack.c.h.b16 %v44
    %v102 = vunpack.c.l.b16 %v45
    %v103 = vunpack.c.h.b16 %v45
    %v104 = vunpack.c.l.b16 %v46
    %v105 = vunpack.c.h.b16 %v46
    %v106 = vunpack.c.l.b16 %v47
    %v107 = vunpack.c.h.b16 %v47
    %v108 = vunpack.c.l.b16 %v48
    %v109 = vunpack.c.h.b16 %v48
    %v110 = vunpack.c.l.b16 %v49
    %v111 = vunpack.c.h.b16 %v49
    %v112 = vunpack.c.l.b16 %v50
    %v113 = vunpack.c.h.b16 %v50
    %v114 = vunpack.c.l.b16 %v51
    %v115 = vunpack.c.h.b16 %v51
    %v116 = vunpack.c.l.b16 %v52
    %v117 = vunpack.c.h.b16 %v52
    %v118 = vunpack.c.l.b16 %v53
    %v119 = vunpack.c.h.b16 %v53
    %v120 = vunpack.c.l.b16 %v54
    %v121 = vunpack.c.h.b16 %v54
    %v122 = vunpack.c.l.b16 %v55
    %v123 = vunpack.c.h.b16 %v55
    %v124 = vunpack.c.l.b16 %v56
    %v125 = vunpack.c.h.b16 %v56
    %v126 = vunpack.c.l.b16 %v57
    %v127 = vunpack.c.h.b16 %v57
    %v128 = vpack.c.b16 %v100, %v96
    %v129 = vpack.c.b16 %v101, %v97
    %v130 = vpack.c.b16 %v102, %v98
    %v131 = vpack.c.b16 %v103, %v99
    %v132 = vpack.c.b16 %v108, %v104
    %v133 = vpack.c.b16 %v109, %v105
    %v134 = vpack.c.b16 %v110, %v106
    %v135 = vpack.c.b16 %v111, %v107
    %v136 = vpack.c.b16 %v116, %v112
    %v137 = vpack.c.b16 %v117, %v113
    %v138 = vpack.c.b16 %v118, %v114
    %v139 = vpack.c.b16 %v119, %v115
    %v140 = vpack.c.b16 %v124, %v120
    %v141 = vpack.c.b16 %v125, %v121
    %v142 = vpack.c.b16 %v126, %v122
    %v143 = vpack.c.b16 %v127, %v123
    %vm160 = vcmask 523264
    %v162 = vsel %vm160, %v41, 0
    %164 = vmatprep.subr.bf16.mxu0 %v129
    %165 = vmatpush1.bf16.msra.mxu0 %v128
    %166 = vmatprep.subr.bf16.mxu0 %v133
    %167 = vmatpush1.bf16.msra.mxu0 %v132
    %168 = vmatprep.subr.bf16.mxu0 %v137
    %169 = vmatpush1.bf16.msra.mxu0 %v136
    %170 = vmatprep.subr.bf16.mxu0 %v141
    %171 = vmatpush1.bf16.msra.mxu0 %v140
    %172 = vmatprep.subr.bf16.mxu0 0
    %173 = vmatpush1.bf16.msra.mxu0 0
    %174 = vmatprep.subr.bf16.mxu0 0
    %175 = vmatpush1.bf16.msra.mxu0 0
    %176 = vmatprep.subr.bf16.mxu0 0
    %177 = vmatpush1.bf16.msra.mxu0 0
    %178 = vmatprep.subr.bf16.mxu0 0
    %179 = vmatpush1.bf16.msra.mxu0 0
    %180 = vmatprep.subr.bf16.mxu0 0
    %181 = vmatpush1.bf16.msra.mxu0 0
    %182 = vmatprep.subr.bf16.mxu0 0
    %183 = vmatpush1.bf16.msra.mxu0 0
    %184 = vmatprep.subr.bf16.mxu0 0
    %185 = vmatpush1.bf16.msra.mxu0 0
    %186 = vmatprep.subr.bf16.mxu0 0
    %187 = vmatpush1.bf16.msra.mxu0 0
    %188 = vmatprep.subr.bf16.mxu0 0
    %189 = vmatpush1.bf16.msra.mxu0 0
    %190 = vmatprep.subr.bf16.mxu0 0
    %191 = vmatpush1.bf16.msra.mxu0 0
    %192 = vmatprep.subr.bf16.mxu0 0
    %193 = vmatpush1.bf16.msra.mxu0 0
    %194 = vmatprep.subr.bf16.mxu0 0
    %195 = vmatpush1.bf16.msra.mxu0 0
    %196 = vmatprep.mubr.bf16.mxu0 0
    %197 = vmatmul.mubr.bf16.gmra.mrb[0].mxu0 %v162
    %v198 = vpop.f32.mrb[0].mxu0
    %v199 = vadd.f32 %v63, %v198
    %v200 = vpop.f32.mrb[0].mxu0
    %v201 = vadd.f32 %v67, %v200
    %v202 = vpop.f32.mrb[0].mxu0
    %v203 = vpop.f32.mrb[0].mxu0
    %204 = vdwg.mxu0
    %205 = vmatprep.subr.bf16.mxu0 %v131
    %206 = vmatpush1.bf16.msra.mxu0 %v130
    %207 = vmatprep.subr.bf16.mxu0 %v135
    %208 = vmatpush1.bf16.msra.mxu0 %v134
    %209 = vmatprep.subr.bf16.mxu0 %v139
    %210 = vmatpush1.bf16.msra.mxu0 %v138
    %211 = vmatprep.subr.bf16.mxu0 %v143
    %212 = vmatpush1.bf16.msra.mxu0 %v142
    %213 = vmatprep.subr.bf16.mxu0 0
    %214 = vmatpush1.bf16.msra.mxu0 0
    %215 = vmatprep.subr.bf16.mxu0 0
    %216 = vmatpush1.bf16.msra.mxu0 0
    %217 = vmatprep.subr.bf16.mxu0 0
    %218 = vmatpush1.bf16.msra.mxu0 0
    %219 = vmatprep.subr.bf16.mxu0 0
    %220 = vmatpush1.bf16.msra.mxu0 0
    %221 = vmatprep.subr.bf16.mxu0 0
    %222 = vmatpush1.bf16.msra.mxu0 0
    %223 = vmatprep.subr.bf16.mxu0 0
    %224 = vmatpush1.bf16.msra.mxu0 0
    %225 = vmatprep.subr.bf16.mxu0 0
    %226 = vmatpush1.bf16.msra.mxu0 0
    %227 = vmatprep.subr.bf16.mxu0 0
    %228 = vmatpush1.bf16.msra.mxu0 0
    %229 = vmatprep.subr.bf16.mxu0 0
    %230 = vmatpush1.bf16.msra.mxu0 0
    %231 = vmatprep.subr.bf16.mxu0 0
    %232 = vmatpush1.bf16.msra.mxu0 0
    %233 = vmatprep.subr.bf16.mxu0 0
    %234 = vmatpush1.bf16.msra.mxu0 0
    %235 = vmatprep.subr.bf16.mxu0 0
    %236 = vmatpush1.bf16.msra.mxu0 0
    %237 = vmatprep.mubr.bf16.mxu0 0
    %238 = vmatmul.mubr.bf16.gmra.mrb[0].mxu0 %v162
    %v239 = vpop.f32.mrb[0].mxu0
    %v240 = vadd.f32 %v71, %v239
    %v241 = vpop.f32.mrb[0].mxu0
    %v242 = vadd.f32 %v75, %v241
    %v243 = vpop.f32.mrb[0].mxu0
    %v244 = vpop.f32.mrb[0].mxu0
    %245 = vdwg.mxu0
    %v246 = vpack.c.bf16 %v199, %v199
    %v247 = vpack.c.bf16 %v201, %v201
    %v248 = vpack.c.bf16 %v240, %v240
    %v249 = vpack.c.bf16 %v242, %v242
    %v254 = vcombine.low %v246, %v247
    %v255 = vcombine.low %v248, %v249
    %v257 = vunpack.c.l.s4 1966171168
    %v258 = vunpack.c.0.s8 %v257
    %v259 = vlaneseq
    %v260 = vshrl.u32 %v259, 7
    %v261 = vsub.s32 %v258, %v260
    %v262 = vrot.slane %v254, %v261
    %v264 = vunpack.c.l.s4 1966171168
    %v265 = vunpack.c.0.s8 %v264
    %v266 = vlaneseq
    %v267 = vshrl.u32 %v266, 7
    %v268 = vsub.s32 %v265, %v267
    %v269 = vrot.slane %v255, %v268
    %v270 = vcombine.low %v262, %v269
    %v272 = vunpack.c.l.s4 1966171168
    %v273 = vunpack.c.0.s8 %v272
    %v274 = vlaneseq
    %v275 = vshrl.u32 %v274, 7
    %v276 = vsub.s32 %v273, %v275
    %v277 = vrot.slane %v270, %v276
    %279 = vst [vmem:[%s3] sm:$0xf] %v277
    // Predicated region
    $region22: #{transformer_mapper_forward.2} parent=1 // pred_check
      _
    $region23: #{transformer_mapper_forward.2} parent=1 // pred_check_branch
      %281 = sbr.rel (0) target = $region25
    $region24: #{transformer_mapper_forward.2} parent=1 // pred_region
      _
    $region25: #{transformer_mapper_forward.2} parent=1 // pred_fallthru
      _
    // Predicated region
    $region26: #{transformer_mapper_forward.2} parent=1 // pred_check
      _
    $region27: #{transformer_mapper_forward.2} parent=1 // pred_check_branch
      %283 = sbr.rel (0) target = $region29
    $region28: #{transformer_mapper_forward.2} parent=1 // pred_region
      _
    $region29: #{transformer_mapper_forward.2} parent=1 // pred_fallthru
      _
    %284 = vsyncpa [#allocation3], 1
    %285 = vsyncpa [#allocation5], 1

// kernel: transformer_mapper_forward.3
$region0: #{transformer_mapper_forward.3}
  #allocation0 [shape = 'u32[]', space=smem, size = 0x4, offset = 0x4, fixed_abs, tag = 'smem constant byte address 0x4 - core index']
  #allocation1 [shape = 'u32[144,128]{1,0:T(1,128)}', space=vmem, size = 0x12000, scoped, tag = 'internal scratch']
  #allocation2 [shape = 'f32[16,128]{1,0:T(8,128)}', space=vmem, size = 0x2000, scoped, tag = 'scratch operand']
  %s0 = inlined_call_operand.vmem [shape: bf16[2,8,128], index: 0, kind: input, shape index: {}]
  %s1 = inlined_call_operand.vmem [shape: f32[2,8,128], index: 1, kind: input, shape index: {}]
  %s2 = inlined_call_operand.vmem [shape: f32[2,1,256], index: 2, kind: input, shape index: {}]
  %s3 = inlined_call_operand.hbm [shape: bf16[2,128,384], index: 3, kind: input, shape index: {}]
  %s4 = inlined_call_operand.vmem [shape: bf16[2,128,128], index: 4, kind: input, shape index: {}]
  %s5 = inlined_call_operand.hbm [shape: bf16[2,128,256], index: 5, kind: input, shape index: {}]
  %s6 = inlined_call_operand.hbm [shape: bf16[2,256,128], index: 6, kind: input, shape index: {}]
  %s7 = inlined_call_operand.vmem [shape: f32[2,8,128], index: 7, kind: output, shape index: {}]
  %s8 = sld [smem:[#allocation0]]
  $region81: #{transformer_mapper_forward.3} parent=0
    _
  %s10 = ssub.s32 1, %s8
  %s11 = scalar_select 0, %s10, %s8
  $region1: #{transformer_mapper_forward.3} parent=0
    #allocation3 [shape = 'u8[196608]{0}', space=vmem, size = 0x30000, scoped, tag = 'input window, operand 3']
    #allocation4 [shape = 's32[2]{0}', space=sflag, size = 0x8, scoped, tag = 'scoped memory for transformer_mapper_forward.3']
    #allocation5 [shape = 'u8[131072]{0}', space=vmem, size = 0x20000, scoped, tag = 'input window, operand 5']
    #allocation6 [shape = 's32[2]{0}', space=sflag, size = 0x8, scoped, tag = 'scoped memory for transformer_mapper_forward.3']
    #allocation7 [shape = 'u8[131072]{0}', space=vmem, size = 0x20000, scoped, tag = 'input window, operand 6']
    %12 = vsyncpa [#allocation4], 0
    %s13 = scalar_lea.sflag [#allocation4], 1
    %14 = vsyncpa %s13, 0
    %15 = vsyncpa [#allocation6], 0
    %s16 = scalar_lea.sflag [#allocation6], 1
    %17 = vsyncpa %s16, 0
    loop: start=0, step=1, limit=4
    $region2: #{transformer_mapper_forward.3} parent=1 // loop_pre_header
      _
    $region3: #{transformer_mapper_forward.3} parent=1 // loop_header
      %s19 = sphi 0, %s23
      %p20 = scmp.ge.s32.totalorder %s19, 4
      %s26 = sphi 0, %s38
      %s27 = sphi 0, %s34
      %s28 = sphi 0, %s26
      %s29 = sphi 0, %s27
      %s30 = sphi 0, %s28
      %s31 = sphi 0, %s29
      %s41 = sphi 0, %s43
      %s44 = sphi 0, %s41
      %s45 = sphi 0, %s44
      %s61 = sphi 0, %s45
      %s67 = sphi 0, %s69
      %s70 = sphi 0, %s67
      %s71 = sphi 0, %s70
      %s87 = sphi 0, %s71
      %s93 = sphi 0, %s95
      %s96 = sphi 0, %s93
      %s97 = sphi 0, %s96
      %s113 = sphi 0, %s97
      %s119 = sphi 0, %s121
      %s122 = sphi 0, %s119
      %s123 = sphi 0, %s122
      %s139 = sphi 0, %s123
      %s145 = sphi 0, %s147
      %s148 = sphi 0, %s145
      %s149 = sphi 0, %s148
      %s165 = sphi 0, %s149
      %s171 = sphi 0, %s173
      %s174 = sphi 0, %s171
      %s175 = sphi 0, %s174
      %s191 = sphi 0, %s175
      %s197 = sphi 0, %s199
      %s200 = sphi 0, %s197
      %s201 = sphi 0, %s200
      %s217 = sphi 0, %s201
      %s223 = sphi 0, %s225
      %s226 = sphi 0, %s223
      %s227 = sphi 0, %s226
      %s243 = sphi 0, %s227
    $region4: #{transformer_mapper_forward.3} parent=1 // loop_header_branch
      %22 = sbr.rel (%p20) target = $region8
    $region5: #{transformer_mapper_forward.3} parent=1 // loop_body
      %s24 = ssub.s32 %s19, 1
      %s25 = ssub.s32 %s19, 2
      %s32 = sadd.s32 1, %s27
      %p33 = scmp.ge.s32.totalorder %s32, 2
      %s34 = scalar_select %p33, 0, %s32
      %s35 = sadd.s32 1, %s26
      %s36 = scalar_select %p33, %s35, %s26
      %p37 = scmp.ge.s32.totalorder %s36, 1
      %s38 = scalar_select %p37, 0, %s36
      %s39 = ssub.s32 %s26, %s38
      %p40 = scmp.eq.s32.totalorder %s39, 0
      %s42 = sadd.s32 %s41, 1
      %s43 = scalar_select %p40, %s41, %s42
      %p46 = pneg %p40
      %p47 = scmp.eq.s32.totalorder %s19, 1
      %p48 = por %p46, %p47
      %p49 = scmp.ne.s32.totalorder %s41, %s44
      %p50 = scmp.eq.s32.totalorder %s19, 0
      %p51 = por %p49, %p50
      %p52 = scmp.ne.s32.totalorder %s41, %s44
      %p53 = scmp.eq.s32.totalorder %s24, 1
      %p54 = por %p52, %p53
      %p55 = scmp.ne.s32.totalorder %s44, %s45
      %p56 = scmp.eq.s32.totalorder %s24, 0
      %p57 = por %p55, %p56
      %p58 = scmp.ne.s32.totalorder %s44, %s45
      %p59 = scmp.eq.s32.totalorder %s25, 1
      %p60 = por %p58, %p59
      %p62 = scmp.ne.s32.totalorder %s45, %s61
      %p63 = scmp.eq.s32.totalorder %s25, 0
      %p64 = por %p62, %p63
      %s65 = ssub.s32 %s27, %s34
      %p66 = scmp.eq.s32.totalorder %s65, 0
      %s68 = sadd.s32 %s67, 1
      %s69 = scalar_select %p66, %s67, %s68
      %p72 = pneg %p66
      %p73 = scmp.eq.s32.totalorder %s19, 1
      %p74 = por %p72, %p73
      %p75 = scmp.ne.s32.totalorder %s67, %s70
      %p76 = scmp.eq.s32.totalorder %s19, 0
      %p77 = por %p75, %p76
      %p78 = scmp.ne.s32.totalorder %s67, %s70
      %p79 = scmp.eq.s32.totalorder %s24, 1
      %p80 = por %p78, %p79
      %p81 = scmp.ne.s32.totalorder %s70, %s71
      %p82 = scmp.eq.s32.totalorder %s24, 0
      %p83 = por %p81, %p82
      %p84 = scmp.ne.s32.totalorder %s70, %s71
      %p85 = scmp.eq.s32.totalorder %s25, 1
      %p86 = por %p84, %p85
      %p88 = scmp.ne.s32.totalorder %s71, %s87
      %p89 = scmp.eq.s32.totalorder %s25, 0
      %p90 = por %p88, %p89
      %s91 = ssub.s32 %s27, %s34
      %p92 = scmp.eq.s32.totalorder %s91, 0
      %s94 = sadd.s32 %s93, 1
      %s95 = scalar_select %p92, %s93, %s94
      %p98 = pneg %p92
      %p99 = scmp.eq.s32.totalorder %s19, 1
      %p100 = por %p98, %p99
      %p101 = scmp.ne.s32.totalorder %s93, %s96
      %p102 = scmp.eq.s32.totalorder %s19, 0
      %p103 = por %p101, %p102
      %p104 = scmp.ne.s32.totalorder %s93, %s96
      %p105 = scmp.eq.s32.totalorder %s24, 1
      %p106 = por %p104, %p105
      %p107 = scmp.ne.s32.totalorder %s96, %s97
      %p108 = scmp.eq.s32.totalorder %s24, 0
      %p109 = por %p107, %p108
      %p110 = scmp.ne.s32.totalorder %s96, %s97
      %p111 = scmp.eq.s32.totalorder %s25, 1
      %p112 = por %p110, %p111
      %p114 = scmp.ne.s32.totalorder %s97, %s113
      %p115 = scmp.eq.s32.totalorder %s25, 0
      %p116 = por %p114, %p115
      %s117 = ssub.s32 %s27, %s34
      %p118 = scmp.eq.s32.totalorder %s117, 0
      %s120 = sadd.s32 %s119, 1
      %s121 = scalar_select %p118, %s119, %s120
      %p124 = pneg %p118
      %p125 = scmp.eq.s32.totalorder %s19, 1
      %p126 = por %p124, %p125
      %p127 = scmp.ne.s32.totalorder %s119, %s122
      %p128 = scmp.eq.s32.totalorder %s19, 0
      %p129 = por %p127, %p128
      %p130 = scmp.ne.s32.totalorder %s119, %s122
      %p131 = scmp.eq.s32.totalorder %s24, 1
      %p132 = por %p130, %p131
      %p133 = scmp.ne.s32.totalorder %s122, %s123
      %p134 = scmp.eq.s32.totalorder %s24, 0
      %p135 = por %p133, %p134
      %p136 = scmp.ne.s32.totalorder %s122, %s123
      %p137 = scmp.eq.s32.totalorder %s25, 1
      %p138 = por %p136, %p137
      %p140 = scmp.ne.s32.totalorder %s123, %s139
      %p141 = scmp.eq.s32.totalorder %s25, 0
      %p142 = por %p140, %p141
      %s143 = ssub.s32 %s27, %s34
      %p144 = scmp.eq.s32.totalorder %s143, 0
      %s146 = sadd.s32 %s145, 1
      %s147 = scalar_select %p144, %s145, %s146
      %p150 = pneg %p144
      %p151 = scmp.eq.s32.totalorder %s19, 1
      %p152 = por %p150, %p151
      %p153 = scmp.ne.s32.totalorder %s145, %s148
      %p154 = scmp.eq.s32.totalorder %s19, 0
      %p155 = por %p153, %p154
      %p156 = scmp.ne.s32.totalorder %s145, %s148
      %p157 = scmp.eq.s32.totalorder %s24, 1
      %p158 = por %p156, %p157
      %p159 = scmp.ne.s32.totalorder %s148, %s149
      %p160 = scmp.eq.s32.totalorder %s24, 0
      %p161 = por %p159, %p160
      %p162 = scmp.ne.s32.totalorder %s148, %s149
      %p163 = scmp.eq.s32.totalorder %s25, 1
      %p164 = por %p162, %p163
      %p166 = scmp.ne.s32.totalorder %s149, %s165
      %p167 = scmp.eq.s32.totalorder %s25, 0
      %p168 = por %p166, %p167
      %s169 = ssub.s32 %s27, %s34
      %p170 = scmp.eq.s32.totalorder %s169, 0
      %s172 = sadd.s32 %s171, 1
      %s173 = scalar_select %p170, %s171, %s172
      %p176 = pneg %p170
      %p177 = scmp.eq.s32.totalorder %s19, 1
      %p178 = por %p176, %p177
      %p179 = scmp.ne.s32.totalorder %s171, %s174
      %p180 = scmp.eq.s32.totalorder %s19, 0
      %p181 = por %p179, %p180
      %p182 = scmp.ne.s32.totalorder %s171, %s174
      %p183 = scmp.eq.s32.totalorder %s24, 1
      %p184 = por %p182, %p183
      %p185 = scmp.ne.s32.totalorder %s174, %s175
      %p186 = scmp.eq.s32.totalorder %s24, 0
      %p187 = por %p185, %p186
      %p188 = scmp.ne.s32.totalorder %s174, %s175
      %p189 = scmp.eq.s32.totalorder %s25, 1
      %p190 = por %p188, %p189
      %p192 = scmp.ne.s32.totalorder %s175, %s191
      %p193 = scmp.eq.s32.totalorder %s25, 0
      %p194 = por %p192, %p193
      %s195 = ssub.s32 %s27, %s34
      %p196 = scmp.eq.s32.totalorder %s195, 0
      %s198 = sadd.s32 %s197, 1
      %s199 = scalar_select %p196, %s197, %s198
      %p202 = pneg %p196
      %p203 = scmp.eq.s32.totalorder %s19, 1
      %p204 = por %p202, %p203
      %p205 = scmp.ne.s32.totalorder %s197, %s200
      %p206 = scmp.eq.s32.totalorder %s19, 0
      %p207 = por %p205, %p206
      %p208 = scmp.ne.s32.totalorder %s197, %s200
      %p209 = scmp.eq.s32.totalorder %s24, 1
      %p210 = por %p208, %p209
      %p211 = scmp.ne.s32.totalorder %s200, %s201
      %p212 = scmp.eq.s32.totalorder %s24, 0
      %p213 = por %p211, %p212
      %p214 = scmp.ne.s32.totalorder %s200, %s201
      %p215 = scmp.eq.s32.totalorder %s25, 1
      %p216 = por %p214, %p215
      %p218 = scmp.ne.s32.totalorder %s201, %s217
      %p219 = scmp.eq.s32.totalorder %s25, 0
      %p220 = por %p218, %p219
      %s221 = ssub.s32 %s26, %s38
      %p222 = scmp.eq.s32.totalorder %s221, 0
      %s224 = sadd.s32 %s223, 1
      %s225 = scalar_select %p222, %s223, %s224
      %p228 = pneg %p222
      %p229 = scmp.eq.s32.totalorder %s19, 1
      %p230 = por %p228, %p229
      %p231 = scmp.ne.s32.totalorder %s223, %s226
      %p232 = scmp.eq.s32.totalorder %s19, 0
      %p233 = por %p231, %p232
      %p234 = scmp.ne.s32.totalorder %s223, %s226
      %p235 = scmp.eq.s32.totalorder %s24, 1
      %p236 = por %p234, %p235
      %p237 = scmp.ne.s32.totalorder %s226, %s227
      %p238 = scmp.eq.s32.totalorder %s24, 0
      %p239 = por %p237, %p238
      %p240 = scmp.ne.s32.totalorder %s226, %s227
      %p241 = scmp.eq.s32.totalorder %s25, 1
      %p242 = por %p240, %p241
      %p244 = scmp.ne.s32.totalorder %s227, %s243
      %p245 = scmp.eq.s32.totalorder %s25, 0
      %p246 = por %p244, %p245
      %p247 = scmp.le.s32.totalorder 1, %s19
      %p248 = scmp.lt.s32.totalorder %s19, 3
      %p249 = pnand %p247, %p248
      %p250 = pneg %p249
      // Predicated region
      $region9: #{transformer_mapper_forward.3} parent=5 // pred_check
        _
      $region10: #{transformer_mapper_forward.3} parent=5 // pred_check_branch
        %252 = sbr.rel (%p249) target = $region12
      $region11: #{transformer_mapper_forward.3} parent=5 // pred_region
        %s253 = ssub.s32 %s19, 1
        // Predicated region
        $region13: #{transformer_mapper_forward.3} parent=11 // pred_check
          %p254 = pneg %p57
        $region14: #{transformer_mapper_forward.3} parent=11 // pred_check_branch
          %256 = sbr.rel (%p254) target = $region16
        $region15: #{transformer_mapper_forward.3} parent=11 // pred_region
          %s257 = smul.u32 2, %s28
          %p258 = scmp.lt.s32.totalorder %s257, 1
          %s259 = scalar_select %p258, %s257, 1
          %s260 = smul.addr %s259, 4
          %s261 = scalar_lea.vmem %s0, %s260
          %s262 = smul.u32 2, %s28
        $region16: #{transformer_mapper_forward.3} parent=11 // pred_fallthru
          _
      $region12: #{transformer_mapper_forward.3} parent=5 // pred_fallthru
        _
      %p263 = scmp.lt.s32.totalorder %s19, 2
      // Predicated region
      $region17: #{transformer_mapper_forward.3} parent=5 // pred_check
        %p264 = pneg %p263
      $region18: #{transformer_mapper_forward.3} parent=5 // pred_check_branch
        %266 = sbr.rel (%p264) target = $region20
      $region19: #{transformer_mapper_forward.3} parent=5 // pred_region
        // Predicated region
        $region21: #{transformer_mapper_forward.3} parent=19 // pred_check
          %p267 = pneg %p77
        $region22: #{transformer_mapper_forward.3} parent=19 // pred_check_branch
          %269 = sbr.rel (%p267) target = $region24
        $region23: #{transformer_mapper_forward.3} parent=19 // pred_region
          %p270 = scmp.lt.s32.totalorder %s27, 1
          %s271 = scalar_select %p270, %s27, 1
          %s272 = smul.addr %s271, 8
          %s273 = scalar_lea.vmem %s1, %s272
        $region24: #{transformer_mapper_forward.3} parent=19 // pred_fallthru
          _
        // Predicated region
        $region25: #{transformer_mapper_forward.3} parent=19 // pred_check
          %p274 = pneg %p103
        $region26: #{transformer_mapper_forward.3} parent=19 // pred_check_branch
          %276 = sbr.rel (%p274) target = $region28
        $region27: #{transformer_mapper_forward.3} parent=19 // pred_region
          %p277 = scmp.lt.s32.totalorder %s27, 1
          %s278 = scalar_select %p277, %s27, 1
          %s279 = smul.addr %s278, 2
          %s280 = scalar_lea.vmem %s2, %s279
        $region28: #{transformer_mapper_forward.3} parent=19 // pred_fallthru
          _
        // Predicated region
        $region29: #{transformer_mapper_forward.3} parent=19 // pred_check
          %p281 = pneg %p129
        $region30: #{transformer_mapper_forward.3} parent=19 // pred_check_branch
          %283 = sbr.rel (%p281) target = $region32
        $region31: #{transformer_mapper_forward.3} parent=19 // pred_region
          %s284 = sand.u32 %s119, 1
          %s285 = scalar_lea.sflag [#allocation4], %s284
          %s286 = sand.u32 %s119, 1
          %s287 = smul.addr %s286, 192
          %s288 = scalar_lea.vmem [#allocation3], %s287
          %s290 = ssub.s32 3072, 3072
          %291 = vsyncadd %s285, %s290
          %s292 = smul.addr %s27, 48
          %s293 = smul.addr %s292, 64
          %s294 = scalar_lea.hbm %s3, %s293
          %s295 = sshll.u32 %s288, 4
          %s296 = int_to_ptr.vmem [resolvable:$true] %s295
          %301 = dma.hbm_to_vmem [thread:$0]  %s294, 3072, %s296, %s285, 192, 192, 12
        $region32: #{transformer_mapper_forward.3} parent=19 // pred_fallthru
          _
        // Predicated region
        $region33: #{transformer_mapper_forward.3} parent=19 // pred_check
          %p302 = pneg %p155
        $region34: #{transformer_mapper_forward.3} parent=19 // pred_check_branch
          %304 = sbr.rel (%p302) target = $region36
        $region35: #{transformer_mapper_forward.3} parent=19 // pred_region
          %p305 = scmp.lt.s32.totalorder %s27, 1
          %s306 = scalar_select %p305, %s27, 1
          %s307 = smul.addr %s306, 16
          %s308 = smul.addr %s307, 4
          %s309 = scalar_lea.vmem %s4, %s308
        $region36: #{transformer_mapper_forward.3} parent=19 // pred_fallthru
          _
        // Predicated region
        $region37: #{transformer_mapper_forward.3} parent=19 // pred_check
          %p310 = pneg %p181
        $region38: #{transformer_mapper_forward.3} parent=19 // pred_check_branch
          %312 = sbr.rel (%p310) target = $region40
        $region39: #{transformer_mapper_forward.3} parent=19 // pred_region
          %s313 = sand.u32 %s19, 1
          %s314 = scalar_lea.sflag [#allocation6], %s313
          %s315 = sand.u32 %s171, 1
          %s316 = smul.addr %s315, 128
          %s317 = scalar_lea.vmem [#allocation5], %s316
          %s319 = ssub.s32 2048, 2048
          %320 = vsyncadd %s314, %s319
          %s321 = smul.addr %s27, 32
          %s322 = smul.addr %s321, 64
          %s323 = scalar_lea.hbm %s5, %s322
          %s324 = sshll.u32 %s317, 4
          %s325 = int_to_ptr.vmem [resolvable:$true] %s324
          %330 = dma.hbm_to_vmem [thread:$0]  %s323, 2048, %s325, %s314, 128, 128, 8
        $region40: #{transformer_mapper_forward.3} parent=19 // pred_fallthru
          _
        // Predicated region
        $region41: #{transformer_mapper_forward.3} parent=19 // pred_check
          %p331 = pneg %p207
        $region42: #{transformer_mapper_forward.3} parent=19 // pred_check_branch
          %333 = sbr.rel (%p331) target = $region44
        $region43: #{transformer_mapper_forward.3} parent=19 // pred_region
          %s334 = sand.u32 %s19, 1
          %s335 = scalar_lea.sflag [#allocation6], %s334
          %s336 = sand.u32 %s197, 1
          %s337 = smul.addr %s336, 128
          %s338 = scalar_lea.vmem [#allocation7], %s337
          %s340 = ssub.s32 2048, 2048
          %341 = vsyncadd %s335, %s340
          %s342 = smul.addr %s27, 32
          %s343 = smul.addr %s342, 64
          %s344 = scalar_lea.hbm %s6, %s343
          %s345 = sshll.u32 %s338, 4
          %s346 = int_to_ptr.vmem [resolvable:$true] %s345
          %351 = dma.hbm_to_vmem [thread:$0]  %s344, 2048, %s346, %s335, 64, 64, 4
        $region44: #{transformer_mapper_forward.3} parent=19 // pred_fallthru
          _
      $region20: #{transformer_mapper_forward.3} parent=5 // pred_fallthru
        _
      %p352 = scmp.le.s32.totalorder 1, %s19
      %p353 = scmp.lt.s32.totalorder %s19, 3
      %p354 = pnand %p352, %p353
      %p355 = pneg %p354
      // Predicated region
      $region45: #{transformer_mapper_forward.3} parent=5 // pred_check
        _
      $region46: #{transformer_mapper_forward.3} parent=5 // pred_check_branch
        %357 = sbr.rel (%p354) target = $region48
      $region47: #{transformer_mapper_forward.3} parent=5 // pred_region
        %s358 = ssub.s32 %s19, 1
        %s359 = sand.u32 %s122, 1
        %s360 = scalar_lea.sflag [#allocation4], %s359
        %s361 = sand.u32 %s122, 1
        %s362 = smul.addr %s361, 192
        %s363 = scalar_lea.vmem [#allocation3], %s362
        // Predicated region
        $region49: #{transformer_mapper_forward.3} parent=47 // pred_check
          %p364 = pneg %p135
        $region50: #{transformer_mapper_forward.3} parent=47 // pred_check_branch
          %366 = sbr.rel (%p364) target = $region52
        $region51: #{transformer_mapper_forward.3} parent=47 // pred_region
          %367 = dma.done %s360, 3072
        $region52: #{transformer_mapper_forward.3} parent=47 // pred_fallthru
          _
        %s368 = sand.u32 %s24, 1
        %s369 = scalar_lea.sflag [#allocation6], %s368
        %s370 = sand.u32 %s174, 1
        %s371 = smul.addr %s370, 128
        %s372 = scalar_lea.vmem [#allocation5], %s371
        // Predicated region
        $region53: #{transformer_mapper_forward.3} parent=47 // pred_check
          %p373 = pneg %p187
        $region54: #{transformer_mapper_forward.3} parent=47 // pred_check_branch
          %375 = sbr.rel (%p373) target = $region56
        $region55: #{transformer_mapper_forward.3} parent=47 // pred_region
          %376 = dma.done %s369, 2048
        $region56: #{transformer_mapper_forward.3} parent=47 // pred_fallthru
          _
        %s377 = sand.u32 %s24, 1
        %s378 = scalar_lea.sflag [#allocation6], %s377
        %s379 = sand.u32 %s200, 1
        %s380 = smul.addr %s379, 128
        %s381 = scalar_lea.vmem [#allocation7], %s380
        // Predicated region
        $region57: #{transformer_mapper_forward.3} parent=47 // pred_check
          %p382 = pneg %p213
        $region58: #{transformer_mapper_forward.3} parent=47 // pred_check_branch
          %384 = sbr.rel (%p382) target = $region60
        $region59: #{transformer_mapper_forward.3} parent=47 // pred_region
          %385 = dma.done %s378, 2048
        $region60: #{transformer_mapper_forward.3} parent=47 // pred_fallthru
          _
        %s386 = smul.u32 2, %s28
        %p387 = scmp.lt.s32.totalorder %s386, 1
        %s388 = scalar_select %p387, %s386, 1
        %s389 = smul.addr %s388, 4
        %s390 = scalar_lea.vmem %s0, %s389
        %p391 = pneg %p57
        %p392 = pneg %p54
        %p393 = scmp.lt.s32.totalorder %s29, 1
        %s394 = scalar_select %p393, %s29, 1
        %s395 = smul.addr %s394, 8
        %s396 = scalar_lea.vmem %s1, %s395
        %p397 = pneg %p83
        %p398 = pneg %p80
        %p399 = scmp.lt.s32.totalorder %s29, 1
        %s400 = scalar_select %p399, %s29, 1
        %s401 = smul.addr %s400, 2
        %s402 = scalar_lea.vmem %s2, %s401
        %p403 = pneg %p109
        %p404 = pneg %p106
        %s405 = sand.u32 %s122, 1
        %s406 = scalar_lea.sflag [#allocation4], %s405
        %s407 = sand.u32 %s122, 1
        %s408 = smul.addr %s407, 192
        %s409 = scalar_lea.vmem [#allocation3], %s408
        %p410 = pneg %p135
        %p411 = pneg %p132
        %p412 = scmp.lt.s32.totalorder %s29, 1
        %s413 = scalar_select %p412, %s29, 1
        %s414 = smul.addr %s413, 16
        %s415 = smul.addr %s414, 4
        %s416 = scalar_lea.vmem %s4, %s415
        %p417 = pneg %p161
        %p418 = pneg %p158
        %s419 = sand.u32 %s24, 1
        %s420 = scalar_lea.sflag [#allocation6], %s419
        %s421 = sand.u32 %s174, 1
        %s422 = smul.addr %s421, 128
        %s423 = scalar_lea.vmem [#allocation5], %s422
        %p424 = pneg %p187
        %p425 = pneg %p184
        %s426 = sand.u32 %s24, 1
        %s427 = scalar_lea.sflag [#allocation6], %s426
        %s428 = sand.u32 %s200, 1
        %s429 = smul.addr %s428, 128
        %s430 = scalar_lea.vmem [#allocation7], %s429
        %p431 = pneg %p213
        %p432 = pneg %p210
        %p433 = pneg %p239
        %p434 = pneg %p236
        %s435 = smul.u32 2, %s28
        %p436 = scmp.lt.s32.totalorder %s435, 1
        %s437 = scalar_select %p436, %s435, 1
        %s438 = smul.addr %s437, 8
        %s439 = scalar_lea.vmem %s7, %s438
        %s440 = smul.u32 2, %s28
        %p441 = scmp.lt.s32.totalorder %s440, 1
        %s442 = scalar_select %p441, %s440, 1
        %s443 = smul.addr %s442, 4
        %s444 = scalar_lea.vmem %s0, %s443
        %s445 = smul.u32 2, %s28
        %p446 = scmp.lt.s32.totalorder %s29, 1
        %s447 = scalar_select %p446, %s29, 1
        %s448 = smul.addr %s447, 8
        %s449 = scalar_lea.vmem %s1, %s448
        %p450 = scmp.lt.s32.totalorder %s29, 1
        %s451 = scalar_select %p450, %s29, 1
        %s452 = smul.addr %s451, 2
        %s453 = scalar_lea.vmem %s2, %s452
        %p454 = scmp.lt.s32.totalorder %s29, 1
        %s455 = scalar_select %p454, %s29, 1
        %s456 = smul.addr %s455, 16
        %s457 = smul.addr %s456, 4
        %s458 = scalar_lea.vmem %s4, %s457
        %s459 = smul.u32 2, %s28
        %p460 = scmp.lt.s32.totalorder %s459, 1
        %s461 = scalar_select %p460, %s459, 1
        %s462 = smul.addr %s461, 8
        %s463 = scalar_lea.vmem %s7, %s462
        %s464 = smul.u32 2, %s28
        %p466 = scmp.eq.s32.totalorder %s29, 0
        // Predicated region
        $region61: #{transformer_mapper_forward.3} parent=47 // pred_check
          %p467 = pneg %p466
        $region62: #{transformer_mapper_forward.3} parent=47 // pred_check_branch
          %469 = sbr.rel (%p467) target = $region64
        $region63: #{transformer_mapper_forward.3} parent=47 // pred_region
          %v470 = vld [vmem:[%s444] sm:$0xf]
          %v471 = vld [vmem:[%s444 + $0x4] sm:$0xf]
          %v472 = vunpack.c.l.bf16 %v470
          %v473 = vunpack.c.l.bf16 %v471
          %474 = vst [vmem:[#allocation2] sm:$0xff] %v472
          %475 = vst [vmem:[#allocation2 + $0x8] sm:$0xff] %v473
        $region64: #{transformer_mapper_forward.3} parent=47 // pred_fallthru
          _
        %v476 = vld [vmem:[#allocation2] sm:$0xff]
        %v477 = vld [vmem:[#allocation2 + $0x8] sm:$0xff]
        %v478 = vld [vmem:[%s449] sm:$0xff]
        %v479 = vld [vmem:[%s453] sm:$0x3]
        %480 = vadd.xlane.f32.xlu0 %v476
        %v481 = vpop.xlane.xlu0 %480
        %482 = vadd.xlane.f32.xlu0 %v477
        %v483 = vpop.xlane.xlu0 %482
        %v484 = vrcp.pop 128.0
        %v485 = vmul.f32 %v481, %v484
        %v486 = vmul.f32 %v483, %v484
        %v487 = vsub.f32 %v476, %v485
        %v488 = vsub.f32 %v477, %v486
        %v489 = vmul.f32 %v487, %v487
        %v490 = vmul.f32 %v488, %v488
        %491 = vadd.xlane.f32.xlu0 %v489
        %v492 = vpop.xlane.xlu0 %491
        %493 = vadd.xlane.f32.xlu0 %v490
        %v494 = vpop.xlane.xlu0 %493
        %v495 = vmul.f32 %v492, %v484
        %v496 = vmul.f32 %v494, %v484
        %v497 = vadd.f32 %v495, 1e-05
        %v498 = vadd.f32 %v496, 1e-05
        %v499 = vrsqrt.pop %v497
        %v500 = vrsqrt.pop %v498
        %v501 = vmul.f32 %v487, %v499
        %v502 = vmul.f32 %v488, %v500
        %v503 = vlaneseq
        %v504 = vshrl.u32 %v503, 7
        %v505 = vsub.s32 0, %v504
        %v506 = vrot.slane %v478, %v505
        %v507 = vmul.f32 %v501, %v506
        %v508 = vmul.f32 %v502, %v506
        %v509 = vlaneseq
        %v510 = vshrl.u32 %v509, 7
        %v511 = vsub.s32 1, %v510
        %v512 = vrot.slane %v478, %v511
        %v513 = vadd.f32 %v507, %v512
        %v514 = vadd.f32 %v508, %v512
        %v515 = vpack.c.bf16 %v514, %v513
        %v516 = vld [vmem:[%s363] sm:$0xff]
        %v517 = vld [vmem:[%s363 + $0x8] sm:$0xf]
        %v518 = vld [vmem:[%s363 + $0xc] sm:$0xff]
        %v519 = vld [vmem:[%s363 + $0x14] sm:$0xf]
        %v520 = vld [vmem:[%s363 + $0x18] sm:$0xff]
        %v521 = vld [vmem:[%s363 + $0x20] sm:$0xf]
        %v522 = vld [vmem:[%s363 + $0x24] sm:$0xff]
        %v523 = vld [vmem:[%s363 + $0x2c] sm:$0xf]
        %v524 = vld [vmem:[%s363 + $0x30] sm:$0xff]
        %v525 = vld [vmem:[%s363 + $0x38] sm:$0xf]
        %v526 = vld [vmem:[%s363 + $0x3c] sm:$0xff]
        %v527 = vld [vmem:[%s363 + $0x44] sm:$0xf]
        %v528 = vld [vmem:[%s363 + $0x48] sm:$0xff]
        %v529 = vld [vmem:[%s363 + $0x50] sm:$0xf]
        %v530 = vld [vmem:[%s363 + $0x54] sm:$0xff]
        %v531 = vld [vmem:[%s363 + $0x5c] sm:$0xf]
        %v532 = vld [vmem:[%s363 + $0x60] sm:$0xff]
        %v533 = vld [vmem:[%s363 + $0x68] sm:$0xf]
        %v534 = vld [vmem:[%s363 + $0x6c] sm:$0xff]
        %v535 = vld [vmem:[%s363 + $0x74] sm:$0xf]
        %v536 = vld [vmem:[%s363 + $0x78] sm:$0xff]
        %v537 = vld [vmem:[%s363 + $0x80] sm:$0xf]
        %v538 = vld [vmem:[%s363 + $0x84] sm:$0xff]
        %v539 = vld [vmem:[%s363 + $0x8c] sm:$0xf]
        %v540 = vld [vmem:[%s363 + $0x90] sm:$0xff]
        %v541 = vld [vmem:[%s363 + $0x98] sm:$0xf]
        %v542 = vld [vmem:[%s363 + $0x9c] sm:$0xff]
        %v543 = vld [vmem:[%s363 + $0xa4] sm:$0xf]
        %v544 = vld [vmem:[%s363 + $0xa8] sm:$0xff]
        %v545 = vld [vmem:[%s363 + $0xb0] sm:$0xf]
        %v546 = vld [vmem:[%s363 + $0xb4] sm:$0xff]
        %v547 = vld [vmem:[%s363 + $0xbc] sm:$0xf]
        %v580 = vunpack.c.l.b16 %v516
        %v581 = vunpack.c.h.b16 %v516
        %v582 = vunpack.c.l.b16 %v517
        %v583 = vunpack.c.l.b16 %v518
        %v584 = vunpack.c.h.b16 %v518
        %v585 = vunpack.c.l.b16 %v519
        %v586 = vunpack.c.l.b16 %v520
        %v587 = vunpack.c.h.b16 %v520
        %v588 = vunpack.c.l.b16 %v521
        %v589 = vunpack.c.l.b16 %v522
        %v590 = vunpack.c.h.b16 %v522
        %v591 = vunpack.c.l.b16 %v523
        %v592 = vunpack.c.l.b16 %v524
        %v593 = vunpack.c.h.b16 %v524
        %v594 = vunpack.c.l.b16 %v525
        %v595 = vunpack.c.l.b16 %v526
        %v596 = vunpack.c.h.b16 %v526
        %v597 = vunpack.c.l.b16 %v527
        %v598 = vunpack.c.l.b16 %v528
        %v599 = vunpack.c.h.b16 %v528
        %v600 = vunpack.c.l.b16 %v529
        %v601 = vunpack.c.l.b16 %v530
        %v602 = vunpack.c.h.b16 %v530
        %v603 = vunpack.c.l.b16 %v531
        %v604 = vunpack.c.l.b16 %v532
        %v605 = vunpack.c.h.b16 %v532
        %v606 = vunpack.c.l.b16 %v533
        %v607 = vunpack.c.l.b16 %v534
        %v608 = vunpack.c.h.b16 %v534
        %v609 = vunpack.c.l.b16 %v535
        %v610 = vunpack.c.l.b16 %v536
        %v611 = vunpack.c.h.b16 %v536
        %v612 = vunpack.c.l.b16 %v537
        %v613 = vunpack.c.l.b16 %v538
        %v614 = vunpack.c.h.b16 %v538
        %v615 = vunpack.c.l.b16 %v539
        %v616 = vunpack.c.l.b16 %v540
        %v617 = vunpack.c.h.b16 %v540
        %v618 = vunpack.c.l.b16 %v541
        %v619 = vunpack.c.l.b16 %v542
        %v620 = vunpack.c.h.b16 %v542
        %v621 = vunpack.c.l.b16 %v543
        %v622 = vunpack.c.l.b16 %v544
        %v623 = vunpack.c.h.b16 %v544
        %v624 = vunpack.c.l.b16 %v545
        %v625 = vunpack.c.l.b16 %v546
        %v626 = vunpack.c.h.b16 %v546
        %v627 = vunpack.c.l.b16 %v547
        %v628 = vpack.c.b16 %v583, %v580
        %v629 = vpack.c.b16 %v584, %v581
        %v630 = vpack.c.b16 %v585, %v582
        %v631 = vpack.c.b16 %v589, %v586
        %v632 = vpack.c.b16 %v590, %v587
        %v633 = vpack.c.b16 %v591, %v588
        %v634 = vpack.c.b16 %v595, %v592
        %v635 = vpack.c.b16 %v596, %v593
        %v636 = vpack.c.b16 %v597, %v594
        %v637 = vpack.c.b16 %v601, %v598
        %v638 = vpack.c.b16 %v602, %v599
        %v639 = vpack.c.b16 %v603, %v600
        %v640 = vpack.c.b16 %v607, %v604
        %v641 = vpack.c.b16 %v608, %v605
        %v642 = vpack.c.b16 %v609, %v606
        %v643 = vpack.c.b16 %v613, %v610
        %v644 = vpack.c.b16 %v614, %v611
        %v645 = vpack.c.b16 %v615, %v612
        %v646 = vpack.c.b16 %v619, %v616
        %v647 = vpack.c.b16 %v620, %v617
        %v648 = vpack.c.b16 %v621, %v618
        %v649 = vpack.c.b16 %v625, %v622
        %v650 = vpack.c.b16 %v626, %v623
        %v651 = vpack.c.b16 %v627, %v624
        %676 = vmatprep.subr.bf16.mxu0 %v629
        %677 = vmatpush1.bf16.msra.mxu0 %v628
        %678 = vmatprep.subr.bf16.mxu0 %v632
        %679 = vmatpush1.bf16.msra.mxu0 %v631
        %680 = vmatprep.subr.bf16.mxu0 %v635
        %681 = vmatpush1.bf16.msra.mxu0 %v634
        %682 = vmatprep.subr.bf16.mxu0 %v638
        %683 = vmatpush1.bf16.msra.mxu0 %v637
        %684 = vmatprep.subr.bf16.mxu0 %v641
        %685 = vmatpush1.bf16.msra.mxu0 %v640
        %686 = vmatprep.subr.bf16.mxu0 %v644
        %687 = vmatpush1.bf16.msra.mxu0 %v643
        %688 = vmatprep.subr.bf16.mxu0 %v647
        %689 = vmatpush1.bf16.msra.mxu0 %v646
        %690 = vmatprep.subr.bf16.mxu0 %v650
        %691 = vmatpush1.bf16.msra.mxu0 %v649
        %692 = vmatprep.subr.bf16.mxu0 0
        %693 = vmatpush1.bf16.msra.mxu0 0
        %694 = vmatprep.subr.bf16.mxu0 0
        %695 = vmatpush1.bf16.msra.mxu0 0
        %696 = vmatprep.subr.bf16.mxu0 0
        %697 = vmatpush1.bf16.msra.mxu0 0
        %698 = vmatprep.subr.bf16.mxu0 0
        %699 = vmatpush1.bf16.msra.mxu0 0
        %700 = vmatprep.subr.bf16.mxu0 0
        %701 = vmatpush1.bf16.msra.mxu0 0
        %702 = vmatprep.subr.bf16.mxu0 0
        %703 = vmatpush1.bf16.msra.mxu0 0
        %704 = vmatprep.subr.bf16.mxu0 0
        %705 = vmatpush1.bf16.msra.mxu0 0
        %706 = vmatprep.subr.bf16.mxu0 0
        %707 = vmatpush1.bf16.msra.mxu0 0
        %708 = vmatprep.mubr.bf16.mxu0 0
        %709 = vmatmul.mubr.bf16.gmra.mrb[0].mxu0 %v515
        %v710 = vpop.f32.mrb[0].mxu0
        %v711 = vadd.f32 0.0, %v710
        %v712 = vpop.f32.mrb[0].mxu0
        %v713 = vadd.f32 0.0, %v712
        %v714 = vpop.f32.mrb[0].mxu0
        %v715 = vadd.f32 0.0, %v714
        %v716 = vpop.f32.mrb[0].mxu0
        %v717 = vadd.f32 0.0, %v716
        %718 = vdwg.mxu0
        %719 = vmatprep.subr.bf16.mxu0 0
        %720 = vmatpush1.bf16.msra.mxu0 %v630
        %721 = vmatprep.subr.bf16.mxu0 0
        %722 = vmatpush1.bf16.msra.mxu0 %v633
        %723 = vmatprep.subr.bf16.mxu0 0
        %724 = vmatpush1.bf16.msra.mxu0 %v636
        %725 = vmatprep.subr.bf16.mxu0 0
        %726 = vmatpush1.bf16.msra.mxu0 %v639
        %727 = vmatprep.subr.bf16.mxu0 0
        %728 = vmatpush1.bf16.msra.mxu0 %v642
        %729 = vmatprep.subr.bf16.mxu0 0
        %730 = vmatpush1.bf16.msra.mxu0 %v645
        %731 = vmatprep.subr.bf16.mxu0 0
        %732 = vmatpush1.bf16.msra.mxu0 %v648
        %733 = vmatprep.subr.bf16.mxu0 0
        %734 = vmatpush1.bf16.msra.mxu0 %v651
        %735 = vmatprep.subr.bf16.mxu0 0
        %736 = vmatpush1.bf16.msra.mxu0 0
        %737 = vmatprep.subr.bf16.mxu0 0
        %738 = vmatpush1.bf16.msra.mxu0 0
        %739 = vmatprep.subr.bf16.mxu0 0
        %740 = vmatpush1.bf16.msra.mxu0 0
        %741 = vmatprep.subr.bf16.mxu0 0
        %742 = vmatpush1.bf16.msra.mxu0 0
        %743 = vmatprep.subr.bf16.mxu0 0
        %744 = vmatpush1.bf16.msra.mxu0 0
        %745 = vmatprep.subr.bf16.mxu0 0
        %746 = vmatpush1.bf16.msra.mxu0 0
        %747 = vmatprep.subr.bf16.mxu0 0
        %748 = vmatpush1.bf16.msra.mxu0 0
        %749 = vmatprep.subr.bf16.mxu0 0
        %750 = vmatpush1.bf16.msra.mxu0 0
        %751 = vmatprep.mubr.bf16.mxu0 0
        %752 = vmatmul.mubr.bf16.gmra.mrb[0].mxu0 %v515
        %v753 = vpop.f32.mrb[0].mxu0
        %v754 = vadd.f32 0.0, %v753
        %v755 = vpop.f32.mrb[0].mxu0
        %v756 = vpop.f32.mrb[0].mxu0
        %v757 = vadd.f32 0.0, %v756
        %v758 = vpop.f32.mrb[0].mxu0
        %759 = vdwg.mxu0
        %v760 = vpack.c.bf16 %v715, %v711
        %v761 = vpack.c.bf16 %v717, %v713
        %v762 = vpack.c.bf16 %v757, %v754
        %764 = vrot.lane.b32.xlu0 %v760, 112
        %v765 = vpop.permute.xlu0 %764
        %766 = vrot.lane.b32.xlu0 %v760, 96
        %v767 = vpop.permute.xlu0 %766
        %768 = vrot.lane.b32.xlu0 %v760, 80
        %v769 = vpop.permute.xlu0 %768
        %770 = vrot.lane.b32.xlu0 %v760, 64
        %v771 = vpop.permute.xlu0 %770
        %772 = vrot.lane.b32.xlu0 %v760, 48
        %v773 = vpop.permute.xlu0 %772
        %774 = vrot.lane.b32.xlu0 %v760, 32
        %v775 = vpop.permute.xlu0 %774
        %776 = vrot.lane.b32.xlu0 %v760, 16
        %v777 = vpop.permute.xlu0 %776
        %v780 = vpack.i.b16 %v765, %v760
        %v782 = vshrl.u32 %v760, 16
        %v783 = vshrl.u32 %v765, 16
        %v784 = vpack.i.b16 %v783, %v782
        %v788 = vpack.i.b16 %v769, %v767
        %v790 = vshrl.u32 %v767, 16
        %v791 = vshrl.u32 %v769, 16
        %v792 = vpack.i.b16 %v791, %v790
        %v796 = vpack.i.b16 %v773, %v771
        %v798 = vshrl.u32 %v771, 16
        %v799 = vshrl.u32 %v773, 16
        %v800 = vpack.i.b16 %v799, %v798
        %v804 = vpack.i.b16 %v777, %v775
        %v806 = vshrl.u32 %v775, 16
        %v807 = vshrl.u32 %v777, 16
        %v808 = vpack.i.b16 %v807, %v806
        %v810 = vcombine.low %v780, %v796
        %v811 = vcombine.high %v780, %v796
        %v813 = vunpack.c.l.s4 1983009808
        %v814 = vunpack.c.0.s8 %v813
        %v815 = vlaneseq
        %v816 = vshrl.u32 %v815, 7
        %v817 = vsub.s32 %v814, %v816
        %v818 = vrot.slane %v810, %v817
        %v820 = vunpack.c.l.s4 1983009808
        %v821 = vunpack.c.0.s8 %v820
        %v822 = vlaneseq
        %v823 = vshrl.u32 %v822, 7
        %v824 = vsub.s32 %v821, %v823
        %v825 = vrot.slane %v811, %v824
        %v826 = vcombine.low %v788, %v804
        %v827 = vcombine.high %v788, %v804
        %v829 = vunpack.c.l.s4 1983009808
        %v830 = vunpack.c.0.s8 %v829
        %v831 = vlaneseq
        %v832 = vshrl.u32 %v831, 7
        %v833 = vsub.s32 %v830, %v832
        %v834 = vrot.slane %v826, %v833
        %v836 = vunpack.c.l.s4 1983009808
        %v837 = vunpack.c.0.s8 %v836
        %v838 = vlaneseq
        %v839 = vshrl.u32 %v838, 7
        %v840 = vsub.s32 %v837, %v839
        %v841 = vrot.slane %v827, %v840
        %v842 = vcombine.low %v818, %v834
        %v843 = vcombine.high %v818, %v834
        %v845 = vunpack.c.l.s4 1934713408
        %v846 = vunpack.c.0.s8 %v845
        %v847 = vlaneseq
        %v848 = vshrl.u32 %v847, 7
        %v849 = vsub.s32 %v846, %v848
        %v850 = vrot.slane %v842, %v849
        %v852 = vunpack.c.l.s4 1934713408
        %v853 = vunpack.c.0.s8 %v852
        %v854 = vlaneseq
        %v855 = vshrl.u32 %v854, 7
        %v856 = vsub.s32 %v853, %v855
        %v857 = vrot.slane %v843, %v856
        %v858 = vcombine.low %v825, %v841
        %v859 = vcombine.high %v825, %v841
        %v861 = vunpack.c.l.s4 1934713408
        %v862 = vunpack.c.0.s8 %v861
        %v863 = vlaneseq
        %v864 = vshrl.u32 %v863, 7
        %v865 = vsub.s32 %v862, %v864
        %v866 = vrot.slane %v858, %v865
        %v868 = vunpack.c.l.s4 1934713408
        %v869 = vunpack.c.0.s8 %v868
        %v870 = vlaneseq
        %v871 = vshrl.u32 %v870, 7
        %v872 = vsub.s32 %v869, %v871
        %v873 = vrot.slane %v859, %v872
        %v874 = vcombine.high %v850, 0
        %v875 = vcombine.high %v857, 0
        %v876 = vcombine.high %v866, 0
        %v877 = vcombine.high %v873, 0
        %v878 = vcombine.low %v784, %v800
        %v879 = vcombine.high %v784, %v800
        %v881 = vunpack.c.l.s4 1983009808
        %v882 = vunpack.c.0.s8 %v881
        %v883 = vlaneseq
        %v884 = vshrl.u32 %v883, 7
        %v885 = vsub.s32 %v882, %v884
        %v886 = vrot.slane %v878, %v885
        %v888 = vunpack.c.l.s4 1983009808
        %v889 = vunpack.c.0.s8 %v888
        %v890 = vlaneseq
        %v891 = vshrl.u32 %v890, 7
        %v892 = vsub.s32 %v889, %v891
        %v893 = vrot.slane %v879, %v892
        %v894 = vcombine.low %v792, %v808
        %v895 = vcombine.high %v792, %v808
        %v897 = vunpack.c.l.s4 1983009808
        %v898 = vunpack.c.0.s8 %v897
        %v899 = vlaneseq
        %v900 = vshrl.u32 %v899, 7
        %v901 = vsub.s32 %v898, %v900
        %v902 = vrot.slane %v894, %v901
        %v904 = vunpack.c.l.s4 1983009808
        %v905 = vunpack.c.0.s8 %v904
        %v906 = vlaneseq
        %v907 = vshrl.u32 %v906, 7
        %v908 = vsub.s32 %v905, %v907
        %v909 = vrot.slane %v895, %v908
        %v910 = vcombine.low %v886, %v902
        %v911 = vcombine.high %v886, %v902
        %v913 = vunpack.c.l.s4 1934713408
        %v914 = vunpack.c.0.s8 %v913
        %v915 = vlaneseq
        %v916 = vshrl.u32 %v915, 7
        %v917 = vsub.s32 %v914, %v916
        %v918 = vrot.slane %v910, %v917
        %v920 = vunpack.c.l.s4 1934713408
        %v921 = vunpack.c.0.s8 %v920
        %v922 = vlaneseq
        %v923 = vshrl.u32 %v922, 7
        %v924 = vsub.s32 %v921, %v923
        %v925 = vrot.slane %v911, %v924
        %v926 = vcombine.low %v893, %v909
        %v927 = vcombine.high %v893, %v909
        %v929 = vunpack.c.l.s4 1934713408
        %v930 = vunpack.c.0.s8 %v929
        %v931 = vlaneseq
        %v932 = vshrl.u32 %v931, 7
        %v933 = vsub.s32 %v930, %v932
        %v934 = vrot.slane %v926, %v933
        %v936 = vunpack.c.l.s4 1934713408
        %v937 = vunpack.c.0.s8 %v936
        %v938 = vlaneseq
        %v939 = vshrl.u32 %v938, 7
        %v940 = vsub.s32 %v937, %v939
        %v941 = vrot.slane %v927, %v940
        %v942 = vcombine.high %v918, 0
        %v943 = vcombine.high %v925, 0
        %v944 = vcombine.high %v934, 0
        %v945 = vcombine.high %v941, 0
        %v946 = vcombine.low %v850, %v857
        %v948 = vunpack.c.l.s4 1983009808
        %v949 = vunpack.c.0.s8 %v948
        %v950 = vlaneseq
        %v951 = vshrl.u32 %v950, 7
        %v952 = vsub.s32 %v949, %v951
        %v953 = vrot.slane %v946, %v952
        %v954 = vcombine.low %v874, %v875
        %v956 = vunpack.c.l.s4 1983009808
        %v957 = vunpack.c.0.s8 %v956
        %v958 = vlaneseq
        %v959 = vshrl.u32 %v958, 7
        %v960 = vsub.s32 %v957, %v959
        %v961 = vrot.slane %v954, %v960
        %v962 = vcombine.low %v953, %v961
        %v963 = vcombine.high %v953, %v961
        %v965 = vunpack.c.l.s4 1934713408
        %v966 = vunpack.c.0.s8 %v965
        %v967 = vlaneseq
        %v968 = vshrl.u32 %v967, 7
        %v969 = vsub.s32 %v966, %v968
        %v970 = vrot.slane %v962, %v969
        %v972 = vunpack.c.l.s4 1934713408
        %v973 = vunpack.c.0.s8 %v972
        %v974 = vlaneseq
        %v975 = vshrl.u32 %v974, 7
        %v976 = vsub.s32 %v973, %v975
        %v977 = vrot.slane %v963, %v976
        %v978 = vcombine.high %v970, 0
        %v979 = vcombine.high %v977, 0
        %v980 = vcombine.low %v918, %v925
        %v982 = vunpack.c.l.s4 1983009808
        %v983 = vunpack.c.0.s8 %v982
        %v984 = vlaneseq
        %v985 = vshrl.u32 %v984, 7
        %v986 = vsub.s32 %v983, %v985
        %v987 = vrot.slane %v980, %v986
        %v988 = vcombine.low %v942, %v943
        %v990 = vunpack.c.l.s4 1983009808
        %v991 = vunpack.c.0.s8 %v990
        %v992 = vlaneseq
        %v993 = vshrl.u32 %v992, 7
        %v994 = vsub.s32 %v991, %v993
        %v995 = vrot.slane %v988, %v994
        %v996 = vcombine.low %v987, %v995
        %v997 = vcombine.high %v987, %v995
        %v999 = vunpack.c.l.s4 1934713408
        %v1000 = vunpack.c.0.s8 %v999
        %v1001 = vlaneseq
        %v1002 = vshrl.u32 %v1001, 7
        %v1003 = vsub.s32 %v1000, %v1002
        %v1004 = vrot.slane %v996, %v1003
        %v1006 = vunpack.c.l.s4 1934713408
        %v1007 = vunpack.c.0.s8 %v1006
        %v1008 = vlaneseq
        %v1009 = vshrl.u32 %v1008, 7
        %v1010 = vsub.s32 %v1007, %v1009
        %v1011 = vrot.slane %v997, %v1010
        %v1012 = vcombine.high %v1004, 0
        %v1013 = vcombine.high %v1011, 0
        %v1014 = vcombine.low %v866, %v873
        %v1016 = vunpack.c.l.s4 1983009808
        %v1017 = vunpack.c.0.s8 %v1016
        %v1018 = vlaneseq
        %v1019 = vshrl.u32 %v1018, 7
        %v1020 = vsub.s32 %v1017, %v1019
        %v1021 = vrot.slane %v1014, %v1020
        %v1022 = vcombine.low %v876, %v877
        %v1024 = vunpack.c.l.s4 1983009808
        %v1025 = vunpack.c.0.s8 %v1024
        %v1026 = vlaneseq
        %v1027 = vshrl.u32 %v1026, 7
        %v1028 = vsub.s32 %v1025, %v1027
        %v1029 = vrot.slane %v1022, %v1028
        %v1030 = vcombine.low %v1021, %v1029
        %v1031 = vcombine.high %v1021, %v1029
        %v1033 = vunpack.c.l.s4 1934713408
        %v1034 = vunpack.c.0.s8 %v1033
        %v1035 = vlaneseq
        %v1036 = vshrl.u32 %v1035, 7
        %v1037 = vsub.s32 %v1034, %v1036
        %v1038 = vrot.slane %v1030, %v1037
        %v1040 = vunpack.c.l.s4 1934713408
        %v1041 = vunpack.c.0.s8 %v1040
        %v1042 = vlaneseq
        %v1043 = vshrl.u32 %v1042, 7
        %v1044 = vsub.s32 %v1041, %v1043
        %v1045 = vrot.slane %v1031, %v1044
        %v1046 = vcombine.high %v1038, 0
        %v1047 = vcombine.high %v1045, 0
        %v1048 = vcombine.low %v934, %v941
        %v1050 = vunpack.c.l.s4 1983009808
        %v1051 = vunpack.c.0.s8 %v1050
        %v1052 = vlaneseq
        %v1053 = vshrl.u32 %v1052, 7
        %v1054 = vsub.s32 %v1051, %v1053
        %v1055 = vrot.slane %v1048, %v1054
        %v1056 = vcombine.low %v944, %v945
        %v1058 = vunpack.c.l.s4 1983009808
        %v1059 = vunpack.c.0.s8 %v1058
        %v1060 = vlaneseq
        %v1061 = vshrl.u32 %v1060, 7
        %v1062 = vsub.s32 %v1059, %v1061
        %v1063 = vrot.slane %v1056, %v1062
        %v1064 = vcombine.low %v1055, %v1063
        %v1065 = vcombine.high %v1055, %v1063
        %v1067 = vunpack.c.l.s4 1934713408
        %v1068 = vunpack.c.0.s8 %v1067
        %v1069 = vlaneseq
        %v1070 = vshrl.u32 %v1069, 7
        %v1071 = vsub.s32 %v1068, %v1070
        %v1072 = vrot.slane %v1064, %v1071
        %v1074 = vunpack.c.l.s4 1934713408
        %v1075 = vunpack.c.0.s8 %v1074
        %v1076 = vlaneseq
        %v1077 = vshrl.u32 %v1076, 7
        %v1078 = vsub.s32 %v1075, %v1077
        %v1079 = vrot.slane %v1065, %v1078
        %v1080 = vcombine.high %v1072, 0
        %v1081 = vcombine.high %v1079, 0
        %v1084 = vpack.i.b16 %v1004, %v970
        %v1085 = vshrl.u32 %v970, 16
        %v1086 = vshrl.u32 %v1004, 16
        %v1087 = vpack.i.b16 %v1086, %v1085
        %v1090 = vpack.i.b16 %v1012, %v978
        %v1091 = vshrl.u32 %v978, 16
        %v1092 = vshrl.u32 %v1012, 16
        %v1093 = vpack.i.b16 %v1092, %v1091
        %v1096 = vpack.i.b16 %v1011, %v977
        %v1097 = vshrl.u32 %v977, 16
        %v1098 = vshrl.u32 %v1011, 16
        %v1099 = vpack.i.b16 %v1098, %v1097
        %v1102 = vpack.i.b16 %v1013, %v979
        %v1103 = vshrl.u32 %v979, 16
        %v1104 = vshrl.u32 %v1013, 16
        %v1105 = vpack.i.b16 %v1104, %v1103
        %v1108 = vpack.i.b16 %v1072, %v1038
        %v1109 = vshrl.u32 %v1038, 16
        %v1110 = vshrl.u32 %v1072, 16
        %v1111 = vpack.i.b16 %v1110, %v1109
        %v1114 = vpack.i.b16 %v1080, %v1046
        %v1115 = vshrl.u32 %v1046, 16
        %v1116 = vshrl.u32 %v1080, 16
        %v1117 = vpack.i.b16 %v1116, %v1115
        %v1120 = vpack.i.b16 %v1079, %v1045
        %v1121 = vshrl.u32 %v1045, 16
        %v1122 = vshrl.u32 %v1079, 16
        %v1123 = vpack.i.b16 %v1122, %v1121
        %v1126 = vpack.i.b16 %v1081, %v1047
        %v1127 = vshrl.u32 %v1047, 16
        %v1128 = vshrl.u32 %v1081, 16
        %v1129 = vpack.i.b16 %v1128, %v1127
        %1131 = vrot.lane.b32.xlu0 %v761, 112
        %v1132 = vpop.permute.xlu0 %1131
        %1133 = vrot.lane.b32.xlu0 %v761, 96
        %v1134 = vpop.permute.xlu0 %1133
        %1135 = vrot.lane.b32.xlu0 %v761, 80
        %v1136 = vpop.permute.xlu0 %1135
        %1137 = vrot.lane.b32.xlu0 %v761, 64
        %v1138 = vpop.permute.xlu0 %1137
        %1139 = vrot.lane.b32.xlu0 %v761, 48
        %v1140 = vpop.permute.xlu0 %1139
        %1141 = vrot.lane.b32.xlu0 %v761, 32
        %v1142 = vpop.permute.xlu0 %1141
        %1143 = vrot.lane.b32.xlu0 %v761, 16
        %v1144 = vpop.permute.xlu0 %1143
        %v1147 = vpack.i.b16 %v1132, %v761
        %v1149 = vshrl.u32 %v761, 16
        %v1150 = vshrl.u32 %v1132, 16
        %v1151 = vpack.i.b16 %v1150, %v1149
        %v1155 = vpack.i.b16 %v1136, %v1134
        %v1157 = vshrl.u32 %v1134, 16
        %v1158 = vshrl.u32 %v1136, 16
        %v1159 = vpack.i.b16 %v1158, %v1157
        %v1163 = vpack.i.b16 %v1140, %v1138
        %v1165 = vshrl.u32 %v1138, 16
        %v1166 = vshrl.u32 %v1140, 16
        %v1167 = vpack.i.b16 %v1166, %v1165
        %v1171 = vpack.i.b16 %v1144, %v1142
        %v1173 = vshrl.u32 %v1142, 16
        %v1174 = vshrl.u32 %v1144, 16
        %v1175 = vpack.i.b16 %v1174, %v1173
        %v1177 = vcombine.low %v1147, %v1163
        %v1178 = vcombine.high %v1147, %v1163
        %v1180 = vunpack.c.l.s4 1983009808
        %v1181 = vunpack.c.0.s8 %v1180
        %v1182 = vlaneseq
        %v1183 = vshrl.u32 %v1182, 7
        %v1184 = vsub.s32 %v1181, %v1183
        %v1185 = vrot.slane %v1177, %v1184
        %v1187 = vunpack.c.l.s4 1983009808
        %v1188 = vunpack.c.0.s8 %v1187
        %v1189 = vlaneseq
        %v1190 = vshrl.u32 %v1189, 7
        %v1191 = vsub.s32 %v1188, %v1190
        %v1192 = vrot.slane %v1178, %v1191
        %v1193 = vcombine.low %v1155, %v1171
        %v1194 = vcombine.high %v1155, %v1171
        %v1196 = vunpack.c.l.s4 1983009808
        %v1197 = vunpack.c.0.s8 %v1196
        %v1198 = vlaneseq
        %v1199 = vshrl.u32 %v1198, 7
        %v1200 = vsub.s32 %v1197, %v1199
        %v1201 = vrot.slane %v1193, %v1200
        %v1203 = vunpack.c.l.s4 1983009808
        %v1204 = vunpack.c.0.s8 %v1203
        %v1205 = vlaneseq
        %v1206 = vshrl.u32 %v1205, 7
        %v1207 = vsub.s32 %v1204, %v1206
        %v1208 = vrot.slane %v1194, %v1207
        %v1209 = vcombine.low %v1185, %v1201
        %v1210 = vcombine.high %v1185, %v1201
        %v1212 = vunpack.c.l.s4 1934713408
        %v1213 = vunpack.c.0.s8 %v1212
        %v1214 = vlaneseq
        %v1215 = vshrl.u32 %v1214, 7
        %v1216 = vsub.s32 %v1213, %v1215
        %v1217 = vrot.slane %v1209, %v1216
        %v1219 = vunpack.c.l.s4 1934713408
        %v1220 = vunpack.c.0.s8 %v1219
        %v1221 = vlaneseq
        %v1222 = vshrl.u32 %v1221, 7
        %v1223 = vsub.s32 %v1220, %v1222
        %v1224 = vrot.slane %v1210, %v1223
        %v1225 = vcombine.low %v1192, %v1208
        %v1226 = vcombine.high %v1192, %v1208
        %v1228 = vunpack.c.l.s4 1934713408
        %v1229 = vunpack.c.0.s8 %v1228
        %v1230 = vlaneseq
        %v1231 = vshrl.u32 %v1230, 7
        %v1232 = vsub.s32 %v1229, %v1231
        %v1233 = vrot.slane %v1225, %v1232
        %v1235 = vunpack.c.l.s4 1934713408
        %v1236 = vunpack.c.0.s8 %v1235
        %v1237 = vlaneseq
        %v1238 = vshrl.u32 %v1237, 7
        %v1239 = vsub.s32 %v1236, %v1238
        %v1240 = vrot.slane %v1226, %v1239
        %v1241 = vcombine.high %v1217, 0
        %v1242 = vcombine.high %v1224, 0
        %v1243 = vcombine.high %v1233, 0
        %v1244 = vcombine.high %v1240, 0
        %v1245 = vcombine.low %v1151, %v1167
        %v1246 = vcombine.high %v1151, %v1167
        %v1248 = vunpack.c.l.s4 1983009808
        %v1249 = vunpack.c.0.s8 %v1248
        %v1250 = vlaneseq
        %v1251 = vshrl.u32 %v1250, 7
        %v1252 = vsub.s32 %v1249, %v1251
        %v1253 = vrot.slane %v1245, %v1252
        %v1255 = vunpack.c.l.s4 1983009808
        %v1256 = vunpack.c.0.s8 %v1255
        %v1257 = vlaneseq
        %v1258 = vshrl.u32 %v1257, 7
        %v1259 = vsub.s32 %v1256, %v1258
        %v1260 = vrot.slane %v1246, %v1259
        %v1261 = vcombine.low %v1159, %v1175
        %v1262 = vcombine.high %v1159, %v1175
        %v1264 = vunpack.c.l.s4 1983009808
        %v1265 = vunpack.c.0.s8 %v1264
        %v1266 = vlaneseq
        %v1267 = vshrl.u32 %v1266, 7
        %v1268 = vsub.s32 %v1265, %v1267
        %v1269 = vrot.slane %v1261, %v1268
        %v1271 = vunpack.c.l.s4 1983009808
        %v1272 = vunpack.c.0.s8 %v1271
        %v1273 = vlaneseq
        %v1274 = vshrl.u32 %v1273, 7
        %v1275 = vsub.s32 %v1272, %v1274
        %v1276 = vrot.slane %v1262, %v1275
        %v1277 = vcombine.low %v1253, %v1269
        %v1278 = vcombine.high %v1253, %v1269
        %v1280 = vunpack.c.l.s4 1934713408
        %v1281 = vunpack.c.0.s8 %v1280
        %v1282 = vlaneseq
        %v1283 = vshrl.u32 %v1282, 7
        %v1284 = vsub.s32 %v1281, %v1283
        %v1285 = vrot.slane %v1277, %v1284
        %v1287 = vunpack.c.l.s4 1934713408
        %v1288 = vunpack.c.0.s8 %v1287
        %v1289 = vlaneseq
        %v1290 = vshrl.u32 %v1289, 7
        %v1291 = vsub.s32 %v1288, %v1290
        %v1292 = vrot.slane %v1278, %v1291
        %v1293 = vcombine.low %v1260, %v1276
        %v1294 = vcombine.high %v1260, %v1276
        %v1296 = vunpack.c.l.s4 1934713408
        %v1297 = vunpack.c.0.s8 %v1296
        %v1298 = vlaneseq
        %v1299 = vshrl.u32 %v1298, 7
        %v1300 = vsub.s32 %v1297, %v1299
        %v1301 = vrot.slane %v1293, %v1300
        %v1303 = vunpack.c.l.s4 1934713408
        %v1304 = vunpack.c.0.s8 %v1303
        %v1305 = vlaneseq
        %v1306 = vshrl.u32 %v1305, 7
        %v1307 = vsub.s32 %v1304, %v1306
        %v1308 = vrot.slane %v1294, %v1307
        %v1309 = vcombine.high %v1285, 0
        %v1310 = vcombine.high %v1292, 0
        %v1311 = vcombine.high %v1301, 0
        %v1312 = vcombine.high %v1308, 0
        %v1313 = vcombine.low %v1217, %v1224
        %v1315 = vunpack.c.l.s4 1983009808
        %v1316 = vunpack.c.0.s8 %v1315
        %v1317 = vlaneseq
        %v1318 = vshrl.u32 %v1317, 7
        %v1319 = vsub.s32 %v1316, %v1318
        %v1320 = vrot.slane %v1313, %v1319
        %v1321 = vcombine.low %v1241, %v1242
        %v1323 = vunpack.c.l.s4 1983009808
        %v1324 = vunpack.c.0.s8 %v1323
        %v1325 = vlaneseq
        %v1326 = vshrl.u32 %v1325, 7
        %v1327 = vsub.s32 %v1324, %v1326
        %v1328 = vrot.slane %v1321, %v1327
        %v1329 = vcombine.low %v1320, %v1328
        %v1330 = vcombine.high %v1320, %v1328
        %v1332 = vunpack.c.l.s4 1934713408
        %v1333 = vunpack.c.0.s8 %v1332
        %v1334 = vlaneseq
        %v1335 = vshrl.u32 %v1334, 7
        %v1336 = vsub.s32 %v1333, %v1335
        %v1337 = vrot.slane %v1329, %v1336
        %v1339 = vunpack.c.l.s4 1934713408
        %v1340 = vunpack.c.0.s8 %v1339
        %v1341 = vlaneseq
        %v1342 = vshrl.u32 %v1341, 7
        %v1343 = vsub.s32 %v1340, %v1342
        %v1344 = vrot.slane %v1330, %v1343
        %v1345 = vcombine.high %v1337, 0
        %v1346 = vcombine.high %v1344, 0
        %v1347 = vcombine.low %v1285, %v1292
        %v1349 = vunpack.c.l.s4 1983009808
        %v1350 = vunpack.c.0.s8 %v1349
        %v1351 = vlaneseq
        %v1352 = vshrl.u32 %v1351, 7
        %v1353 = vsub.s32 %v1350, %v1352
        %v1354 = vrot.slane %v1347, %v1353
        %v1355 = vcombine.low %v1309, %v1310
        %v1357 = vunpack.c.l.s4 1983009808
        %v1358 = vunpack.c.0.s8 %v1357
        %v1359 = vlaneseq
        %v1360 = vshrl.u32 %v1359, 7
        %v1361 = vsub.s32 %v1358, %v1360
        %v1362 = vrot.slane %v1355, %v1361
        %v1363 = vcombine.low %v1354, %v1362
        %v1364 = vcombine.high %v1354, %v1362
        %v1366 = vunpack.c.l.s4 1934713408
        %v1367 = vunpack.c.0.s8 %v1366
        %v1368 = vlaneseq
        %v1369 = vshrl.u32 %v1368, 7
        %v1370 = vsub.s32 %v1367, %v1369
        %v1371 = vrot.slane %v1363, %v1370
        %v1373 = vunpack.c.l.s4 1934713408
        %v1374 = vunpack.c.0.s8 %v1373
        %v1375 = vlaneseq
        %v1376 = vshrl.u32 %v1375, 7
        %v1377 = vsub.s32 %v1374, %v1376
        %v1378 = vrot.slane %v1364, %v1377
        %v1379 = vcombine.high %v1371, 0
        %v1380 = vcombine.high %v1378, 0
        %v1381 = vcombine.low %v1233, %v1240
        %v1383 = vunpack.c.l.s4 1983009808
        %v1384 = vunpack.c.0.s8 %v1383
        %v1385 = vlaneseq
        %v1386 = vshrl.u32 %v1385, 7
        %v1387 = vsub.s32 %v1384, %v1386
        %v1388 = vrot.slane %v1381, %v1387
        %v1389 = vcombine.low %v1243, %v1244
        %v1391 = vunpack.c.l.s4 1983009808
        %v1392 = vunpack.c.0.s8 %v1391
        %v1393 = vlaneseq
        %v1394 = vshrl.u32 %v1393, 7
        %v1395 = vsub.s32 %v1392, %v1394
        %v1396 = vrot.slane %v1389, %v1395
        %v1397 = vcombine.low %v1388, %v1396
        %v1398 = vcombine.high %v1388, %v1396
        %v1400 = vunpack.c.l.s4 1934713408
        %v1401 = vunpack.c.0.s8 %v1400
        %v1402 = vlaneseq
        %v1403 = vshrl.u32 %v1402, 7
        %v1404 = vsub.s32 %v1401, %v1403
        %v1405 = vrot.slane %v1397, %v1404
        %v1407 = vunpack.c.l.s4 1934713408
        %v1408 = vunpack.c.0.s8 %v1407
        %v1409 = vlaneseq
        %v1410 = vshrl.u32 %v1409, 7
        %v1411 = vsub.s32 %v1408, %v1410
        %v1412 = vrot.slane %v1398, %v1411
        %v1413 = vcombine.high %v1405, 0
        %v1414 = vcombine.high %v1412, 0
        %v1415 = vcombine.low %v1301, %v1308
        %v1417 = vunpack.c.l.s4 1983009808
        %v1418 = vunpack.c.0.s8 %v1417
        %v1419 = vlaneseq
        %v1420 = vshrl.u32 %v1419, 7
        %v1421 = vsub.s32 %v1418, %v1420
        %v1422 = vrot.slane %v1415, %v1421
        %v1423 = vcombine.low %v1311, %v1312
        %v1425 = vunpack.c.l.s4 1983009808
        %v1426 = vunpack.c.0.s8 %v1425
        %v1427 = vlaneseq
        %v1428 = vshrl.u32 %v1427, 7
        %v1429 = vsub.s32 %v1426, %v1428
        %v1430 = vrot.slane %v1423, %v1429
        %v1431 = vcombine.low %v1422, %v1430
        %v1432 = vcombine.high %v1422, %v1430
        %v1434 = vunpack.c.l.s4 1934713408
        %v1435 = vunpack.c.0.s8 %v1434
        %v1436 = vlaneseq
        %v1437 = vshrl.u32 %v1436, 7
        %v1438 = vsub.s32 %v1435, %v1437
        %v1439 = vrot.slane %v1431, %v1438
        %v1441 = vunpack.c.l.s4 1934713408
        %v1442 = vunpack.c.0.s8 %v1441
        %v1443 = vlaneseq
        %v1444 = vshrl.u32 %v1443, 7
        %v1445 = vsub.s32 %v1442, %v1444
        %v1446 = vrot.slane %v1432, %v1445
        %v1447 = vcombine.high %v1439, 0
        %v1448 = vcombine.high %v1446, 0
        %v1451 = vpack.i.b16 %v1371, %v1337
        %v1452 = vshrl.u32 %v1337, 16
        %v1453 = vshrl.u32 %v1371, 16
        %v1454 = vpack.i.b16 %v1453, %v1452
        %v1457 = vpack.i.b16 %v1379, %v1345
        %v1458 = vshrl.u32 %v1345, 16
        %v1459 = vshrl.u32 %v1379, 16
        %v1460 = vpack.i.b16 %v1459, %v1458
        %v1463 = vpack.i.b16 %v1378, %v1344
        %v1464 = vshrl.u32 %v1344, 16
        %v1465 = vshrl.u32 %v1378, 16
        %v1466 = vpack.i.b16 %v1465, %v1464
        %v1469 = vpack.i.b16 %v1380, %v1346
        %v1470 = vshrl.u32 %v1346, 16
        %v1471 = vshrl.u32 %v1380, 16
        %v1472 = vpack.i.b16 %v1471, %v1470
        %v1475 = vpack.i.b16 %v1439, %v1405
        %v1476 = vshrl.u32 %v1405, 16
        %v1477 = vshrl.u32 %v1439, 16
        %v1478 = vpack.i.b16 %v1477, %v1476
        %v1481 = vpack.i.b16 %v1447, %v1413
        %v1482 = vshrl.u32 %v1413, 16
        %v1483 = vshrl.u32 %v1447, 16
        %v1484 = vpack.i.b16 %v1483, %v1482
        %v1487 = vpack.i.b16 %v1446, %v1412
        %v1488 = vshrl.u32 %v1412, 16
        %v1489 = vshrl.u32 %v1446, 16
        %v1490 = vpack.i.b16 %v1489, %v1488
        %v1493 = vpack.i.b16 %v1448, %v1414
        %v1494 = vshrl.u32 %v1414, 16
        %v1495 = vshrl.u32 %v1448, 16
        %v1496 = vpack.i.b16 %v1495, %v1494
        %1498 = vrot.lane.b32.xlu0 %v762, 112
        %v1499 = vpop.permute.xlu0 %1498
        %1500 = vrot.lane.b32.xlu0 %v762, 96
        %v1501 = vpop.permute.xlu0 %1500
        %1502 = vrot.lane.b32.xlu0 %v762, 80
        %v1503 = vpop.permute.xlu0 %1502
        %1504 = vrot.lane.b32.xlu0 %v762, 64
        %v1505 = vpop.permute.xlu0 %1504
        %1506 = vrot.lane.b32.xlu0 %v762, 48
        %v1507 = vpop.permute.xlu0 %1506
        %1508 = vrot.lane.b32.xlu0 %v762, 32
        %v1509 = vpop.permute.xlu0 %1508
        %1510 = vrot.lane.b32.xlu0 %v762, 16
        %v1511 = vpop.permute.xlu0 %1510
        %v1514 = vpack.i.b16 %v1499, %v762
        %v1516 = vshrl.u32 %v762, 16
        %v1517 = vshrl.u32 %v1499, 16
        %v1518 = vpack.i.b16 %v1517, %v1516
        %v1522 = vpack.i.b16 %v1503, %v1501
        %v1524 = vshrl.u32 %v1501, 16
        %v1525 = vshrl.u32 %v1503, 16
        %v1526 = vpack.i.b16 %v1525, %v1524
        %v1530 = vpack.i.b16 %v1507, %v1505
        %v1532 = vshrl.u32 %v1505, 16
        %v1533 = vshrl.u32 %v1507, 16
        %v1534 = vpack.i.b16 %v1533, %v1532
        %v1538 = vpack.i.b16 %v1511, %v1509
        %v1540 = vshrl.u32 %v1509, 16
        %v1541 = vshrl.u32 %v1511, 16
        %v1542 = vpack.i.b16 %v1541, %v1540
        %v1544 = vcombine.low %v1514, %v1530
        %v1545 = vcombine.high %v1514, %v1530
        %v1547 = vunpack.c.l.s4 1983009808
        %v1548 = vunpack.c.0.s8 %v1547
        %v1549 = vlaneseq
        %v1550 = vshrl.u32 %v1549, 7
        %v1551 = vsub.s32 %v1548, %v1550
        %v1552 = vrot.slane %v1544, %v1551
        %v1554 = vunpack.c.l.s4 1983009808
        %v1555 = vunpack.c.0.s8 %v1554
        %v1556 = vlaneseq
        %v1557 = vshrl.u32 %v1556, 7
        %v1558 = vsub.s32 %v1555, %v1557
        %v1559 = vrot.slane %v1545, %v1558
        %v1560 = vcombine.low %v1522, %v1538
        %v1561 = vcombine.high %v1522, %v1538
        %v1563 = vunpack.c.l.s4 1983009808
        %v1564 = vunpack.c.0.s8 %v1563
        %v1565 = vlaneseq
        %v1566 = vshrl.u32 %v1565, 7
        %v1567 = vsub.s32 %v1564, %v1566
        %v1568 = vrot.slane %v1560, %v1567
        %v1570 = vunpack.c.l.s4 1983009808
        %v1571 = vunpack.c.0.s8 %v1570
        %v1572 = vlaneseq
        %v1573 = vshrl.u32 %v1572, 7
        %v1574 = vsub.s32 %v1571, %v1573
        %v1575 = vrot.slane %v1561, %v1574
        %v1576 = vcombine.low %v1552, %v1568
        %v1577 = vcombine.high %v1552, %v1568
        %v1579 = vunpack.c.l.s4 1934713408
        %v1580 = vunpack.c.0.s8 %v1579
        %v1581 = vlaneseq
        %v1582 = vshrl.u32 %v1581, 7
        %v1583 = vsub.s32 %v1580, %v1582
        %v1584 = vrot.slane %v1576, %v1583
        %v1586 = vunpack.c.l.s4 1934713408
        %v1587 = vunpack.c.0.s8 %v1586
        %v1588 = vlaneseq
        %v1589 = vshrl.u32 %v1588, 7
        %v1590 = vsub.s32 %v1587, %v1589
        %v1591 = vrot.slane %v1577, %v1590
        %v1592 = vcombine.low %v1559, %v1575
        %v1593 = vcombine.high %v1559, %v1575
        %v1595 = vunpack.c.l.s4 1934713408
        %v1596 = vunpack.c.0.s8 %v1595
        %v1597 = vlaneseq
        %v1598 = vshrl.u32 %v1597, 7
        %v1599 = vsub.s32 %v1596, %v1598
        %v1600 = vrot.slane %v1592, %v1599
        %v1602 = vunpack.c.l.s4 1934713408
        %v1603 = vunpack.c.0.s8 %v1602
        %v1604 = vlaneseq
        %v1605 = vshrl.u32 %v1604, 7
        %v1606 = vsub.s32 %v1603, %v1605
        %v1607 = vrot.slane %v1593, %v1606
        %v1608 = vcombine.high %v1584, 0
        %v1609 = vcombine.high %v1591, 0
        %v1610 = vcombine.high %v1600, 0
        %v1611 = vcombine.high %v1607, 0
        %v1612 = vcombine.low %v1518, %v1534
        %v1613 = vcombine.high %v1518, %v1534
        %v1615 = vunpack.c.l.s4 1983009808
        %v1616 = vunpack.c.0.s8 %v1615
        %v1617 = vlaneseq
        %v1618 = vshrl.u32 %v1617, 7
        %v1619 = vsub.s32 %v1616, %v1618
        %v1620 = vrot.slane %v1612, %v1619
        %v1622 = vunpack.c.l.s4 1983009808
        %v1623 = vunpack.c.0.s8 %v1622
        %v1624 = vlaneseq
        %v1625 = vshrl.u32 %v1624, 7
        %v1626 = vsub.s32 %v1623, %v1625
        %v1627 = vrot.slane %v1613, %v1626
        %v1628 = vcombine.low %v1526, %v1542
        %v1629 = vcombine.high %v1526, %v1542
        %v1631 = vunpack.c.l.s4 1983009808
        %v1632 = vunpack.c.0.s8 %v1631
        %v1633 = vlaneseq
        %v1634 = vshrl.u32 %v1633, 7
        %v1635 = vsub.s32 %v1632, %v1634
        %v1636 = vrot.slane %v1628, %v1635
        %v1638 = vunpack.c.l.s4 1983009808
        %v1639 = vunpack.c.0.s8 %v1638
        %v1640 = vlaneseq
        %v1641 = vshrl.u32 %v1640, 7
        %v1642 = vsub.s32 %v1639, %v1641
        %v1643 = vrot.slane %v1629, %v1642
        %v1644 = vcombine.low %v1620, %v1636
        %v1645 = vcombine.high %v1620, %v1636
        %v1647 = vunpack.c.l.s4 1934713408
        %v1648 = vunpack.c.0.s8 %v1647
        %v1649 = vlaneseq
        %v1650 = vshrl.u32 %v1649, 7
        %v1651 = vsub.s32 %v1648, %v1650
        %v1652 = vrot.slane %v1644, %v1651
        %v1654 = vunpack.c.l.s4 1934713408
        %v1655 = vunpack.c.0.s8 %v1654
        %v1656 = vlaneseq
        %v1657 = vshrl.u32 %v1656, 7
        %v1658 = vsub.s32 %v1655, %v1657
        %v1659 = vrot.slane %v1645, %v1658
        %v1660 = vcombine.low %v1627, %v1643
        %v1661 = vcombine.high %v1627, %v1643
        %v1663 = vunpack.c.l.s4 1934713408
        %v1664 = vunpack.c.0.s8 %v1663
        %v1665 = vlaneseq
        %v1666 = vshrl.u32 %v1665, 7
        %v1667 = vsub.s32 %v1664, %v1666
        %v1668 = vrot.slane %v1660, %v1667
        %v1670 = vunpack.c.l.s4 1934713408
        %v1671 = vunpack.c.0.s8 %v1670
        %v1672 = vlaneseq
        %v1673 = vshrl.u32 %v1672, 7
        %v1674 = vsub.s32 %v1671, %v1673
        %v1675 = vrot.slane %v1661, %v1674
        %v1676 = vcombine.high %v1652, 0
        %v1677 = vcombine.high %v1659, 0
        %v1678 = vcombine.high %v1668, 0
        %v1679 = vcombine.high %v1675, 0
        %v1680 = vcombine.low %v1584, %v1591
        %v1682 = vunpack.c.l.s4 1983009808
        %v1683 = vunpack.c.0.s8 %v1682
        %v1684 = vlaneseq
        %v1685 = vshrl.u32 %v1684, 7
        %v1686 = vsub.s32 %v1683, %v1685
        %v1687 = vrot.slane %v1680, %v1686
        %v1688 = vcombine.low %v1608, %v1609
        %v1690 = vunpack.c.l.s4 1983009808
        %v1691 = vunpack.c.0.s8 %v1690
        %v1692 = vlaneseq
        %v1693 = vshrl.u32 %v1692, 7
        %v1694 = vsub.s32 %v1691, %v1693
        %v1695 = vrot.slane %v1688, %v1694
        %v1696 = vcombine.low %v1687, %v1695
        %v1697 = vcombine.high %v1687, %v1695
        %v1699 = vunpack.c.l.s4 1934713408
        %v1700 = vunpack.c.0.s8 %v1699
        %v1701 = vlaneseq
        %v1702 = vshrl.u32 %v1701, 7
        %v1703 = vsub.s32 %v1700, %v1702
        %v1704 = vrot.slane %v1696, %v1703
        %v1706 = vunpack.c.l.s4 1934713408
        %v1707 = vunpack.c.0.s8 %v1706
        %v1708 = vlaneseq
        %v1709 = vshrl.u32 %v1708, 7
        %v1710 = vsub.s32 %v1707, %v1709
        %v1711 = vrot.slane %v1697, %v1710
        %v1712 = vcombine.high %v1704, 0
        %v1713 = vcombine.high %v1711, 0
        %v1714 = vcombine.low %v1652, %v1659
        %v1716 = vunpack.c.l.s4 1983009808
        %v1717 = vunpack.c.0.s8 %v1716
        %v1718 = vlaneseq
        %v1719 = vshrl.u32 %v1718, 7
        %v1720 = vsub.s32 %v1717, %v1719
        %v1721 = vrot.slane %v1714, %v1720
        %v1722 = vcombine.low %v1676, %v1677
        %v1724 = vunpack.c.l.s4 1983009808
        %v1725 = vunpack.c.0.s8 %v1724
        %v1726 = vlaneseq
        %v1727 = vshrl.u32 %v1726, 7
        %v1728 = vsub.s32 %v1725, %v1727
        %v1729 = vrot.slane %v1722, %v1728
        %v1730 = vcombine.low %v1721, %v1729
        %v1731 = vcombine.high %v1721, %v1729
        %v1733 = vunpack.c.l.s4 1934713408
        %v1734 = vunpack.c.0.s8 %v1733
        %v1735 = vlaneseq
        %v1736 = vshrl.u32 %v1735, 7
        %v1737 = vsub.s32 %v1734, %v1736
        %v1738 = vrot.slane %v1730, %v1737
        %v1740 = vunpack.c.l.s4 1934713408
        %v1741 = vunpack.c.0.s8 %v1740
        %v1742 = vlaneseq
        %v1743 = vshrl.u32 %v1742, 7
        %v1744 = vsub.s32 %v1741, %v1743
        %v1745 = vrot.slane %v1731, %v1744
        %v1746 = vcombine.high %v1738, 0
        %v1747 = vcombine.high %v1745, 0
        %v1748 = vcombine.low %v1600, %v1607
        %v1750 = vunpack.c.l.s4 1983009808
        %v1751 = vunpack.c.0.s8 %v1750
        %v1752 = vlaneseq
        %v1753 = vshrl.u32 %v1752, 7
        %v1754 = vsub.s32 %v1751, %v1753
        %v1755 = vrot.slane %v1748, %v1754
        %v1756 = vcombine.low %v1610, %v1611
        %v1758 = vunpack.c.l.s4 1983009808
        %v1759 = vunpack.c.0.s8 %v1758
        %v1760 = vlaneseq
        %v1761 = vshrl.u32 %v1760, 7
        %v1762 = vsub.s32 %v1759, %v1761
        %v1763 = vrot.slane %v1756, %v1762
        %v1764 = vcombine.low %v1755, %v1763
        %v1765 = vcombine.high %v1755, %v1763
        %v1767 = vunpack.c.l.s4 1934713408
        %v1768 = vunpack.c.0.s8 %v1767
        %v1769 = vlaneseq
        %v1770 = vshrl.u32 %v1769, 7
        %v1771 = vsub.s32 %v1768, %v1770
        %v1772 = vrot.slane %v1764, %v1771
        %v1774 = vunpack.c.l.s4 1934713408
        %v1775 = vunpack.c.0.s8 %v1774
        %v1776 = vlaneseq
        %v1777 = vshrl.u32 %v1776, 7
        %v1778 = vsub.s32 %v1775, %v1777
        %v1779 = vrot.slane %v1765, %v1778
        %v1780 = vcombine.high %v1772, 0
        %v1781 = vcombine.high %v1779, 0
        %v1782 = vcombine.low %v1668, %v1675
        %v1784 = vunpack.c.l.s4 1983009808
        %v1785 = vunpack.c.0.s8 %v1784
        %v1786 = vlaneseq
        %v1787 = vshrl.u32 %v1786, 7
        %v1788 = vsub.s32 %v1785, %v1787
        %v1789 = vrot.slane %v1782, %v1788
        %v1790 = vcombine.low %v1678, %v1679
        %v1792 = vunpack.c.l.s4 1983009808
        %v1793 = vunpack.c.0.s8 %v1792
        %v1794 = vlaneseq
        %v1795 = vshrl.u32 %v1794, 7
        %v1796 = vsub.s32 %v1793, %v1795
        %v1797 = vrot.slane %v1790, %v1796
        %v1798 = vcombine.low %v1789, %v1797
        %v1799 = vcombine.high %v1789, %v1797
        %v1801 = vunpack.c.l.s4 1934713408
        %v1802 = vunpack.c.0.s8 %v1801
        %v1803 = vlaneseq
        %v1804 = vshrl.u32 %v1803, 7
        %v1805 = vsub.s32 %v1802, %v1804
        %v1806 = vrot.slane %v1798, %v1805
        %v1808 = vunpack.c.l.s4 1934713408
        %v1809 = vunpack.c.0.s8 %v1808
        %v1810 = vlaneseq
        %v1811 = vshrl.u32 %v1810, 7
        %v1812 = vsub.s32 %v1809, %v1811
        %v1813 = vrot.slane %v1799, %v1812
        %v1814 = vcombine.high %v1806, 0
        %v1815 = vcombine.high %v1813, 0
        %v1818 = vpack.i.b16 %v1738, %v1704
        %v1819 = vshrl.u32 %v1704, 16
        %v1820 = vshrl.u32 %v1738, 16
        %v1821 = vpack.i.b16 %v1820, %v1819
        %v1824 = vpack.i.b16 %v1746, %v1712
        %v1825 = vshrl.u32 %v1712, 16
        %v1826 = vshrl.u32 %v1746, 16
        %v1827 = vpack.i.b16 %v1826, %v1825
        %v1830 = vpack.i.b16 %v1745, %v1711
        %v1831 = vshrl.u32 %v1711, 16
        %v1832 = vshrl.u32 %v1745, 16
        %v1833 = vpack.i.b16 %v1832, %v1831
        %v1836 = vpack.i.b16 %v1747, %v1713
        %v1837 = vshrl.u32 %v1713, 16
        %v1838 = vshrl.u32 %v1747, 16
        %v1839 = vpack.i.b16 %v1838, %v1837
        %v1842 = vpack.i.b16 %v1806, %v1772
        %v1843 = vshrl.u32 %v1772, 16
        %v1844 = vshrl.u32 %v1806, 16
        %v1845 = vpack.i.b16 %v1844, %v1843
        %v1848 = vpack.i.b16 %v1814, %v1780
        %v1849 = vshrl.u32 %v1780, 16
        %v1850 = vshrl.u32 %v1814, 16
        %v1851 = vpack.i.b16 %v1850, %v1849
        %v1854 = vpack.i.b16 %v1813, %v1779
        %v1855 = vshrl.u32 %v1779, 16
        %v1856 = vshrl.u32 %v1813, 16
        %v1857 = vpack.i.b16 %v1856, %v1855
        %v1860 = vpack.i.b16 %v1815, %v1781
        %v1861 = vshrl.u32 %v1781, 16
        %v1862 = vshrl.u32 %v1815, 16
        %v1863 = vpack.i.b16 %v1862, %v1861
        %vm1864 = vcmask 130048
        %v1866 = vsel %vm1864, %v1084, 0
        %v1869 = vsel %vm1864, %v1451, 0
        %1871 = vmatprep.subr.bf16.mxu0 0
        %1872 = vmatpush1.bf16.xpose.msra.mxu0 %v1869
        %1873 = vmatprep.subr.bf16.mxu0 0
        %1874 = vmatpush1.bf16.xpose.msra.mxu0 0
        %1875 = vmatprep.subr.bf16.mxu0 0
        %1876 = vmatpush1.bf16.xpose.msra.mxu0 0
        %1877 = vmatprep.subr.bf16.mxu0 0
        %1878 = vmatpush1.bf16.xpose.msra.mxu0 0
        %1879 = vmatprep.subr.bf16.mxu0 0
        %1880 = vmatpush1.bf16.xpose.msra.mxu0 0
        %1881 = vmatprep.subr.bf16.mxu0 0
        %1882 = vmatpush1.bf16.xpose.msra.mxu0 0
        %1883 = vmatprep.subr.bf16.mxu0 0
        %1884 = vmatpush1.bf16.xpose.msra.mxu0 0
        %1885 = vmatprep.subr.bf16.mxu0 0
        %1886 = vmatpush1.bf16.xpose.msra.mxu0 0
        %1887 = vmatprep.subr.bf16.mxu0 0
        %1888 = vmatpush1.bf16.xpose.msra.mxu0 0
        %1889 = vmatprep.subr.bf16.mxu0 0
        %1890 = vmatpush1.bf16.xpose.msra.mxu0 0
        %1891 = vmatprep.subr.bf16.mxu0 0
        %1892 = vmatpush1.bf16.xpose.msra.mxu0 0
        %1893 = vmatprep.subr.bf16.mxu0 0
        %1894 = vmatpush1.bf16.xpose.msra.mxu0 0
        %1895 = vmatprep.subr.bf16.mxu0 0
        %1896 = vmatpush1.bf16.xpose.msra.mxu0 0
        %1897 = vmatprep.subr.bf16.mxu0 0
        %1898 = vmatpush1.bf16.xpose.msra.mxu0 0
        %1899 = vmatprep.subr.bf16.mxu0 0
        %1900 = vmatpush1.bf16.xpose.msra.mxu0 0
        %1901 = vmatprep.subr.bf16.mxu0 0
        %1902 = vmatpush1.bf16.xpose.msra.mxu0 0
        %1903 = vmatprep.mubr.bf16.mxu0 0
        %1904 = vmatmul.mubr.bf16.gmra.mrb[0].mxu0 %v1866
        %v1905 = vpop.f32.mrb[0].mxu0
        %v1906 = vadd.f32 0.0, %v1905
        %v1907 = vpop.f32.mrb[0].mxu0
        %v1908 = vpop.f32.mrb[0].mxu0
        %v1909 = vpop.f32.mrb[0].mxu0
        %1910 = vdwg.mxu0
        %v1912 = vsel %vm1864, %v1087, 0
        %v1915 = vsel %vm1864, %v1454, 0
        %1917 = vmatprep.subr.bf16.mxu0 0
        %1918 = vmatpush1.bf16.xpose.msra.mxu0 %v1915
        %1919 = vmatprep.subr.bf16.mxu0 0
        %1920 = vmatpush1.bf16.xpose.msra.mxu0 0
        %1921 = vmatprep.subr.bf16.mxu0 0
        %1922 = vmatpush1.bf16.xpose.msra.mxu0 0
        %1923 = vmatprep.subr.bf16.mxu0 0
        %1924 = vmatpush1.bf16.xpose.msra.mxu0 0
        %1925 = vmatprep.subr.bf16.mxu0 0
        %1926 = vmatpush1.bf16.xpose.msra.mxu0 0
        %1927 = vmatprep.subr.bf16.mxu0 0
        %1928 = vmatpush1.bf16.xpose.msra.mxu0 0
        %1929 = vmatprep.subr.bf16.mxu0 0
        %1930 = vmatpush1.bf16.xpose.msra.mxu0 0
        %1931 = vmatprep.subr.bf16.mxu0 0
        %1932 = vmatpush1.bf16.xpose.msra.mxu0 0
        %1933 = vmatprep.subr.bf16.mxu0 0
        %1934 = vmatpush1.bf16.xpose.msra.mxu0 0
        %1935 = vmatprep.subr.bf16.mxu0 0
        %1936 = vmatpush1.bf16.xpose.msra.mxu0 0
        %1937 = vmatprep.subr.bf16.mxu0 0
        %1938 = vmatpush1.bf16.xpose.msra.mxu0 0
        %1939 = vmatprep.subr.bf16.mxu0 0
        %1940 = vmatpush1.bf16.xpose.msra.mxu0 0
        %1941 = vmatprep.subr.bf16.mxu0 0
        %1942 = vmatpush1.bf16.xpose.msra.mxu0 0
        %1943 = vmatprep.subr.bf16.mxu0 0
        %1944 = vmatpush1.bf16.xpose.msra.mxu0 0
        %1945 = vmatprep.subr.bf16.mxu0 0
        %1946 = vmatpush1.bf16.xpose.msra.mxu0 0
        %1947 = vmatprep.subr.bf16.mxu0 0
        %1948 = vmatpush1.bf16.xpose.msra.mxu0 0
        %1949 = vmatprep.mubr.bf16.mxu0 0
        %1950 = vmatmul.mubr.bf16.gmra.mrb[0].mxu0 %v1912
        %v1951 = vpop.f32.mrb[0].mxu0
        %v1952 = vadd.f32 0.0, %v1951
        %v1953 = vpop.f32.mrb[0].mxu0
        %v1954 = vpop.f32.mrb[0].mxu0
        %v1955 = vpop.f32.mrb[0].mxu0
        %1956 = vdwg.mxu0
        %v1958 = vsel %vm1864, %v1090, 0
        %v1961 = vsel %vm1864, %v1457, 0
        %1963 = vmatprep.subr.bf16.mxu0 0
        %1964 = vmatpush1.bf16.xpose.msra.mxu0 %v1961
        %1965 = vmatprep.subr.bf16.mxu0 0
        %1966 = vmatpush1.bf16.xpose.msra.mxu0 0
        %1967 = vmatprep.subr.bf16.mxu0 0
        %1968 = vmatpush1.bf16.xpose.msra.mxu0 0
        %1969 = vmatprep.subr.bf16.mxu0 0
        %1970 = vmatpush1.bf16.xpose.msra.mxu0 0
        %1971 = vmatprep.subr.bf16.mxu0 0
        %1972 = vmatpush1.bf16.xpose.msra.mxu0 0
        %1973 = vmatprep.subr.bf16.mxu0 0
        %1974 = vmatpush1.bf16.xpose.msra.mxu0 0
        %1975 = vmatprep.subr.bf16.mxu0 0
        %1976 = vmatpush1.bf16.xpose.msra.mxu0 0
        %1977 = vmatprep.subr.bf16.mxu0 0
        %1978 = vmatpush1.bf16.xpose.msra.mxu0 0
        %1979 = vmatprep.subr.bf16.mxu0 0
        %1980 = vmatpush1.bf16.xpose.msra.mxu0 0
        %1981 = vmatprep.subr.bf16.mxu0 0
        %1982 = vmatpush1.bf16.xpose.msra.mxu0 0
        %1983 = vmatprep.subr.bf16.mxu0 0
        %1984 = vmatpush1.bf16.xpose.msra.mxu0 0
        %1985 = vmatprep.subr.bf16.mxu0 0
        %1986 = vmatpush1.bf16.xpose.msra.mxu0 0
        %1987 = vmatprep.subr.bf16.mxu0 0
        %1988 = vmatpush1.bf16.xpose.msra.mxu0 0
        %1989 = vmatprep.subr.bf16.mxu0 0
        %1990 = vmatpush1.bf16.xpose.msra.mxu0 0
        %1991 = vmatprep.subr.bf16.mxu0 0
        %1992 = vmatpush1.bf16.xpose.msra.mxu0 0
        %1993 = vmatprep.subr.bf16.mxu0 0
        %1994 = vmatpush1.bf16.xpose.msra.mxu0 0
        %1995 = vmatprep.mubr.bf16.mxu0 0
        %1996 = vmatmul.mubr.bf16.gmra.mrb[0].mxu0 %v1958
        %v1997 = vpop.f32.mrb[0].mxu0
        %v1998 = vadd.f32 0.0, %v1997
        %v1999 = vpop.f32.mrb[0].mxu0
        %v2000 = vpop.f32.mrb[0].mxu0
        %v2001 = vpop.f32.mrb[0].mxu0
        %2002 = vdwg.mxu0
        %v2004 = vsel %vm1864, %v1093, 0
        %v2007 = vsel %vm1864, %v1460, 0
        %2009 = vmatprep.subr.bf16.mxu0 0
        %2010 = vmatpush1.bf16.xpose.msra.mxu0 %v2007
        %2011 = vmatprep.subr.bf16.mxu0 0
        %2012 = vmatpush1.bf16.xpose.msra.mxu0 0
        %2013 = vmatprep.subr.bf16.mxu0 0
        %2014 = vmatpush1.bf16.xpose.msra.mxu0 0
        %2015 = vmatprep.subr.bf16.mxu0 0
        %2016 = vmatpush1.bf16.xpose.msra.mxu0 0
        %2017 = vmatprep.subr.bf16.mxu0 0
        %2018 = vmatpush1.bf16.xpose.msra.mxu0 0
        %2019 = vmatprep.subr.bf16.mxu0 0
        %2020 = vmatpush1.bf16.xpose.msra.mxu0 0
        %2021 = vmatprep.subr.bf16.mxu0 0
        %2022 = vmatpush1.bf16.xpose.msra.mxu0 0
        %2023 = vmatprep.subr.bf16.mxu0 0
        %2024 = vmatpush1.bf16.xpose.msra.mxu0 0
        %2025 = vmatprep.subr.bf16.mxu0 0
        %2026 = vmatpush1.bf16.xpose.msra.mxu0 0
        %2027 = vmatprep.subr.bf16.mxu0 0
        %2028 = vmatpush1.bf16.xpose.msra.mxu0 0
        %2029 = vmatprep.subr.bf16.mxu0 0
        %2030 = vmatpush1.bf16.xpose.msra.mxu0 0
        %2031 = vmatprep.subr.bf16.mxu0 0
        %2032 = vmatpush1.bf16.xpose.msra.mxu0 0
        %2033 = vmatprep.subr.bf16.mxu0 0
        %2034 = vmatpush1.bf16.xpose.msra.mxu0 0
        %2035 = vmatprep.subr.bf16.mxu0 0
        %2036 = vmatpush1.bf16.xpose.msra.mxu0 0
        %2037 = vmatprep.subr.bf16.mxu0 0
        %2038 = vmatpush1.bf16.xpose.msra.mxu0 0
        %2039 = vmatprep.subr.bf16.mxu0 0
        %2040 = vmatpush1.bf16.xpose.msra.mxu0 0
        %2041 = vmatprep.mubr.bf16.mxu0 0
        %2042 = vmatmul.mubr.bf16.gmra.mrb[0].mxu0 %v2004
        %v2043 = vpop.f32.mrb[0].mxu0
        %v2044 = vadd.f32 0.0, %v2043
        %v2045 = vpop.f32.mrb[0].mxu0
        %v2046 = vpop.f32.mrb[0].mxu0
        %v2047 = vpop.f32.mrb[0].mxu0
        %2048 = vdwg.mxu0
        %v2050 = vsel %vm1864, %v1096, 0
        %v2053 = vsel %vm1864, %v1463, 0
        %2055 = vmatprep.subr.bf16.mxu0 0
        %2056 = vmatpush1.bf16.xpose.msra.mxu0 %v2053
        %2057 = vmatprep.subr.bf16.mxu0 0
        %2058 = vmatpush1.bf16.xpose.msra.mxu0 0
        %2059 = vmatprep.subr.bf16.mxu0 0
        %2060 = vmatpush1.bf16.xpose.msra.mxu0 0
        %2061 = vmatprep.subr.bf16.mxu0 0
        %2062 = vmatpush1.bf16.xpose.msra.mxu0 0
        %2063 = vmatprep.subr.bf16.mxu0 0
        %2064 = vmatpush1.bf16.xpose.msra.mxu0 0
        %2065 = vmatprep.subr.bf16.mxu0 0
        %2066 = vmatpush1.bf16.xpose.msra.mxu0 0
        %2067 = vmatprep.subr.bf16.mxu0 0
        %2068 = vmatpush1.bf16.xpose.msra.mxu0 0
        %2069 = vmatprep.subr.bf16.mxu0 0
        %2070 = vmatpush1.bf16.xpose.msra.mxu0 0
        %2071 = vmatprep.subr.bf16.mxu0 0
        %2072 = vmatpush1.bf16.xpose.msra.mxu0 0
        %2073 = vmatprep.subr.bf16.mxu0 0
        %2074 = vmatpush1.bf16.xpose.msra.mxu0 0
        %2075 = vmatprep.subr.bf16.mxu0 0
        %2076 = vmatpush1.bf16.xpose.msra.mxu0 0
        %2077 = vmatprep.subr.bf16.mxu0 0
        %2078 = vmatpush1.bf16.xpose.msra.mxu0 0
        %2079 = vmatprep.subr.bf16.mxu0 0
        %2080 = vmatpush1.bf16.xpose.msra.mxu0 0
        %2081 = vmatprep.subr.bf16.mxu0 0
        %2082 = vmatpush1.bf16.xpose.msra.mxu0 0
        %2083 = vmatprep.subr.bf16.mxu0 0
        %2084 = vmatpush1.bf16.xpose.msra.mxu0 0
        %2085 = vmatprep.subr.bf16.mxu0 0
        %2086 = vmatpush1.bf16.xpose.msra.mxu0 0
        %2087 = vmatprep.mubr.bf16.mxu0 0
        %2088 = vmatmul.mubr.bf16.gmra.mrb[0].mxu0 %v2050
        %v2089 = vpop.f32.mrb[0].mxu0
        %v2090 = vadd.f32 0.0, %v2089
        %v2091 = vpop.f32.mrb[0].mxu0
        %v2092 = vpop.f32.mrb[0].mxu0
        %v2093 = vpop.f32.mrb[0].mxu0
        %2094 = vdwg.mxu0
        %v2096 = vsel %vm1864, %v1099, 0
        %v2099 = vsel %vm1864, %v1466, 0
        %2101 = vmatprep.subr.bf16.mxu0 0
        %2102 = vmatpush1.bf16.xpose.msra.mxu0 %v2099
        %2103 = vmatprep.subr.bf16.mxu0 0
        %2104 = vmatpush1.bf16.xpose.msra.mxu0 0
        %2105 = vmatprep.subr.bf16.mxu0 0
        %2106 = vmatpush1.bf16.xpose.msra.mxu0 0
        %2107 = vmatprep.subr.bf16.mxu0 0
        %2108 = vmatpush1.bf16.xpose.msra.mxu0 0
        %2109 = vmatprep.subr.bf16.mxu0 0
        %2110 = vmatpush1.bf16.xpose.msra.mxu0 0
        %2111 = vmatprep.subr.bf16.mxu0 0
        %2112 = vmatpush1.bf16.xpose.msra.mxu0 0
        %2113 = vmatprep.subr.bf16.mxu0 0
        %2114 = vmatpush1.bf16.xpose.msra.mxu0 0
        %2115 = vmatprep.subr.bf16.mxu0 0
        %2116 = vmatpush1.bf16.xpose.msra.mxu0 0
        %2117 = vmatprep.subr.bf16.mxu0 0
        %2118 = vmatpush1.bf16.xpose.msra.mxu0 0
        %2119 = vmatprep.subr.bf16.mxu0 0
        %2120 = vmatpush1.bf16.xpose.msra.mxu0 0
        %2121 = vmatprep.subr.bf16.mxu0 0
        %2122 = vmatpush1.bf16.xpose.msra.mxu0 0
        %2123 = vmatprep.subr.bf16.mxu0 0
        %2124 = vmatpush1.bf16.xpose.msra.mxu0 0
        %2125 = vmatprep.subr.bf16.mxu0 0
        %2126 = vmatpush1.bf16.xpose.msra.mxu0 0
        %2127 = vmatprep.subr.bf16.mxu0 0
        %2128 = vmatpush1.bf16.xpose.msra.mxu0 0
        %2129 = vmatprep.subr.bf16.mxu0 0
        %2130 = vmatpush1.bf16.xpose.msra.mxu0 0
        %2131 = vmatprep.subr.bf16.mxu0 0
        %2132 = vmatpush1.bf16.xpose.msra.mxu0 0
        %2133 = vmatprep.mubr.bf16.mxu0 0
        %2134 = vmatmul.mubr.bf16.gmra.mrb[0].mxu0 %v2096
        %v2135 = vpop.f32.mrb[0].mxu0
        %v2136 = vadd.f32 0.0, %v2135
        %v2137 = vpop.f32.mrb[0].mxu0
        %v2138 = vpop.f32.mrb[0].mxu0
        %v2139 = vpop.f32.mrb[0].mxu0
        %2140 = vdwg.mxu0
        %v2142 = vsel %vm1864, %v1102, 0
        %v2145 = vsel %vm1864, %v1469, 0
        %2147 = vmatprep.subr.bf16.mxu0 0
        %2148 = vmatpush1.bf16.xpose.msra.mxu0 %v2145
        %2149 = vmatprep.subr.bf16.mxu0 0
        %2150 = vmatpush1.bf16.xpose.msra.mxu0 0
        %2151 = vmatprep.subr.bf16.mxu0 0
        %2152 = vmatpush1.bf16.xpose.msra.mxu0 0
        %2153 = vmatprep.subr.bf16.mxu0 0
        %2154 = vmatpush1.bf16.xpose.msra.mxu0 0
        %2155 = vmatprep.subr.bf16.mxu0 0
        %2156 = vmatpush1.bf16.xpose.msra.mxu0 0
        %2157 = vmatprep.subr.bf16.mxu0 0
        %2158 = vmatpush1.bf16.xpose.msra.mxu0 0
        %2159 = vmatprep.subr.bf16.mxu0 0
        %2160 = vmatpush1.bf16.xpose.msra.mxu0 0
        %2161 = vmatprep.subr.bf16.mxu0 0
        %2162 = vmatpush1.bf16.xpose.msra.mxu0 0
        %2163 = vmatprep.subr.bf16.mxu0 0
        %2164 = vmatpush1.bf16.xpose.msra.mxu0 0
        %2165 = vmatprep.subr.bf16.mxu0 0
        %2166 = vmatpush1.bf16.xpose.msra.mxu0 0
        %2167 = vmatprep.subr.bf16.mxu0 0
        %2168 = vmatpush1.bf16.xpose.msra.mxu0 0
        %2169 = vmatprep.subr.bf16.mxu0 0
        %2170 = vmatpush1.bf16.xpose.msra.mxu0 0
        %2171 = vmatprep.subr.bf16.mxu0 0
        %2172 = vmatpush1.bf16.xpose.msra.mxu0 0
        %2173 = vmatprep.subr.bf16.mxu0 0
        %2174 = vmatpush1.bf16.xpose.msra.mxu0 0
        %2175 = vmatprep.subr.bf16.mxu0 0
        %2176 = vmatpush1.bf16.xpose.msra.mxu0 0
        %2177 = vmatprep.subr.bf16.mxu0 0
        %2178 = vmatpush1.bf16.xpose.msra.mxu0 0
        %2179 = vmatprep.mubr.bf16.mxu0 0
        %2180 = vmatmul.mubr.bf16.gmra.mrb[0].mxu0 %v2142
        %v2181 = vpop.f32.mrb[0].mxu0
        %v2182 = vadd.f32 0.0, %v2181
        %v2183 = vpop.f32.mrb[0].mxu0
        %v2184 = vpop.f32.mrb[0].mxu0
        %v2185 = vpop.f32.mrb[0].mxu0
        %2186 = vdwg.mxu0
        %v2188 = vsel %vm1864, %v1105, 0
        %v2191 = vsel %vm1864, %v1472, 0
        %2193 = vmatprep.subr.bf16.mxu0 0
        %2194 = vmatpush1.bf16.xpose.msra.mxu0 %v2191
        %2195 = vmatprep.subr.bf16.mxu0 0
        %2196 = vmatpush1.bf16.xpose.msra.mxu0 0
        %2197 = vmatprep.subr.bf16.mxu0 0
        %2198 = vmatpush1.bf16.xpose.msra.mxu0 0
        %2199 = vmatprep.subr.bf16.mxu0 0
        %2200 = vmatpush1.bf16.xpose.msra.mxu0 0
        %2201 = vmatprep.subr.bf16.mxu0 0
        %2202 = vmatpush1.bf16.xpose.msra.mxu0 0
        %2203 = vmatprep.subr.bf16.mxu0 0
        %2204 = vmatpush1.bf16.xpose.msra.mxu0 0
        %2205 = vmatprep.subr.bf16.mxu0 0
        %2206 = vmatpush1.bf16.xpose.msra.mxu0 0
        %2207 = vmatprep.subr.bf16.mxu0 0
        %2208 = vmatpush1.bf16.xpose.msra.mxu0 0
        %2209 = vmatprep.subr.bf16.mxu0 0
        %2210 = vmatpush1.bf16.xpose.msra.mxu0 0
        %2211 = vmatprep.subr.bf16.mxu0 0
        %2212 = vmatpush1.bf16.xpose.msra.mxu0 0
        %2213 = vmatprep.subr.bf16.mxu0 0
        %2214 = vmatpush1.bf16.xpose.msra.mxu0 0
        %2215 = vmatprep.subr.bf16.mxu0 0
        %2216 = vmatpush1.bf16.xpose.msra.mxu0 0
        %2217 = vmatprep.subr.bf16.mxu0 0
        %2218 = vmatpush1.bf16.xpose.msra.mxu0 0
        %2219 = vmatprep.subr.bf16.mxu0 0
        %2220 = vmatpush1.bf16.xpose.msra.mxu0 0
        %2221 = vmatprep.subr.bf16.mxu0 0
        %2222 = vmatpush1.bf16.xpose.msra.mxu0 0
        %2223 = vmatprep.subr.bf16.mxu0 0
        %2224 = vmatpush1.bf16.xpose.msra.mxu0 0
        %2225 = vmatprep.mubr.bf16.mxu0 0
        %2226 = vmatmul.mubr.bf16.gmra.mrb[0].mxu0 %v2188
        %v2227 = vpop.f32.mrb[0].mxu0
        %v2228 = vadd.f32 0.0, %v2227
        %v2229 = vpop.f32.mrb[0].mxu0
        %v2230 = vpop.f32.mrb[0].mxu0
        %v2231 = vpop.f32.mrb[0].mxu0
        %2232 = vdwg.mxu0
        %v2234 = vsel %vm1864, %v1108, 0
        %v2237 = vsel %vm1864, %v1475, 0
        %2239 = vmatprep.subr.bf16.mxu0 0
        %2240 = vmatpush1.bf16.xpose.msra.mxu0 %v2237
        %2241 = vmatprep.subr.bf16.mxu0 0
        %2242 = vmatpush1.bf16.xpose.msra.mxu0 0
        %2243 = vmatprep.subr.bf16.mxu0 0
        %2244 = vmatpush1.bf16.xpose.msra.mxu0 0
        %2245 = vmatprep.subr.bf16.mxu0 0
        %2246 = vmatpush1.bf16.xpose.msra.mxu0 0
        %2247 = vmatprep.subr.bf16.mxu0 0
        %2248 = vmatpush1.bf16.xpose.msra.mxu0 0
        %2249 = vmatprep.subr.bf16.mxu0 0
        %2250 = vmatpush1.bf16.xpose.msra.mxu0 0
        %2251 = vmatprep.subr.bf16.mxu0 0
        %2252 = vmatpush1.bf16.xpose.msra.mxu0 0
        %2253 = vmatprep.subr.bf16.mxu0 0
        %2254 = vmatpush1.bf16.xpose.msra.mxu0 0
        %2255 = vmatprep.subr.bf16.mxu0 0
        %2256 = vmatpush1.bf16.xpose.msra.mxu0 0
        %2257 = vmatprep.subr.bf16.mxu0 0
        %2258 = vmatpush1.bf16.xpose.msra.mxu0 0
        %2259 = vmatprep.subr.bf16.mxu0 0
        %2260 = vmatpush1.bf16.xpose.msra.mxu0 0
        %2261 = vmatprep.subr.bf16.mxu0 0
        %2262 = vmatpush1.bf16.xpose.msra.mxu0 0
        %2263 = vmatprep.subr.bf16.mxu0 0
        %2264 = vmatpush1.bf16.xpose.msra.mxu0 0
        %2265 = vmatprep.subr.bf16.mxu0 0
        %2266 = vmatpush1.bf16.xpose.msra.mxu0 0
        %2267 = vmatprep.subr.bf16.mxu0 0
        %2268 = vmatpush1.bf16.xpose.msra.mxu0 0
        %2269 = vmatprep.subr.bf16.mxu0 0
        %2270 = vmatpush1.bf16.xpose.msra.mxu0 0
        %2271 = vmatprep.mubr.bf16.mxu0 0
        %2272 = vmatmul.mubr.bf16.gmra.mrb[0].mxu0 %v2234
        %v2273 = vpop.f32.mrb[0].mxu0
        %v2274 = vadd.f32 0.0, %v2273
        %v2275 = vpop.f32.mrb[0].mxu0
        %v2276 = vpop.f32.mrb[0].mxu0
        %v2277 = vpop.f32.mrb[0].mxu0
        %2278 = vdwg.mxu0
        %v2280 = vsel %vm1864, %v1111, 0
        %v2283 = vsel %vm1864, %v1478, 0
        %2285 = vmatprep.subr.bf16.mxu0 0
        %2286 = vmatpush1.bf16.xpose.msra.mxu0 %v2283
        %2287 = vmatprep.subr.bf16.mxu0 0
        %2288 = vmatpush1.bf16.xpose.msra.mxu0 0
        %2289 = vmatprep.subr.bf16.mxu0 0
        %2290 = vmatpush1.bf16.xpose.msra.mxu0 0
        %2291 = vmatprep.subr.bf16.mxu0 0
        %2292 = vmatpush1.bf16.xpose.msra.mxu0 0
        %2293 = vmatprep.subr.bf16.mxu0 0
        %2294 = vmatpush1.bf16.xpose.msra.mxu0 0
        %2295 = vmatprep.subr.bf16.mxu0 0
        %2296 = vmatpush1.bf16.xpose.msra.mxu0 0
        %2297 = vmatprep.subr.bf16.mxu0 0
        %2298 = vmatpush1.bf16.xpose.msra.mxu0 0
        %2299 = vmatprep.subr.bf16.mxu0 0
        %2300 = vmatpush1.bf16.xpose.msra.mxu0 0
        %2301 = vmatprep.subr.bf16.mxu0 0
        %2302 = vmatpush1.bf16.xpose.msra.mxu0 0
        %2303 = vmatprep.subr.bf16.mxu0 0
        %2304 = vmatpush1.bf16.xpose.msra.mxu0 0
        %2305 = vmatprep.subr.bf16.mxu0 0
        %2306 = vmatpush1.bf16.xpose.msra.mxu0 0
        %2307 = vmatprep.subr.bf16.mxu0 0
        %2308 = vmatpush1.bf16.xpose.msra.mxu0 0
        %2309 = vmatprep.subr.bf16.mxu0 0
        %2310 = vmatpush1.bf16.xpose.msra.mxu0 0
        %2311 = vmatprep.subr.bf16.mxu0 0
        %2312 = vmatpush1.bf16.xpose.msra.mxu0 0
        %2313 = vmatprep.subr.bf16.mxu0 0
        %2314 = vmatpush1.bf16.xpose.msra.mxu0 0
        %2315 = vmatprep.subr.bf16.mxu0 0
        %2316 = vmatpush1.bf16.xpose.msra.mxu0 0
        %2317 = vmatprep.mubr.bf16.mxu0 0
        %2318 = vmatmul.mubr.bf16.gmra.mrb[0].mxu0 %v2280
        %v2319 = vpop.f32.mrb[0].mxu0
        %v2320 = vadd.f32 0.0, %v2319
        %v2321 = vpop.f32.mrb[0].mxu0
        %v2322 = vpop.f32.mrb[0].mxu0
        %v2323 = vpop.f32.mrb[0].mxu0
        %2324 = vdwg.mxu0
        %v2326 = vsel %vm1864, %v1114, 0
        %v2329 = vsel %vm1864, %v1481, 0
        %2331 = vmatprep.subr.bf16.mxu0 0
        %2332 = vmatpush1.bf16.xpose.msra.mxu0 %v2329
        %2333 = vmatprep.subr.bf16.mxu0 0
        %2334 = vmatpush1.bf16.xpose.msra.mxu0 0
        %2335 = vmatprep.subr.bf16.mxu0 0
        %2336 = vmatpush1.bf16.xpose.msra.mxu0 0
        %2337 = vmatprep.subr.bf16.mxu0 0
        %2338 = vmatpush1.bf16.xpose.msra.mxu0 0
        %2339 = vmatprep.subr.bf16.mxu0 0
        %2340 = vmatpush1.bf16.xpose.msra.mxu0 0
        %2341 = vmatprep.subr.bf16.mxu0 0
        %2342 = vmatpush1.bf16.xpose.msra.mxu0 0
        %2343 = vmatprep.subr.bf16.mxu0 0
        %2344 = vmatpush1.bf16.xpose.msra.mxu0 0
        %2345 = vmatprep.subr.bf16.mxu0 0
        %2346 = vmatpush1.bf16.xpose.msra.mxu0 0
        %2347 = vmatprep.subr.bf16.mxu0 0
        %2348 = vmatpush1.bf16.xpose.msra.mxu0 0
        %2349 = vmatprep.subr.bf16.mxu0 0
        %2350 = vmatpush1.bf16.xpose.msra.mxu0 0
        %2351 = vmatprep.subr.bf16.mxu0 0
        %2352 = vmatpush1.bf16.xpose.msra.mxu0 0
        %2353 = vmatprep.subr.bf16.mxu0 0
        %2354 = vmatpush1.bf16.xpose.msra.mxu0 0
        %2355 = vmatprep.subr.bf16.mxu0 0
        %2356 = vmatpush1.bf16.xpose.msra.mxu0 0
        %2357 = vmatprep.subr.bf16.mxu0 0
        %2358 = vmatpush1.bf16.xpose.msra.mxu0 0
        %2359 = vmatprep.subr.bf16.mxu0 0
        %2360 = vmatpush1.bf16.xpose.msra.mxu0 0
        %2361 = vmatprep.subr.bf16.mxu0 0
        %2362 = vmatpush1.bf16.xpose.msra.mxu0 0
        %2363 = vmatprep.mubr.bf16.mxu0 0
        %2364 = vmatmul.mubr.bf16.gmra.mrb[0].mxu0 %v2326
        %v2365 = vpop.f32.mrb[0].mxu0
        %v2366 = vadd.f32 0.0, %v2365
        %v2367 = vpop.f32.mrb[0].mxu0
        %v2368 = vpop.f32.mrb[0].mxu0
        %v2369 = vpop.f32.mrb[0].mxu0
        %2370 = vdwg.mxu0
        %v2372 = vsel %vm1864, %v1117, 0
        %v2375 = vsel %vm1864, %v1484, 0
        %2377 = vmatprep.subr.bf16.mxu0 0
        %2378 = vmatpush1.bf16.xpose.msra.mxu0 %v2375
        %2379 = vmatprep.subr.bf16.mxu0 0
        %2380 = vmatpush1.bf16.xpose.msra.mxu0 0
        %2381 = vmatprep.subr.bf16.mxu0 0
        %2382 = vmatpush1.bf16.xpose.msra.mxu0 0
        %2383 = vmatprep.subr.bf16.mxu0 0
        %2384 = vmatpush1.bf16.xpose.msra.mxu0 0
        %2385 = vmatprep.subr.bf16.mxu0 0
        %2386 = vmatpush1.bf16.xpose.msra.mxu0 0
        %2387 = vmatprep.subr.bf16.mxu0 0
        %2388 = vmatpush1.bf16.xpose.msra.mxu0 0
        %2389 = vmatprep.subr.bf16.mxu0 0
        %2390 = vmatpush1.bf16.xpose.msra.mxu0 0
        %2391 = vmatprep.subr.bf16.mxu0 0
        %2392 = vmatpush1.bf16.xpose.msra.mxu0 0
        %2393 = vmatprep.subr.bf16.mxu0 0
        %2394 = vmatpush1.bf16.xpose.msra.mxu0 0
        %2395 = vmatprep.subr.bf16.mxu0 0
        %2396 = vmatpush1.bf16.xpose.msra.mxu0 0
        %2397 = vmatprep.subr.bf16.mxu0 0
        %2398 = vmatpush1.bf16.xpose.msra.mxu0 0
        %2399 = vmatprep.subr.bf16.mxu0 0
        %2400 = vmatpush1.bf16.xpose.msra.mxu0 0
        %2401 = vmatprep.subr.bf16.mxu0 0
        %2402 = vmatpush1.bf16.xpose.msra.mxu0 0
        %2403 = vmatprep.subr.bf16.mxu0 0
        %2404 = vmatpush1.bf16.xpose.msra.mxu0 0
        %2405 = vmatprep.subr.bf16.mxu0 0
        %2406 = vmatpush1.bf16.xpose.msra.mxu0 0
        %2407 = vmatprep.subr.bf16.mxu0 0
        %2408 = vmatpush1.bf16.xpose.msra.mxu0 0
        %2409 = vmatprep.mubr.bf16.mxu0 0
        %2410 = vmatmul.mubr.bf16.gmra.mrb[0].mxu0 %v2372
        %v2411 = vpop.f32.mrb[0].mxu0
        %v2412 = vadd.f32 0.0, %v2411
        %v2413 = vpop.f32.mrb[0].mxu0
        %v2414 = vpop.f32.mrb[0].mxu0
        %v2415 = vpop.f32.mrb[0].mxu0
        %2416 = vdwg.mxu0
        %v2418 = vsel %vm1864, %v1120, 0
        %v2421 = vsel %vm1864, %v1487, 0
        %2423 = vmatprep.subr.bf16.mxu0 0
        %2424 = vmatpush1.bf16.xpose.msra.mxu0 %v2421
        %2425 = vmatprep.subr.bf16.mxu0 0
        %2426 = vmatpush1.bf16.xpose.msra.mxu0 0
        %2427 = vmatprep.subr.bf16.mxu0 0
        %2428 = vmatpush1.bf16.xpose.msra.mxu0 0
        %2429 = vmatprep.subr.bf16.mxu0 0
        %2430 = vmatpush1.bf16.xpose.msra.mxu0 0
        %2431 = vmatprep.subr.bf16.mxu0 0
        %2432 = vmatpush1.bf16.xpose.msra.mxu0 0
        %2433 = vmatprep.subr.bf16.mxu0 0
        %2434 = vmatpush1.bf16.xpose.msra.mxu0 0
        %2435 = vmatprep.subr.bf16.mxu0 0
        %2436 = vmatpush1.bf16.xpose.msra.mxu0 0
        %2437 = vmatprep.subr.bf16.mxu0 0
        %2438 = vmatpush1.bf16.xpose.msra.mxu0 0
        %2439 = vmatprep.subr.bf16.mxu0 0
        %2440 = vmatpush1.bf16.xpose.msra.mxu0 0
        %2441 = vmatprep.subr.bf16.mxu0 0
        %2442 = vmatpush1.bf16.xpose.msra.mxu0 0
        %2443 = vmatprep.subr.bf16.mxu0 0
        %2444 = vmatpush1.bf16.xpose.msra.mxu0 0
        %2445 = vmatprep.subr.bf16.mxu0 0
        %2446 = vmatpush1.bf16.xpose.msra.mxu0 0
        %2447 = vmatprep.subr.bf16.mxu0 0
        %2448 = vmatpush1.bf16.xpose.msra.mxu0 0
        %2449 = vmatprep.subr.bf16.mxu0 0
        %2450 = vmatpush1.bf16.xpose.msra.mxu0 0
        %2451 = vmatprep.subr.bf16.mxu0 0
        %2452 = vmatpush1.bf16.xpose.msra.mxu0 0
        %2453 = vmatprep.subr.bf16.mxu0 0
        %2454 = vmatpush1.bf16.xpose.msra.mxu0 0
        %2455 = vmatprep.mubr.bf16.mxu0 0
        %2456 = vmatmul.mubr.bf16.gmra.mrb[0].mxu0 %v2418
        %v2457 = vpop.f32.mrb[0].mxu0
        %v2458 = vadd.f32 0.0, %v2457
        %v2459 = vpop.f32.mrb[0].mxu0
        %v2460 = vpop.f32.mrb[0].mxu0
        %v2461 = vpop.f32.mrb[0].mxu0
        %2462 = vdwg.mxu0
        %v2464 = vsel %vm1864, %v1123, 0
        %v2467 = vsel %vm1864, %v1490, 0
        %2469 = vmatprep.subr.bf16.mxu0 0
        %2470 = vmatpush1.bf16.xpose.msra.mxu0 %v2467
        %2471 = vmatprep.subr.bf16.mxu0 0
        %2472 = vmatpush1.bf16.xpose.msra.mxu0 0
        %2473 = vmatprep.subr.bf16.mxu0 0
        %2474 = vmatpush1.bf16.xpose.msra.mxu0 0
        %2475 = vmatprep.subr.bf16.mxu0 0
        %2476 = vmatpush1.bf16.xpose.msra.mxu0 0
        %2477 = vmatprep.subr.bf16.mxu0 0
        %2478 = vmatpush1.bf16.xpose.msra.mxu0 0
        %2479 = vmatprep.subr.bf16.mxu0 0
        %2480 = vmatpush1.bf16.xpose.msra.mxu0 0
        %2481 = vmatprep.subr.bf16.mxu0 0
        %2482 = vmatpush1.bf16.xpose.msra.mxu0 0
        %2483 = vmatprep.subr.bf16.mxu0 0
        %2484 = vmatpush1.bf16.xpose.msra.mxu0 0
        %2485 = vmatprep.subr.bf16.mxu0 0
        %2486 = vmatpush1.bf16.xpose.msra.mxu0 0
        %2487 = vmatprep.subr.bf16.mxu0 0
        %2488 = vmatpush1.bf16.xpose.msra.mxu0 0
        %2489 = vmatprep.subr.bf16.mxu0 0
        %2490 = vmatpush1.bf16.xpose.msra.mxu0 0
        %2491 = vmatprep.subr.bf16.mxu0 0
        %2492 = vmatpush1.bf16.xpose.msra.mxu0 0
        %2493 = vmatprep.subr.bf16.mxu0 0
        %2494 = vmatpush1.bf16.xpose.msra.mxu0 0
        %2495 = vmatprep.subr.bf16.mxu0 0
        %2496 = vmatpush1.bf16.xpose.msra.mxu0 0
        %2497 = vmatprep.subr.bf16.mxu0 0
        %2498 = vmatpush1.bf16.xpose.msra.mxu0 0
        %2499 = vmatprep.subr.bf16.mxu0 0
        %2500 = vmatpush1.bf16.xpose.msra.mxu0 0
        %2501 = vmatprep.mubr.bf16.mxu0 0
        %2502 = vmatmul.mubr.bf16.gmra.mrb[0].mxu0 %v2464
        %v2503 = vpop.f32.mrb[0].mxu0
        %v2504 = vadd.f32 0.0, %v2503
        %v2505 = vpop.f32.mrb[0].mxu0
        %v2506 = vpop.f32.mrb[0].mxu0
        %v2507 = vpop.f32.mrb[0].mxu0
        %2508 = vdwg.mxu0
        %v2510 = vsel %vm1864, %v1126, 0
        %v2513 = vsel %vm1864, %v1493, 0
        %2515 = vmatprep.subr.bf16.mxu0 0
        %2516 = vmatpush1.bf16.xpose.msra.mxu0 %v2513
        %2517 = vmatprep.subr.bf16.mxu0 0
        %2518 = vmatpush1.bf16.xpose.msra.mxu0 0
        %2519 = vmatprep.subr.bf16.mxu0 0
        %2520 = vmatpush1.bf16.xpose.msra.mxu0 0
        %2521 = vmatprep.subr.bf16.mxu0 0
        %2522 = vmatpush1.bf16.xpose.msra.mxu0 0
        %2523 = vmatprep.subr.bf16.mxu0 0
        %2524 = vmatpush1.bf16.xpose.msra.mxu0 0
        %2525 = vmatprep.subr.bf16.mxu0 0
        %2526 = vmatpush1.bf16.xpose.msra.mxu0 0
        %2527 = vmatprep.subr.bf16.mxu0 0
        %2528 = vmatpush1.bf16.xpose.msra.mxu0 0
        %2529 = vmatprep.subr.bf16.mxu0 0
        %2530 = vmatpush1.bf16.xpose.msra.mxu0 0
        %2531 = vmatprep.subr.bf16.mxu0 0
        %2532 = vmatpush1.bf16.xpose.msra.mxu0 0
        %2533 = vmatprep.subr.bf16.mxu0 0
        %2534 = vmatpush1.bf16.xpose.msra.mxu0 0
        %2535 = vmatprep.subr.bf16.mxu0 0
        %2536 = vmatpush1.bf16.xpose.msra.mxu0 0
        %2537 = vmatprep.subr.bf16.mxu0 0
        %2538 = vmatpush1.bf16.xpose.msra.mxu0 0
        %2539 = vmatprep.subr.bf16.mxu0 0
        %2540 = vmatpush1.bf16.xpose.msra.mxu0 0
        %2541 = vmatprep.subr.bf16.mxu0 0
        %2542 = vmatpush1.bf16.xpose.msra.mxu0 0
        %2543 = vmatprep.subr.bf16.mxu0 0
        %2544 = vmatpush1.bf16.xpose.msra.mxu0 0
        %2545 = vmatprep.subr.bf16.mxu0 0
        %2546 = vmatpush1.bf16.xpose.msra.mxu0 0
        %2547 = vmatprep.mubr.bf16.mxu0 0
        %2548 = vmatmul.mubr.bf16.gmra.mrb[0].mxu0 %v2510
        %v2549 = vpop.f32.mrb[0].mxu0
        %v2550 = vadd.f32 0.0, %v2549
        %v2551 = vpop.f32.mrb[0].mxu0
        %v2552 = vpop.f32.mrb[0].mxu0
        %v2553 = vpop.f32.mrb[0].mxu0
        %2554 = vdwg.mxu0
        %v2556 = vsel %vm1864, %v1129, 0
        %v2559 = vsel %vm1864, %v1496, 0
        %2561 = vmatprep.subr.bf16.mxu0 0
        %2562 = vmatpush1.bf16.xpose.msra.mxu0 %v2559
        %2563 = vmatprep.subr.bf16.mxu0 0
        %2564 = vmatpush1.bf16.xpose.msra.mxu0 0
        %2565 = vmatprep.subr.bf16.mxu0 0
        %2566 = vmatpush1.bf16.xpose.msra.mxu0 0
        %2567 = vmatprep.subr.bf16.mxu0 0
        %2568 = vmatpush1.bf16.xpose.msra.mxu0 0
        %2569 = vmatprep.subr.bf16.mxu0 0
        %2570 = vmatpush1.bf16.xpose.msra.mxu0 0
        %2571 = vmatprep.subr.bf16.mxu0 0
        %2572 = vmatpush1.bf16.xpose.msra.mxu0 0
        %2573 = vmatprep.subr.bf16.mxu0 0
        %2574 = vmatpush1.bf16.xpose.msra.mxu0 0
        %2575 = vmatprep.subr.bf16.mxu0 0
        %2576 = vmatpush1.bf16.xpose.msra.mxu0 0
        %2577 = vmatprep.subr.bf16.mxu0 0
        %2578 = vmatpush1.bf16.xpose.msra.mxu0 0
        %2579 = vmatprep.subr.bf16.mxu0 0
        %2580 = vmatpush1.bf16.xpose.msra.mxu0 0
        %2581 = vmatprep.subr.bf16.mxu0 0
        %2582 = vmatpush1.bf16.xpose.msra.mxu0 0
        %2583 = vmatprep.subr.bf16.mxu0 0
        %2584 = vmatpush1.bf16.xpose.msra.mxu0 0
        %2585 = vmatprep.subr.bf16.mxu0 0
        %2586 = vmatpush1.bf16.xpose.msra.mxu0 0
        %2587 = vmatprep.subr.bf16.mxu0 0
        %2588 = vmatpush1.bf16.xpose.msra.mxu0 0
        %2589 = vmatprep.subr.bf16.mxu0 0
        %2590 = vmatpush1.bf16.xpose.msra.mxu0 0
        %2591 = vmatprep.subr.bf16.mxu0 0
        %2592 = vmatpush1.bf16.xpose.msra.mxu0 0
        %2593 = vmatprep.mubr.bf16.mxu0 0
        %2594 = vmatmul.mubr.bf16.gmra.mrb[0].mxu0 %v2556
        %v2595 = vpop.f32.mrb[0].mxu0
        %v2596 = vadd.f32 0.0, %v2595
        %v2597 = vpop.f32.mrb[0].mxu0
        %v2598 = vpop.f32.mrb[0].mxu0
        %v2599 = vpop.f32.mrb[0].mxu0
        %2600 = vdwg.mxu0
        %v2601 = vmul.f32 %v1906, 0.25
        %v2602 = vmul.f32 %v1952, 0.25
        %v2603 = vmul.f32 %v1998, 0.25
        %v2604 = vmul.f32 %v2044, 0.25
        %v2605 = vmul.f32 %v2090, 0.25
        %v2606 = vmul.f32 %v2136, 0.25
        %v2607 = vmul.f32 %v2182, 0.25
        %v2608 = vmul.f32 %v2228, 0.25
        %v2609 = vmul.f32 %v2274, 0.25
        %v2610 = vmul.f32 %v2320, 0.25
        %v2611 = vmul.f32 %v2366, 0.25
        %v2612 = vmul.f32 %v2412, 0.25
        %v2613 = vmul.f32 %v2458, 0.25
        %v2614 = vmul.f32 %v2504, 0.25
        %v2615 = vmul.f32 %v2550, 0.25
        %v2616 = vmul.f32 %v2596, 0.25
        %vm2617 = vcmask 64512
        %v2618 = vsel %vm2617, %v2601, -inf
        %2619 = vmax.xlane.f32.xlu0 %v2618
        %v2620 = vpop.xlane.xlu0 %2619
        %v2621 = vsel %vm2617, %v2602, -inf
        %2622 = vmax.xlane.f32.xlu0 %v2621
        %v2623 = vpop.xlane.xlu0 %2622
        %v2624 = vsel %vm2617, %v2603, -inf
        %2625 = vmax.xlane.f32.xlu0 %v2624
        %v2626 = vpop.xlane.xlu0 %2625
        %v2627 = vsel %vm2617, %v2604, -inf
        %2628 = vmax.xlane.f32.xlu0 %v2627
        %v2629 = vpop.xlane.xlu0 %2628
        %v2630 = vsel %vm2617, %v2605, -inf
        %2631 = vmax.xlane.f32.xlu0 %v2630
        %v2632 = vpop.xlane.xlu0 %2631
        %v2633 = vsel %vm2617, %v2606, -inf
        %2634 = vmax.xlane.f32.xlu0 %v2633
        %v2635 = vpop.xlane.xlu0 %2634
        %v2636 = vsel %vm2617, %v2607, -inf
        %2637 = vmax.xlane.f32.xlu0 %v2636
        %v2638 = vpop.xlane.xlu0 %2637
        %v2639 = vsel %vm2617, %v2608, -inf
        %2640 = vmax.xlane.f32.xlu0 %v2639
        %v2641 = vpop.xlane.xlu0 %2640
        %v2642 = vsel %vm2617, %v2609, -inf
        %2643 = vmax.xlane.f32.xlu0 %v2642
        %v2644 = vpop.xlane.xlu0 %2643
        %v2645 = vsel %vm2617, %v2610, -inf
        %2646 = vmax.xlane.f32.xlu0 %v2645
        %v2647 = vpop.xlane.xlu0 %2646
        %v2648 = vsel %vm2617, %v2611, -inf
        %2649 = vmax.xlane.f32.xlu0 %v2648
        %v2650 = vpop.xlane.xlu0 %2649
        %v2651 = vsel %vm2617, %v2612, -inf
        %2652 = vmax.xlane.f32.xlu0 %v2651
        %v2653 = vpop.xlane.xlu0 %2652
        %v2654 = vsel %vm2617, %v2613, -inf
        %2655 = vmax.xlane.f32.xlu0 %v2654
        %v2656 = vpop.xlane.xlu0 %2655
        %v2657 = vsel %vm2617, %v2614, -inf
        %2658 = vmax.xlane.f32.xlu0 %v2657
        %v2659 = vpop.xlane.xlu0 %2658
        %v2660 = vsel %vm2617, %v2615, -inf
        %2661 = vmax.xlane.f32.xlu0 %v2660
        %v2662 = vpop.xlane.xlu0 %2661
        %v2663 = vsel %vm2617, %v2616, -inf
        %2664 = vmax.xlane.f32.xlu0 %v2663
        %v2665 = vpop.xlane.xlu0 %2664
        %v2666 = vsub.f32 %v2601, %v2620
        %v2667 = vsub.f32 %v2602, %v2623
        %v2668 = vsub.f32 %v2603, %v2626
        %v2669 = vsub.f32 %v2604, %v2629
        %v2670 = vsub.f32 %v2605, %v2632
        %v2671 = vsub.f32 %v2606, %v2635
        %v2672 = vsub.f32 %v2607, %v2638
        %v2673 = vsub.f32 %v2608, %v2641
        %v2674 = vsub.f32 %v2609, %v2644
        %v2675 = vsub.f32 %v2610, %v2647
        %v2676 = vsub.f32 %v2611, %v2650
        %v2677 = vsub.f32 %v2612, %v2653
        %v2678 = vsub.f32 %v2613, %v2656
        %v2679 = vsub.f32 %v2614, %v2659
        %v2680 = vsub.f32 %v2615, %v2662
        %v2681 = vsub.f32 %v2616, %v2665
        %v2682 = vmul.f32 %v2666, 1.442695
        %v2683 = vpow.pop %v2682
        %v2684 = vmul.f32 %v2667, 1.442695
        %v2685 = vpow.pop %v2684
        %v2686 = vmul.f32 %v2668, 1.442695
        %v2687 = vpow.pop %v2686
        %v2688 = vmul.f32 %v2669, 1.442695
        %v2689 = vpow.pop %v2688
        %v2690 = vmul.f32 %v2670, 1.442695
        %v2691 = vpow.pop %v2690
        %v2692 = vmul.f32 %v2671, 1.442695
        %v2693 = vpow.pop %v2692
        %v2694 = vmul.f32 %v2672, 1.442695
        %v2695 = vpow.pop %v2694
        %v2696 = vmul.f32 %v2673, 1.442695
        %v2697 = vpow.pop %v2696
        %v2698 = vmul.f32 %v2674, 1.442695
        %v2699 = vpow.pop %v2698
        %v2700 = vmul.f32 %v2675, 1.442695
        %v2701 = vpow.pop %v2700
        %v2702 = vmul.f32 %v2676, 1.442695
        %v2703 = vpow.pop %v2702
        %v2704 = vmul.f32 %v2677, 1.442695
        %v2705 = vpow.pop %v2704
        %v2706 = vmul.f32 %v2678, 1.442695
        %v2707 = vpow.pop %v2706
        %v2708 = vmul.f32 %v2679, 1.442695
        %v2709 = vpow.pop %v2708
        %v2710 = vmul.f32 %v2680, 1.442695
        %v2711 = vpow.pop %v2710
        %v2712 = vmul.f32 %v2681, 1.442695
        %v2713 = vpow.pop %v2712
        %v2714 = vsel %vm2617, %v2683, 0.0
        %2715 = vadd.xlane.f32.xlu0 %v2714
        %v2716 = vpop.xlane.xlu0 %2715
        %v2717 = vsel %vm2617, %v2685, 0.0
        %2718 = vadd.xlane.f32.xlu0 %v2717
        %v2719 = vpop.xlane.xlu0 %2718
        %v2720 = vsel %vm2617, %v2687, 0.0
        %2721 = vadd.xlane.f32.xlu0 %v2720
        %v2722 = vpop.xlane.xlu0 %2721
        %v2723 = vsel %vm2617, %v2689, 0.0
        %2724 = vadd.xlane.f32.xlu0 %v2723
        %v2725 = vpop.xlane.xlu0 %2724
        %v2726 = vsel %vm2617, %v2691, 0.0
        %2727 = vadd.xlane.f32.xlu0 %v2726
        %v2728 = vpop.xlane.xlu0 %2727
        %v2729 = vsel %vm2617, %v2693, 0.0
        %2730 = vadd.xlane.f32.xlu0 %v2729
        %v2731 = vpop.xlane.xlu0 %2730
        %v2732 = vsel %vm2617, %v2695, 0.0
        %2733 = vadd.xlane.f32.xlu0 %v2732
        %v2734 = vpop.xlane.xlu0 %2733
        %v2735 = vsel %vm2617, %v2697, 0.0
        %2736 = vadd.xlane.f32.xlu0 %v2735
        %v2737 = vpop.xlane.xlu0 %2736
        %v2738 = vsel %vm2617, %v2699, 0.0
        %2739 = vadd.xlane.f32.xlu0 %v2738
        %v2740 = vpop.xlane.xlu0 %2739
        %v2741 = vsel %vm2617, %v2701, 0.0
        %2742 = vadd.xlane.f32.xlu0 %v2741
        %v2743 = vpop.xlane.xlu0 %2742
        %v2744 = vsel %vm2617, %v2703, 0.0
        %2745 = vadd.xlane.f32.xlu0 %v2744
        %v2746 = vpop.xlane.xlu0 %2745
        %v2747 = vsel %vm2617, %v2705, 0.0
        %2748 = vadd.xlane.f32.xlu0 %v2747
        %v2749 = vpop.xlane.xlu0 %2748
        %v2750 = vsel %vm2617, %v2707, 0.0
        %2751 = vadd.xlane.f32.xlu0 %v2750
        %v2752 = vpop.xlane.xlu0 %2751
        %v2753 = vsel %vm2617, %v2709, 0.0
        %2754 = vadd.xlane.f32.xlu0 %v2753
        %v2755 = vpop.xlane.xlu0 %2754
        %v2756 = vsel %vm2617, %v2711, 0.0
        %2757 = vadd.xlane.f32.xlu0 %v2756
        %v2758 = vpop.xlane.xlu0 %2757
        %v2759 = vsel %vm2617, %v2713, 0.0
        %2760 = vadd.xlane.f32.xlu0 %v2759
        %v2761 = vpop.xlane.xlu0 %2760
        %v2762 = vrcp.pop %v2716
        %v2763 = vrcp.pop %v2719
        %v2764 = vrcp.pop %v2722
        %v2765 = vrcp.pop %v2725
        %v2766 = vrcp.pop %v2728
        %v2767 = vrcp.pop %v2731
        %v2768 = vrcp.pop %v2734
        %v2769 = vrcp.pop %v2737
        %v2770 = vrcp.pop %v2740
        %v2771 = vrcp.pop %v2743
        %v2772 = vrcp.pop %v2746
        %v2773 = vrcp.pop %v2749
        %v2774 = vrcp.pop %v2752
        %v2775 = vrcp.pop %v2755
        %v2776 = vrcp.pop %v2758
        %v2777 = vrcp.pop %v2761
        %v2778 = vmul.f32 %v2683, %v2762
        %v2779 = vmul.f32 %v2685, %v2763
        %v2780 = vmul.f32 %v2687, %v2764
        %v2781 = vmul.f32 %v2689, %v2765
        %v2782 = vmul.f32 %v2691, %v2766
        %v2783 = vmul.f32 %v2693, %v2767
        %v2784 = vmul.f32 %v2695, %v2768
        %v2785 = vmul.f32 %v2697, %v2769
        %v2786 = vmul.f32 %v2699, %v2770
        %v2787 = vmul.f32 %v2701, %v2771
        %v2788 = vmul.f32 %v2703, %v2772
        %v2789 = vmul.f32 %v2705, %v2773
        %v2790 = vmul.f32 %v2707, %v2774
        %v2791 = vmul.f32 %v2709, %v2775
        %v2792 = vmul.f32 %v2711, %v2776
        %v2793 = vmul.f32 %v2713, %v2777
        %v2794 = vpack.c.bf16 %v2778, %v2778
        %v2795 = vpack.c.bf16 %v2779, %v2779
        %v2796 = vpack.c.bf16 %v2780, %v2780
        %v2797 = vpack.c.bf16 %v2781, %v2781
        %v2798 = vpack.c.bf16 %v2782, %v2782
        %v2799 = vpack.c.bf16 %v2783, %v2783
        %v2800 = vpack.c.bf16 %v2784, %v2784
        %v2801 = vpack.c.bf16 %v2785, %v2785
        %v2802 = vpack.c.bf16 %v2786, %v2786
        %v2803 = vpack.c.bf16 %v2787, %v2787
        %v2804 = vpack.c.bf16 %v2788, %v2788
        %v2805 = vpack.c.bf16 %v2789, %v2789
        %v2806 = vpack.c.bf16 %v2790, %v2790
        %v2807 = vpack.c.bf16 %v2791, %v2791
        %v2808 = vpack.c.bf16 %v2792, %v2792
        %v2809 = vpack.c.bf16 %v2793, %v2793
        %v2811 = vsel %vm2617, %v2794, 0
        %vm2813 = vcmask 1043456
        %v2815 = vsel %vm2813, %v1818, 0
        %2817 = vmatprep.subr.bf16.mxu0 0
        %2818 = vmatpush1.bf16.msra.mxu0 %v2815
        %2819 = vmatprep.subr.bf16.mxu0 0
        %2820 = vmatpush1.bf16.msra.mxu0 0
        %2821 = vmatprep.subr.bf16.mxu0 0
        %2822 = vmatpush1.bf16.msra.mxu0 0
        %2823 = vmatprep.subr.bf16.mxu0 0
        %2824 = vmatpush1.bf16.msra.mxu0 0
        %2825 = vmatprep.subr.bf16.mxu0 0
        %2826 = vmatpush1.bf16.msra.mxu0 0
        %2827 = vmatprep.subr.bf16.mxu0 0
        %2828 = vmatpush1.bf16.msra.mxu0 0
        %2829 = vmatprep.subr.bf16.mxu0 0
        %2830 = vmatpush1.bf16.msra.mxu0 0
        %2831 = vmatprep.subr.bf16.mxu0 0
        %2832 = vmatpush1.bf16.msra.mxu0 0
        %2833 = vmatprep.subr.bf16.mxu0 0
        %2834 = vmatpush1.bf16.msra.mxu0 0
        %2835 = vmatprep.subr.bf16.mxu0 0
        %2836 = vmatpush1.bf16.msra.mxu0 0
        %2837 = vmatprep.subr.bf16.mxu0 0
        %2838 = vmatpush1.bf16.msra.mxu0 0
        %2839 = vmatprep.subr.bf16.mxu0 0
        %2840 = vmatpush1.bf16.msra.mxu0 0
        %2841 = vmatprep.subr.bf16.mxu0 0
        %2842 = vmatpush1.bf16.msra.mxu0 0
        %2843 = vmatprep.subr.bf16.mxu0 0
        %2844 = vmatpush1.bf16.msra.mxu0 0
        %2845 = vmatprep.subr.bf16.mxu0 0
        %2846 = vmatpush1.bf16.msra.mxu0 0
        %2847 = vmatprep.subr.bf16.mxu0 0
        %2848 = vmatpush1.bf16.msra.mxu0 0
        %2849 = vmatprep.mubr.bf16.mxu0 0
        %2850 = vmatmul.mubr.bf16.gmra.mrb[0].mxu0 %v2811
        %v2851 = vpop.f32.mrb[0].mxu0
        %v2852 = vadd.f32 0.0, %v2851
        %v2853 = vpop.f32.mrb[0].mxu0
        %v2854 = vpop.f32.mrb[0].mxu0
        %v2855 = vpop.f32.mrb[0].mxu0
        %2856 = vdwg.mxu0
        %v2858 = vsel %vm2617, %v2795, 0
        %v2861 = vsel %vm2813, %v1821, 0
        %2863 = vmatprep.subr.bf16.mxu0 0
        %2864 = vmatpush1.bf16.msra.mxu0 %v2861
        %2865 = vmatprep.subr.bf16.mxu0 0
        %2866 = vmatpush1.bf16.msra.mxu0 0
        %2867 = vmatprep.subr.bf16.mxu0 0
        %2868 = vmatpush1.bf16.msra.mxu0 0
        %2869 = vmatprep.subr.bf16.mxu0 0
        %2870 = vmatpush1.bf16.msra.mxu0 0
        %2871 = vmatprep.subr.bf16.mxu0 0
        %2872 = vmatpush1.bf16.msra.mxu0 0
        %2873 = vmatprep.subr.bf16.mxu0 0
        %2874 = vmatpush1.bf16.msra.mxu0 0
        %2875 = vmatprep.subr.bf16.mxu0 0
        %2876 = vmatpush1.bf16.msra.mxu0 0
        %2877 = vmatprep.subr.bf16.mxu0 0
        %2878 = vmatpush1.bf16.msra.mxu0 0
        %2879 = vmatprep.subr.bf16.mxu0 0
        %2880 = vmatpush1.bf16.msra.mxu0 0
        %2881 = vmatprep.subr.bf16.mxu0 0
        %2882 = vmatpush1.bf16.msra.mxu0 0
        %2883 = vmatprep.subr.bf16.mxu0 0
        %2884 = vmatpush1.bf16.msra.mxu0 0
        %2885 = vmatprep.subr.bf16.mxu0 0
        %2886 = vmatpush1.bf16.msra.mxu0 0
        %2887 = vmatprep.subr.bf16.mxu0 0
        %2888 = vmatpush1.bf16.msra.mxu0 0
        %2889 = vmatprep.subr.bf16.mxu0 0
        %2890 = vmatpush1.bf16.msra.mxu0 0
        %2891 = vmatprep.subr.bf16.mxu0 0
        %2892 = vmatpush1.bf16.msra.mxu0 0
        %2893 = vmatprep.subr.bf16.mxu0 0
        %2894 = vmatpush1.bf16.msra.mxu0 0
        %2895 = vmatprep.mubr.bf16.mxu0 0
        %2896 = vmatmul.mubr.bf16.gmra.mrb[0].mxu0 %v2858
        %v2897 = vpop.f32.mrb[0].mxu0
        %v2898 = vadd.f32 0.0, %v2897
        %v2899 = vpop.f32.mrb[0].mxu0
        %v2900 = vpop.f32.mrb[0].mxu0
        %v2901 = vpop.f32.mrb[0].mxu0
        %2902 = vdwg.mxu0
        %v2904 = vsel %vm2617, %v2796, 0
        %v2907 = vsel %vm2813, %v1824, 0
        %2909 = vmatprep.subr.bf16.mxu0 0
        %2910 = vmatpush1.bf16.msra.mxu0 %v2907
        %2911 = vmatprep.subr.bf16.mxu0 0
        %2912 = vmatpush1.bf16.msra.mxu0 0
        %2913 = vmatprep.subr.bf16.mxu0 0
        %2914 = vmatpush1.bf16.msra.mxu0 0
        %2915 = vmatprep.subr.bf16.mxu0 0
        %2916 = vmatpush1.bf16.msra.mxu0 0
        %2917 = vmatprep.subr.bf16.mxu0 0
        %2918 = vmatpush1.bf16.msra.mxu0 0
        %2919 = vmatprep.subr.bf16.mxu0 0
        %2920 = vmatpush1.bf16.msra.mxu0 0
        %2921 = vmatprep.subr.bf16.mxu0 0
        %2922 = vmatpush1.bf16.msra.mxu0 0
        %2923 = vmatprep.subr.bf16.mxu0 0
        %2924 = vmatpush1.bf16.msra.mxu0 0
        %2925 = vmatprep.subr.bf16.mxu0 0
        %2926 = vmatpush1.bf16.msra.mxu0 0
        %2927 = vmatprep.subr.bf16.mxu0 0
        %2928 = vmatpush1.bf16.msra.mxu0 0
        %2929 = vmatprep.subr.bf16.mxu0 0
        %2930 = vmatpush1.bf16.msra.mxu0 0
        %2931 = vmatprep.subr.bf16.mxu0 0
        %2932 = vmatpush1.bf16.msra.mxu0 0
        %2933 = vmatprep.subr.bf16.mxu0 0
        %2934 = vmatpush1.bf16.msra.mxu0 0
        %2935 = vmatprep.subr.bf16.mxu0 0
        %2936 = vmatpush1.bf16.msra.mxu0 0
        %2937 = vmatprep.subr.bf16.mxu0 0
        %2938 = vmatpush1.bf16.msra.mxu0 0
        %2939 = vmatprep.subr.bf16.mxu0 0
        %2940 = vmatpush1.bf16.msra.mxu0 0
        %2941 = vmatprep.mubr.bf16.mxu0 0
        %2942 = vmatmul.mubr.bf16.gmra.mrb[0].mxu0 %v2904
        %v2943 = vpop.f32.mrb[0].mxu0
        %v2944 = vadd.f32 0.0, %v2943
        %v2945 = vpop.f32.mrb[0].mxu0
        %v2946 = vpop.f32.mrb[0].mxu0
        %v2947 = vpop.f32.mrb[0].mxu0
        %2948 = vdwg.mxu0
        %v2950 = vsel %vm2617, %v2797, 0
        %v2953 = vsel %vm2813, %v1827, 0
        %2955 = vmatprep.subr.bf16.mxu0 0
        %2956 = vmatpush1.bf16.msra.mxu0 %v2953
        %2957 = vmatprep.subr.bf16.mxu0 0
        %2958 = vmatpush1.bf16.msra.mxu0 0
        %2959 = vmatprep.subr.bf16.mxu0 0
        %2960 = vmatpush1.bf16.msra.mxu0 0
        %2961 = vmatprep.subr.bf16.mxu0 0
        %2962 = vmatpush1.bf16.msra.mxu0 0
        %2963 = vmatprep.subr.bf16.mxu0 0
        %2964 = vmatpush1.bf16.msra.mxu0 0
        %2965 = vmatprep.subr.bf16.mxu0 0
        %2966 = vmatpush1.bf16.msra.mxu0 0
        %2967 = vmatprep.subr.bf16.mxu0 0
        %2968 = vmatpush1.bf16.msra.mxu0 0
        %2969 = vmatprep.subr.bf16.mxu0 0
        %2970 = vmatpush1.bf16.msra.mxu0 0
        %2971 = vmatprep.subr.bf16.mxu0 0
        %2972 = vmatpush1.bf16.msra.mxu0 0
        %2973 = vmatprep.subr.bf16.mxu0 0
        %2974 = vmatpush1.bf16.msra.mxu0 0
        %2975 = vmatprep.subr.bf16.mxu0 0
        %2976 = vmatpush1.bf16.msra.mxu0 0
        %2977 = vmatprep.subr.bf16.mxu0 0
        %2978 = vmatpush1.bf16.msra.mxu0 0
        %2979 = vmatprep.subr.bf16.mxu0 0
        %2980 = vmatpush1.bf16.msra.mxu0 0
        %2981 = vmatprep.subr.bf16.mxu0 0
        %2982 = vmatpush1.bf16.msra.mxu0 0
        %2983 = vmatprep.subr.bf16.mxu0 0
        %2984 = vmatpush1.bf16.msra.mxu0 0
        %2985 = vmatprep.subr.bf16.mxu0 0
        %2986 = vmatpush1.bf16.msra.mxu0 0
        %2987 = vmatprep.mubr.bf16.mxu0 0
        %2988 = vmatmul.mubr.bf16.gmra.mrb[0].mxu0 %v2950
        %v2989 = vpop.f32.mrb[0].mxu0
        %v2990 = vadd.f32 0.0, %v2989
        %v2991 = vpop.f32.mrb[0].mxu0
        %v2992 = vpop.f32.mrb[0].mxu0
        %v2993 = vpop.f32.mrb[0].mxu0
        %2994 = vdwg.mxu0
        %v2996 = vsel %vm2617, %v2798, 0
        %v2999 = vsel %vm2813, %v1830, 0
        %3001 = vmatprep.subr.bf16.mxu0 0
        %3002 = vmatpush1.bf16.msra.mxu0 %v2999
        %3003 = vmatprep.subr.bf16.mxu0 0
        %3004 = vmatpush1.bf16.msra.mxu0 0
        %3005 = vmatprep.subr.bf16.mxu0 0
        %3006 = vmatpush1.bf16.msra.mxu0 0
        %3007 = vmatprep.subr.bf16.mxu0 0
        %3008 = vmatpush1.bf16.msra.mxu0 0
        %3009 = vmatprep.subr.bf16.mxu0 0
        %3010 = vmatpush1.bf16.msra.mxu0 0
        %3011 = vmatprep.subr.bf16.mxu0 0
        %3012 = vmatpush1.bf16.msra.mxu0 0
        %3013 = vmatprep.subr.bf16.mxu0 0
        %3014 = vmatpush1.bf16.msra.mxu0 0
        %3015 = vmatprep.subr.bf16.mxu0 0
        %3016 = vmatpush1.bf16.msra.mxu0 0
        %3017 = vmatprep.subr.bf16.mxu0 0
        %3018 = vmatpush1.bf16.msra.mxu0 0
        %3019 = vmatprep.subr.bf16.mxu0 0
        %3020 = vmatpush1.bf16.msra.mxu0 0
        %3021 = vmatprep.subr.bf16.mxu0 0
        %3022 = vmatpush1.bf16.msra.mxu0 0
        %3023 = vmatprep.subr.bf16.mxu0 0
        %3024 = vmatpush1.bf16.msra.mxu0 0
        %3025 = vmatprep.subr.bf16.mxu0 0
        %3026 = vmatpush1.bf16.msra.mxu0 0
        %3027 = vmatprep.subr.bf16.mxu0 0
        %3028 = vmatpush1.bf16.msra.mxu0 0
        %3029 = vmatprep.subr.bf16.mxu0 0
        %3030 = vmatpush1.bf16.msra.mxu0 0
        %3031 = vmatprep.subr.bf16.mxu0 0
        %3032 = vmatpush1.bf16.msra.mxu0 0
        %3033 = vmatprep.mubr.bf16.mxu0 0
        %3034 = vmatmul.mubr.bf16.gmra.mrb[0].mxu0 %v2996
        %v3035 = vpop.f32.mrb[0].mxu0
        %v3036 = vadd.f32 0.0, %v3035
        %v3037 = vpop.f32.mrb[0].mxu0
        %v3038 = vpop.f32.mrb[0].mxu0
        %v3039 = vpop.f32.mrb[0].mxu0
        %3040 = vdwg.mxu0
        %v3042 = vsel %vm2617, %v2799, 0
        %v3045 = vsel %vm2813, %v1833, 0
        %3047 = vmatprep.subr.bf16.mxu0 0
        %3048 = vmatpush1.bf16.msra.mxu0 %v3045
        %3049 = vmatprep.subr.bf16.mxu0 0
        %3050 = vmatpush1.bf16.msra.mxu0 0
        %3051 = vmatprep.subr.bf16.mxu0 0
        %3052 = vmatpush1.bf16.msra.mxu0 0
        %3053 = vmatprep.subr.bf16.mxu0 0
        %3054 = vmatpush1.bf16.msra.mxu0 0
        %3055 = vmatprep.subr.bf16.mxu0 0
        %3056 = vmatpush1.bf16.msra.mxu0 0
        %3057 = vmatprep.subr.bf16.mxu0 0
        %3058 = vmatpush1.bf16.msra.mxu0 0
        %3059 = vmatprep.subr.bf16.mxu0 0
        %3060 = vmatpush1.bf16.msra.mxu0 0
        %3061 = vmatprep.subr.bf16.mxu0 0
        %3062 = vmatpush1.bf16.msra.mxu0 0
        %3063 = vmatprep.subr.bf16.mxu0 0
        %3064 = vmatpush1.bf16.msra.mxu0 0
        %3065 = vmatprep.subr.bf16.mxu0 0
        %3066 = vmatpush1.bf16.msra.mxu0 0
        %3067 = vmatprep.subr.bf16.mxu0 0
        %3068 = vmatpush1.bf16.msra.mxu0 0
        %3069 = vmatprep.subr.bf16.mxu0 0
        %3070 = vmatpush1.bf16.msra.mxu0 0
        %3071 = vmatprep.subr.bf16.mxu0 0
        %3072 = vmatpush1.bf16.msra.mxu0 0
        %3073 = vmatprep.subr.bf16.mxu0 0
        %3074 = vmatpush1.bf16.msra.mxu0 0
        %3075 = vmatprep.subr.bf16.mxu0 0
        %3076 = vmatpush1.bf16.msra.mxu0 0
        %3077 = vmatprep.subr.bf16.mxu0 0
        %3078 = vmatpush1.bf16.msra.mxu0 0
        %3079 = vmatprep.mubr.bf16.mxu0 0
        %3080 = vmatmul.mubr.bf16.gmra.mrb[0].mxu0 %v3042
        %v3081 = vpop.f32.mrb[0].mxu0
        %v3082 = vadd.f32 0.0, %v3081
        %v3083 = vpop.f32.mrb[0].mxu0
        %v3084 = vpop.f32.mrb[0].mxu0
        %v3085 = vpop.f32.mrb[0].mxu0
        %3086 = vdwg.mxu0
        %v3088 = vsel %vm2617, %v2800, 0
        %v3091 = vsel %vm2813, %v1836, 0
        %3093 = vmatprep.subr.bf16.mxu0 0
        %3094 = vmatpush1.bf16.msra.mxu0 %v3091
        %3095 = vmatprep.subr.bf16.mxu0 0
        %3096 = vmatpush1.bf16.msra.mxu0 0
        %3097 = vmatprep.subr.bf16.mxu0 0
        %3098 = vmatpush1.bf16.msra.mxu0 0
        %3099 = vmatprep.subr.bf16.mxu0 0
        %3100 = vmatpush1.bf16.msra.mxu0 0
        %3101 = vmatprep.subr.bf16.mxu0 0
        %3102 = vmatpush1.bf16.msra.mxu0 0
        %3103 = vmatprep.subr.bf16.mxu0 0
        %3104 = vmatpush1.bf16.msra.mxu0 0
        %3105 = vmatprep.subr.bf16.mxu0 0
        %3106 = vmatpush1.bf16.msra.mxu0 0
        %3107 = vmatprep.subr.bf16.mxu0 0
        %3108 = vmatpush1.bf16.msra.mxu0 0
        %3109 = vmatprep.subr.bf16.mxu0 0
        %3110 = vmatpush1.bf16.msra.mxu0 0
        %3111 = vmatprep.subr.bf16.mxu0 0
        %3112 = vmatpush1.bf16.msra.mxu0 0
        %3113 = vmatprep.subr.bf16.mxu0 0
        %3114 = vmatpush1.bf16.msra.mxu0 0
        %3115 = vmatprep.subr.bf16.mxu0 0
        %3116 = vmatpush1.bf16.msra.mxu0 0
        %3117 = vmatprep.subr.bf16.mxu0 0
        %3118 = vmatpush1.bf16.msra.mxu0 0
        %3119 = vmatprep.subr.bf16.mxu0 0
        %3120 = vmatpush1.bf16.msra.mxu0 0
        %3121 = vmatprep.subr.bf16.mxu0 0
        %3122 = vmatpush1.bf16.msra.mxu0 0
        %3123 = vmatprep.subr.bf16.mxu0 0
        %3124 = vmatpush1.bf16.msra.mxu0 0
        %3125 = vmatprep.mubr.bf16.mxu0 0
        %3126 = vmatmul.mubr.bf16.gmra.mrb[0].mxu0 %v3088
        %v3127 = vpop.f32.mrb[0].mxu0
        %v3128 = vadd.f32 0.0, %v3127
        %v3129 = vpop.f32.mrb[0].mxu0
        %v3130 = vpop.f32.mrb[0].mxu0
        %v3131 = vpop.f32.mrb[0].mxu0
        %3132 = vdwg.mxu0
        %v3134 = vsel %vm2617, %v2801, 0
        %v3137 = vsel %vm2813, %v1839, 0
        %3139 = vmatprep.subr.bf16.mxu0 0
        %3140 = vmatpush1.bf16.msra.mxu0 %v3137
        %3141 = vmatprep.subr.bf16.mxu0 0
        %3142 = vmatpush1.bf16.msra.mxu0 0
        %3143 = vmatprep.subr.bf16.mxu0 0
        %3144 = vmatpush1.bf16.msra.mxu0 0
        %3145 = vmatprep.subr.bf16.mxu0 0
        %3146 = vmatpush1.bf16.msra.mxu0 0
        %3147 = vmatprep.subr.bf16.mxu0 0
        %3148 = vmatpush1.bf16.msra.mxu0 0
        %3149 = vmatprep.subr.bf16.mxu0 0
        %3150 = vmatpush1.bf16.msra.mxu0 0
        %3151 = vmatprep.subr.bf16.mxu0 0
        %3152 = vmatpush1.bf16.msra.mxu0 0
        %3153 = vmatprep.subr.bf16.mxu0 0
        %3154 = vmatpush1.bf16.msra.mxu0 0
        %3155 = vmatprep.subr.bf16.mxu0 0
        %3156 = vmatpush1.bf16.msra.mxu0 0
        %3157 = vmatprep.subr.bf16.mxu0 0
        %3158 = vmatpush1.bf16.msra.mxu0 0
        %3159 = vmatprep.subr.bf16.mxu0 0
        %3160 = vmatpush1.bf16.msra.mxu0 0
        %3161 = vmatprep.subr.bf16.mxu0 0
        %3162 = vmatpush1.bf16.msra.mxu0 0
        %3163 = vmatprep.subr.bf16.mxu0 0
        %3164 = vmatpush1.bf16.msra.mxu0 0
        %3165 = vmatprep.subr.bf16.mxu0 0
        %3166 = vmatpush1.bf16.msra.mxu0 0
        %3167 = vmatprep.subr.bf16.mxu0 0
        %3168 = vmatpush1.bf16.msra.mxu0 0
        %3169 = vmatprep.subr.bf16.mxu0 0
        %3170 = vmatpush1.bf16.msra.mxu0 0
        %3171 = vmatprep.mubr.bf16.mxu0 0
        %3172 = vmatmul.mubr.bf16.gmra.mrb[0].mxu0 %v3134
        %v3173 = vpop.f32.mrb[0].mxu0
        %v3174 = vadd.f32 0.0, %v3173
        %v3175 = vpop.f32.mrb[0].mxu0
        %v3176 = vpop.f32.mrb[0].mxu0
        %v3177 = vpop.f32.mrb[0].mxu0
        %3178 = vdwg.mxu0
        %v3180 = vsel %vm2617, %v2802, 0
        %v3183 = vsel %vm2813, %v1842, 0
        %3185 = vmatprep.subr.bf16.mxu0 0
        %3186 = vmatpush1.bf16.msra.mxu0 %v3183
        %3187 = vmatprep.subr.bf16.mxu0 0
        %3188 = vmatpush1.bf16.msra.mxu0 0
        %3189 = vmatprep.subr.bf16.mxu0 0
        %3190 = vmatpush1.bf16.msra.mxu0 0
        %3191 = vmatprep.subr.bf16.mxu0 0
        %3192 = vmatpush1.bf16.msra.mxu0 0
        %3193 = vmatprep.subr.bf16.mxu0 0
        %3194 = vmatpush1.bf16.msra.mxu0 0
        %3195 = vmatprep.subr.bf16.mxu0 0
        %3196 = vmatpush1.bf16.msra.mxu0 0
        %3197 = vmatprep.subr.bf16.mxu0 0
        %3198 = vmatpush1.bf16.msra.mxu0 0
        %3199 = vmatprep.subr.bf16.mxu0 0
        %3200 = vmatpush1.bf16.msra.mxu0 0
        %3201 = vmatprep.subr.bf16.mxu0 0
        %3202 = vmatpush1.bf16.msra.mxu0 0
        %3203 = vmatprep.subr.bf16.mxu0 0
        %3204 = vmatpush1.bf16.msra.mxu0 0
        %3205 = vmatprep.subr.bf16.mxu0 0
        %3206 = vmatpush1.bf16.msra.mxu0 0
        %3207 = vmatprep.subr.bf16.mxu0 0
        %3208 = vmatpush1.bf16.msra.mxu0 0
        %3209 = vmatprep.subr.bf16.mxu0 0
        %3210 = vmatpush1.bf16.msra.mxu0 0
        %3211 = vmatprep.subr.bf16.mxu0 0
        %3212 = vmatpush1.bf16.msra.mxu0 0
        %3213 = vmatprep.subr.bf16.mxu0 0
        %3214 = vmatpush1.bf16.msra.mxu0 0
        %3215 = vmatprep.subr.bf16.mxu0 0
        %3216 = vmatpush1.bf16.msra.mxu0 0
        %3217 = vmatprep.mubr.bf16.mxu0 0
        %3218 = vmatmul.mubr.bf16.gmra.mrb[0].mxu0 %v3180
        %v3219 = vpop.f32.mrb[0].mxu0
        %v3220 = vadd.f32 0.0, %v3219
        %v3221 = vpop.f32.mrb[0].mxu0
        %v3222 = vpop.f32.mrb[0].mxu0
        %v3223 = vpop.f32.mrb[0].mxu0
        %3224 = vdwg.mxu0
        %v3226 = vsel %vm2617, %v2803, 0
        %v3229 = vsel %vm2813, %v1845, 0
        %3231 = vmatprep.subr.bf16.mxu0 0
        %3232 = vmatpush1.bf16.msra.mxu0 %v3229
        %3233 = vmatprep.subr.bf16.mxu0 0
        %3234 = vmatpush1.bf16.msra.mxu0 0
        %3235 = vmatprep.subr.bf16.mxu0 0
        %3236 = vmatpush1.bf16.msra.mxu0 0
        %3237 = vmatprep.subr.bf16.mxu0 0
        %3238 = vmatpush1.bf16.msra.mxu0 0
        %3239 = vmatprep.subr.bf16.mxu0 0
        %3240 = vmatpush1.bf16.msra.mxu0 0
        %3241 = vmatprep.subr.bf16.mxu0 0
        %3242 = vmatpush1.bf16.msra.mxu0 0
        %3243 = vmatprep.subr.bf16.mxu0 0
        %3244 = vmatpush1.bf16.msra.mxu0 0
        %3245 = vmatprep.subr.bf16.mxu0 0
        %3246 = vmatpush1.bf16.msra.mxu0 0
        %3247 = vmatprep.subr.bf16.mxu0 0
        %3248 = vmatpush1.bf16.msra.mxu0 0
        %3249 = vmatprep.subr.bf16.mxu0 0
        %3250 = vmatpush1.bf16.msra.mxu0 0
        %3251 = vmatprep.subr.bf16.mxu0 0
        %3252 = vmatpush1.bf16.msra.mxu0 0
        %3253 = vmatprep.subr.bf16.mxu0 0
        %3254 = vmatpush1.bf16.msra.mxu0 0
        %3255 = vmatprep.subr.bf16.mxu0 0
        %3256 = vmatpush1.bf16.msra.mxu0 0
        %3257 = vmatprep.subr.bf16.mxu0 0
        %3258 = vmatpush1.bf16.msra.mxu0 0
        %3259 = vmatprep.subr.bf16.mxu0 0
        %3260 = vmatpush1.bf16.msra.mxu0 0
        %3261 = vmatprep.subr.bf16.mxu0 0
        %3262 = vmatpush1.bf16.msra.mxu0 0
        %3263 = vmatprep.mubr.bf16.mxu0 0
        %3264 = vmatmul.mubr.bf16.gmra.mrb[0].mxu0 %v3226
        %v3265 = vpop.f32.mrb[0].mxu0
        %v3266 = vadd.f32 0.0, %v3265
        %v3267 = vpop.f32.mrb[0].mxu0
        %v3268 = vpop.f32.mrb[0].mxu0
        %v3269 = vpop.f32.mrb[0].mxu0
        %3270 = vdwg.mxu0
        %v3272 = vsel %vm2617, %v2804, 0
        %v3275 = vsel %vm2813, %v1848, 0
        %3277 = vmatprep.subr.bf16.mxu0 0
        %3278 = vmatpush1.bf16.msra.mxu0 %v3275
        %3279 = vmatprep.subr.bf16.mxu0 0
        %3280 = vmatpush1.bf16.msra.mxu0 0
        %3281 = vmatprep.subr.bf16.mxu0 0
        %3282 = vmatpush1.bf16.msra.mxu0 0
        %3283 = vmatprep.subr.bf16.mxu0 0
        %3284 = vmatpush1.bf16.msra.mxu0 0
        %3285 = vmatprep.subr.bf16.mxu0 0
        %3286 = vmatpush1.bf16.msra.mxu0 0
        %3287 = vmatprep.subr.bf16.mxu0 0
        %3288 = vmatpush1.bf16.msra.mxu0 0
        %3289 = vmatprep.subr.bf16.mxu0 0
        %3290 = vmatpush1.bf16.msra.mxu0 0
        %3291 = vmatprep.subr.bf16.mxu0 0
        %3292 = vmatpush1.bf16.msra.mxu0 0
        %3293 = vmatprep.subr.bf16.mxu0 0
        %3294 = vmatpush1.bf16.msra.mxu0 0
        %3295 = vmatprep.subr.bf16.mxu0 0
        %3296 = vmatpush1.bf16.msra.mxu0 0
        %3297 = vmatprep.subr.bf16.mxu0 0
        %3298 = vmatpush1.bf16.msra.mxu0 0
        %3299 = vmatprep.subr.bf16.mxu0 0
        %3300 = vmatpush1.bf16.msra.mxu0 0
        %3301 = vmatprep.subr.bf16.mxu0 0
        %3302 = vmatpush1.bf16.msra.mxu0 0
        %3303 = vmatprep.subr.bf16.mxu0 0
        %3304 = vmatpush1.bf16.msra.mxu0 0
        %3305 = vmatprep.subr.bf16.mxu0 0
        %3306 = vmatpush1.bf16.msra.mxu0 0
        %3307 = vmatprep.subr.bf16.mxu0 0
        %3308 = vmatpush1.bf16.msra.mxu0 0
        %3309 = vmatprep.mubr.bf16.mxu0 0
        %3310 = vmatmul.mubr.bf16.gmra.mrb[0].mxu0 %v3272
        %v3311 = vpop.f32.mrb[0].mxu0
        %v3312 = vadd.f32 0.0, %v3311
        %v3313 = vpop.f32.mrb[0].mxu0
        %v3314 = vpop.f32.mrb[0].mxu0
        %v3315 = vpop.f32.mrb[0].mxu0
        %3316 = vdwg.mxu0
        %v3318 = vsel %vm2617, %v2805, 0
        %v3321 = vsel %vm2813, %v1851, 0
        %3323 = vmatprep.subr.bf16.mxu0 0
        %3324 = vmatpush1.bf16.msra.mxu0 %v3321
        %3325 = vmatprep.subr.bf16.mxu0 0
        %3326 = vmatpush1.bf16.msra.mxu0 0
        %3327 = vmatprep.subr.bf16.mxu0 0
        %3328 = vmatpush1.bf16.msra.mxu0 0
        %3329 = vmatprep.subr.bf16.mxu0 0
        %3330 = vmatpush1.bf16.msra.mxu0 0
        %3331 = vmatprep.subr.bf16.mxu0 0
        %3332 = vmatpush1.bf16.msra.mxu0 0
        %3333 = vmatprep.subr.bf16.mxu0 0
        %3334 = vmatpush1.bf16.msra.mxu0 0
        %3335 = vmatprep.subr.bf16.mxu0 0
        %3336 = vmatpush1.bf16.msra.mxu0 0
        %3337 = vmatprep.subr.bf16.mxu0 0
        %3338 = vmatpush1.bf16.msra.mxu0 0
        %3339 = vmatprep.subr.bf16.mxu0 0
        %3340 = vmatpush1.bf16.msra.mxu0 0
        %3341 = vmatprep.subr.bf16.mxu0 0
        %3342 = vmatpush1.bf16.msra.mxu0 0
        %3343 = vmatprep.subr.bf16.mxu0 0
        %3344 = vmatpush1.bf16.msra.mxu0 0
        %3345 = vmatprep.subr.bf16.mxu0 0
        %3346 = vmatpush1.bf16.msra.mxu0 0
        %3347 = vmatprep.subr.bf16.mxu0 0
        %3348 = vmatpush1.bf16.msra.mxu0 0
        %3349 = vmatprep.subr.bf16.mxu0 0
        %3350 = vmatpush1.bf16.msra.mxu0 0
        %3351 = vmatprep.subr.bf16.mxu0 0
        %3352 = vmatpush1.bf16.msra.mxu0 0
        %3353 = vmatprep.subr.bf16.mxu0 0
        %3354 = vmatpush1.bf16.msra.mxu0 0
        %3355 = vmatprep.mubr.bf16.mxu0 0
        %3356 = vmatmul.mubr.bf16.gmra.mrb[0].mxu0 %v3318
        %v3357 = vpop.f32.mrb[0].mxu0
        %v3358 = vadd.f32 0.0, %v3357
        %v3359 = vpop.f32.mrb[0].mxu0
        %v3360 = vpop.f32.mrb[0].mxu0
        %v3361 = vpop.f32.mrb[0].mxu0
        %3362 = vdwg.mxu0
        %v3364 = vsel %vm2617, %v2806, 0
        %v3367 = vsel %vm2813, %v1854, 0
        %3369 = vmatprep.subr.bf16.mxu0 0
        %3370 = vmatpush1.bf16.msra.mxu0 %v3367
        %3371 = vmatprep.subr.bf16.mxu0 0
        %3372 = vmatpush1.bf16.msra.mxu0 0
        %3373 = vmatprep.subr.bf16.mxu0 0
        %3374 = vmatpush1.bf16.msra.mxu0 0
        %3375 = vmatprep.subr.bf16.mxu0 0
        %3376 = vmatpush1.bf16.msra.mxu0 0
        %3377 = vmatprep.subr.bf16.mxu0 0
        %3378 = vmatpush1.bf16.msra.mxu0 0
        %3379 = vmatprep.subr.bf16.mxu0 0
        %3380 = vmatpush1.bf16.msra.mxu0 0
        %3381 = vmatprep.subr.bf16.mxu0 0
        %3382 = vmatpush1.bf16.msra.mxu0 0
        %3383 = vmatprep.subr.bf16.mxu0 0
        %3384 = vmatpush1.bf16.msra.mxu0 0
        %3385 = vmatprep.subr.bf16.mxu0 0
        %3386 = vmatpush1.bf16.msra.mxu0 0
        %3387 = vmatprep.subr.bf16.mxu0 0
        %3388 = vmatpush1.bf16.msra.mxu0 0
        %3389 = vmatprep.subr.bf16.mxu0 0
        %3390 = vmatpush1.bf16.msra.mxu0 0
        %3391 = vmatprep.subr.bf16.mxu0 0
        %3392 = vmatpush1.bf16.msra.mxu0 0
        %3393 = vmatprep.subr.bf16.mxu0 0
        %3394 = vmatpush1.bf16.msra.mxu0 0
        %3395 = vmatprep.subr.bf16.mxu0 0
        %3396 = vmatpush1.bf16.msra.mxu0 0
        %3397 = vmatprep.subr.bf16.mxu0 0
        %3398 = vmatpush1.bf16.msra.mxu0 0
        %3399 = vmatprep.subr.bf16.mxu0 0
        %3400 = vmatpush1.bf16.msra.mxu0 0
        %3401 = vmatprep.mubr.bf16.mxu0 0
        %3402 = vmatmul.mubr.bf16.gmra.mrb[0].mxu0 %v3364
        %v3403 = vpop.f32.mrb[0].mxu0
        %v3404 = vadd.f32 0.0, %v3403
        %v3405 = vpop.f32.mrb[0].mxu0
        %v3406 = vpop.f32.mrb[0].mxu0
        %v3407 = vpop.f32.mrb[0].mxu0
        %3408 = vdwg.mxu0
        %v3410 = vsel %vm2617, %v2807, 0
        %v3413 = vsel %vm2813, %v1857, 0
        %3415 = vmatprep.subr.bf16.mxu0 0
        %3416 = vmatpush1.bf16.msra.mxu0 %v3413
        %3417 = vmatprep.subr.bf16.mxu0 0
        %3418 = vmatpush1.bf16.msra.mxu0 0
        %3419 = vmatprep.subr.bf16.mxu0 0
        %3420 = vmatpush1.bf16.msra.mxu0 0
        %3421 = vmatprep.subr.bf16.mxu0 0
        %3422 = vmatpush1.bf16.msra.mxu0 0
        %3423 = vmatprep.subr.bf16.mxu0 0
        %3424 = vmatpush1.bf16.msra.mxu0 0
        %3425 = vmatprep.subr.bf16.mxu0 0
        %3426 = vmatpush1.bf16.msra.mxu0 0
        %3427 = vmatprep.subr.bf16.mxu0 0
        %3428 = vmatpush1.bf16.msra.mxu0 0
        %3429 = vmatprep.subr.bf16.mxu0 0
        %3430 = vmatpush1.bf16.msra.mxu0 0
        %3431 = vmatprep.subr.bf16.mxu0 0
        %3432 = vmatpush1.bf16.msra.mxu0 0
        %3433 = vmatprep.subr.bf16.mxu0 0
        %3434 = vmatpush1.bf16.msra.mxu0 0
        %3435 = vmatprep.subr.bf16.mxu0 0
        %3436 = vmatpush1.bf16.msra.mxu0 0
        %3437 = vmatprep.subr.bf16.mxu0 0
        %3438 = vmatpush1.bf16.msra.mxu0 0
        %3439 = vmatprep.subr.bf16.mxu0 0
        %3440 = vmatpush1.bf16.msra.mxu0 0
        %3441 = vmatprep.subr.bf16.mxu0 0
        %3442 = vmatpush1.bf16.msra.mxu0 0
        %3443 = vmatprep.subr.bf16.mxu0 0
        %3444 = vmatpush1.bf16.msra.mxu0 0
        %3445 = vmatprep.subr.bf16.mxu0 0
        %3446 = vmatpush1.bf16.msra.mxu0 0
        %3447 = vmatprep.mubr.bf16.mxu0 0
        %3448 = vmatmul.mubr.bf16.gmra.mrb[0].mxu0 %v3410
        %v3449 = vpop.f32.mrb[0].mxu0
        %v3450 = vadd.f32 0.0, %v3449
        %v3451 = vpop.f32.mrb[0].mxu0
        %v3452 = vpop.f32.mrb[0].mxu0
        %v3453 = vpop.f32.mrb[0].mxu0
        %3454 = vdwg.mxu0
        %v3456 = vsel %vm2617, %v2808, 0
        %v3459 = vsel %vm2813, %v1860, 0
        %3461 = vmatprep.subr.bf16.mxu0 0
        %3462 = vmatpush1.bf16.msra.mxu0 %v3459
        %3463 = vmatprep.subr.bf16.mxu0 0
        %3464 = vmatpush1.bf16.msra.mxu0 0
        %3465 = vmatprep.subr.bf16.mxu0 0
        %3466 = vmatpush1.bf16.msra.mxu0 0
        %3467 = vmatprep.subr.bf16.mxu0 0
        %3468 = vmatpush1.bf16.msra.mxu0 0
        %3469 = vmatprep.subr.bf16.mxu0 0
        %3470 = vmatpush1.bf16.msra.mxu0 0
        %3471 = vmatprep.subr.bf16.mxu0 0
        %3472 = vmatpush1.bf16.msra.mxu0 0
        %3473 = vmatprep.subr.bf16.mxu0 0
        %3474 = vmatpush1.bf16.msra.mxu0 0
        %3475 = vmatprep.subr.bf16.mxu0 0
        %3476 = vmatpush1.bf16.msra.mxu0 0
        %3477 = vmatprep.subr.bf16.mxu0 0
        %3478 = vmatpush1.bf16.msra.mxu0 0
        %3479 = vmatprep.subr.bf16.mxu0 0
        %3480 = vmatpush1.bf16.msra.mxu0 0
        %3481 = vmatprep.subr.bf16.mxu0 0
        %3482 = vmatpush1.bf16.msra.mxu0 0
        %3483 = vmatprep.subr.bf16.mxu0 0
        %3484 = vmatpush1.bf16.msra.mxu0 0
        %3485 = vmatprep.subr.bf16.mxu0 0
        %3486 = vmatpush1.bf16.msra.mxu0 0
        %3487 = vmatprep.subr.bf16.mxu0 0
        %3488 = vmatpush1.bf16.msra.mxu0 0
        %3489 = vmatprep.subr.bf16.mxu0 0
        %3490 = vmatpush1.bf16.msra.mxu0 0
        %3491 = vmatprep.subr.bf16.mxu0 0
        %3492 = vmatpush1.bf16.msra.mxu0 0
        %3493 = vmatprep.mubr.bf16.mxu0 0
        %3494 = vmatmul.mubr.bf16.gmra.mrb[0].mxu0 %v3456
        %v3495 = vpop.f32.mrb[0].mxu0
        %v3496 = vadd.f32 0.0, %v3495
        %v3497 = vpop.f32.mrb[0].mxu0
        %v3498 = vpop.f32.mrb[0].mxu0
        %v3499 = vpop.f32.mrb[0].mxu0
        %3500 = vdwg.mxu0
        %v3502 = vsel %vm2617, %v2809, 0
        %v3505 = vsel %vm2813, %v1863, 0
        %3507 = vmatprep.subr.bf16.mxu0 0
        %3508 = vmatpush1.bf16.msra.mxu0 %v3505
        %3509 = vmatprep.subr.bf16.mxu0 0
        %3510 = vmatpush1.bf16.msra.mxu0 0
        %3511 = vmatprep.subr.bf16.mxu0 0
        %3512 = vmatpush1.bf16.msra.mxu0 0
        %3513 = vmatprep.subr.bf16.mxu0 0
        %3514 = vmatpush1.bf16.msra.mxu0 0
        %3515 = vmatprep.subr.bf16.mxu0 0
        %3516 = vmatpush1.bf16.msra.mxu0 0
        %3517 = vmatprep.subr.bf16.mxu0 0
        %3518 = vmatpush1.bf16.msra.mxu0 0
        %3519 = vmatprep.subr.bf16.mxu0 0
        %3520 = vmatpush1.bf16.msra.mxu0 0
        %3521 = vmatprep.subr.bf16.mxu0 0
        %3522 = vmatpush1.bf16.msra.mxu0 0
        %3523 = vmatprep.subr.bf16.mxu0 0
        %3524 = vmatpush1.bf16.msra.mxu0 0
        %3525 = vmatprep.subr.bf16.mxu0 0
        %3526 = vmatpush1.bf16.msra.mxu0 0
        %3527 = vmatprep.subr.bf16.mxu0 0
        %3528 = vmatpush1.bf16.msra.mxu0 0
        %3529 = vmatprep.subr.bf16.mxu0 0
        %3530 = vmatpush1.bf16.msra.mxu0 0
        %3531 = vmatprep.subr.bf16.mxu0 0
        %3532 = vmatpush1.bf16.msra.mxu0 0
        %3533 = vmatprep.subr.bf16.mxu0 0
        %3534 = vmatpush1.bf16.msra.mxu0 0
        %3535 = vmatprep.subr.bf16.mxu0 0
        %3536 = vmatpush1.bf16.msra.mxu0 0
        %3537 = vmatprep.subr.bf16.mxu0 0
        %3538 = vmatpush1.bf16.msra.mxu0 0
        %3539 = vmatprep.mubr.bf16.mxu0 0
        %3540 = vmatmul.mubr.bf16.gmra.mrb[0].mxu0 %v3502
        %v3541 = vpop.f32.mrb[0].mxu0
        %v3542 = vadd.f32 0.0, %v3541
        %v3543 = vpop.f32.mrb[0].mxu0
        %v3544 = vpop.f32.mrb[0].mxu0
        %v3545 = vpop.f32.mrb[0].mxu0
        %3546 = vdwg.mxu0
        %v3547 = vcombine.low %v2852, %v2944
        %v3548 = vcombine.high %v2852, %v2944
        %v3550 = vunpack.c.l.s4 1983009808
        %v3551 = vunpack.c.0.s8 %v3550
        %v3552 = vlaneseq
        %v3553 = vshrl.u32 %v3552, 7
        %v3554 = vsub.s32 %v3551, %v3553
        %v3555 = vrot.slane %v3547, %v3554
        %v3557 = vunpack.c.l.s4 1983009808
        %v3558 = vunpack.c.0.s8 %v3557
        %v3559 = vlaneseq
        %v3560 = vshrl.u32 %v3559, 7
        %v3561 = vsub.s32 %v3558, %v3560
        %v3562 = vrot.slane %v3548, %v3561
        %v3563 = vcombine.low %v2898, %v2990
        %v3564 = vcombine.high %v2898, %v2990
        %v3566 = vunpack.c.l.s4 1983009808
        %v3567 = vunpack.c.0.s8 %v3566
        %v3568 = vlaneseq
        %v3569 = vshrl.u32 %v3568, 7
        %v3570 = vsub.s32 %v3567, %v3569
        %v3571 = vrot.slane %v3563, %v3570
        %v3573 = vunpack.c.l.s4 1983009808
        %v3574 = vunpack.c.0.s8 %v3573
        %v3575 = vlaneseq
        %v3576 = vshrl.u32 %v3575, 7
        %v3577 = vsub.s32 %v3574, %v3576
        %v3578 = vrot.slane %v3564, %v3577
        %v3579 = vcombine.low %v3036, %v3128
        %v3580 = vcombine.high %v3036, %v3128
        %v3582 = vunpack.c.l.s4 1983009808
        %v3583 = vunpack.c.0.s8 %v3582
        %v3584 = vlaneseq
        %v3585 = vshrl.u32 %v3584, 7
        %v3586 = vsub.s32 %v3583, %v3585
        %v3587 = vrot.slane %v3579, %v3586
        %v3589 = vunpack.c.l.s4 1983009808
        %v3590 = vunpack.c.0.s8 %v3589
        %v3591 = vlaneseq
        %v3592 = vshrl.u32 %v3591, 7
        %v3593 = vsub.s32 %v3590, %v3592
        %v3594 = vrot.slane %v3580, %v3593
        %v3595 = vcombine.low %v3082, %v3174
        %v3596 = vcombine.high %v3082, %v3174
        %v3598 = vunpack.c.l.s4 1983009808
        %v3599 = vunpack.c.0.s8 %v3598
        %v3600 = vlaneseq
        %v3601 = vshrl.u32 %v3600, 7
        %v3602 = vsub.s32 %v3599, %v3601
        %v3603 = vrot.slane %v3595, %v3602
        %v3605 = vunpack.c.l.s4 1983009808
        %v3606 = vunpack.c.0.s8 %v3605
        %v3607 = vlaneseq
        %v3608 = vshrl.u32 %v3607, 7
        %v3609 = vsub.s32 %v3606, %v3608
        %v3610 = vrot.slane %v3596, %v3609
        %v3611 = vcombine.low %v3555, %v3571
        %v3612 = vcombine.high %v3555, %v3571
        %v3614 = vunpack.c.l.s4 1934713408
        %v3615 = vunpack.c.0.s8 %v3614
        %v3616 = vlaneseq
        %v3617 = vshrl.u32 %v3616, 7
        %v3618 = vsub.s32 %v3615, %v3617
        %v3619 = vrot.slane %v3611, %v3618
        %v3621 = vunpack.c.l.s4 1934713408
        %v3622 = vunpack.c.0.s8 %v3621
        %v3623 = vlaneseq
        %v3624 = vshrl.u32 %v3623, 7
        %v3625 = vsub.s32 %v3622, %v3624
        %v3626 = vrot.slane %v3612, %v3625
        %v3627 = vcombine.low %v3562, %v3578
        %v3628 = vcombine.high %v3562, %v3578
        %v3630 = vunpack.c.l.s4 1934713408
        %v3631 = vunpack.c.0.s8 %v3630
        %v3632 = vlaneseq
        %v3633 = vshrl.u32 %v3632, 7
        %v3634 = vsub.s32 %v3631, %v3633
        %v3635 = vrot.slane %v3627, %v3634
        %v3637 = vunpack.c.l.s4 1934713408
        %v3638 = vunpack.c.0.s8 %v3637
        %v3639 = vlaneseq
        %v3640 = vshrl.u32 %v3639, 7
        %v3641 = vsub.s32 %v3638, %v3640
        %v3642 = vrot.slane %v3628, %v3641
        %v3643 = vcombine.low %v3587, %v3603
        %v3644 = vcombine.high %v3587, %v3603
        %v3646 = vunpack.c.l.s4 1934713408
        %v3647 = vunpack.c.0.s8 %v3646
        %v3648 = vlaneseq
        %v3649 = vshrl.u32 %v3648, 7
        %v3650 = vsub.s32 %v3647, %v3649
        %v3651 = vrot.slane %v3643, %v3650
        %v3653 = vunpack.c.l.s4 1934713408
        %v3654 = vunpack.c.0.s8 %v3653
        %v3655 = vlaneseq
        %v3656 = vshrl.u32 %v3655, 7
        %v3657 = vsub.s32 %v3654, %v3656
        %v3658 = vrot.slane %v3644, %v3657
        %v3659 = vcombine.low %v3594, %v3610
        %v3660 = vcombine.high %v3594, %v3610
        %v3662 = vunpack.c.l.s4 1934713408
        %v3663 = vunpack.c.0.s8 %v3662
        %v3664 = vlaneseq
        %v3665 = vshrl.u32 %v3664, 7
        %v3666 = vsub.s32 %v3663, %v3665
        %v3667 = vrot.slane %v3659, %v3666
        %v3669 = vunpack.c.l.s4 1934713408
        %v3670 = vunpack.c.0.s8 %v3669
        %v3671 = vlaneseq
        %v3672 = vshrl.u32 %v3671, 7
        %v3673 = vsub.s32 %v3670, %v3672
        %v3674 = vrot.slane %v3660, %v3673
        %v3675 = vcombine.low %v3619, %v3651
        %v3676 = vcombine.high %v3619, %v3651
        %v3677 = vcombine.low %v3626, %v3658
        %v3678 = vcombine.high %v3626, %v3658
        %v3679 = vcombine.low %v3635, %v3667
        %v3680 = vcombine.high %v3635, %v3667
        %v3681 = vcombine.low %v3642, %v3674
        %v3682 = vcombine.high %v3642, %v3674
        %v3683 = vcombine.low %v3220, %v3312
        %v3684 = vcombine.high %v3220, %v3312
        %v3686 = vunpack.c.l.s4 1983009808
        %v3687 = vunpack.c.0.s8 %v3686
        %v3688 = vlaneseq
        %v3689 = vshrl.u32 %v3688, 7
        %v3690 = vsub.s32 %v3687, %v3689
        %v3691 = vrot.slane %v3683, %v3690
        %v3693 = vunpack.c.l.s4 1983009808
        %v3694 = vunpack.c.0.s8 %v3693
        %v3695 = vlaneseq
        %v3696 = vshrl.u32 %v3695, 7
        %v3697 = vsub.s32 %v3694, %v3696
        %v3698 = vrot.slane %v3684, %v3697
        %v3699 = vcombine.low %v3266, %v3358
        %v3700 = vcombine.high %v3266, %v3358
        %v3702 = vunpack.c.l.s4 1983009808
        %v3703 = vunpack.c.0.s8 %v3702
        %v3704 = vlaneseq
        %v3705 = vshrl.u32 %v3704, 7
        %v3706 = vsub.s32 %v3703, %v3705
        %v3707 = vrot.slane %v3699, %v3706
        %v3709 = vunpack.c.l.s4 1983009808
        %v3710 = vunpack.c.0.s8 %v3709
        %v3711 = vlaneseq
        %v3712 = vshrl.u32 %v3711, 7
        %v3713 = vsub.s32 %v3710, %v3712
        %v3714 = vrot.slane %v3700, %v3713
        %v3715 = vcombine.low %v3404, %v3496
        %v3716 = vcombine.high %v3404, %v3496
        %v3718 = vunpack.c.l.s4 1983009808
        %v3719 = vunpack.c.0.s8 %v3718
        %v3720 = vlaneseq
        %v3721 = vshrl.u32 %v3720, 7
        %v3722 = vsub.s32 %v3719, %v3721
        %v3723 = vrot.slane %v3715, %v3722
        %v3725 = vunpack.c.l.s4 1983009808
        %v3726 = vunpack.c.0.s8 %v3725
        %v3727 = vlaneseq
        %v3728 = vshrl.u32 %v3727, 7
        %v3729 = vsub.s32 %v3726, %v3728
        %v3730 = vrot.slane %v3716, %v3729
        %v3731 = vcombine.low %v3450, %v3542
        %v3732 = vcombine.high %v3450, %v3542
        %v3734 = vunpack.c.l.s4 1983009808
        %v3735 = vunpack.c.0.s8 %v3734
        %v3736 = vlaneseq
        %v3737 = vshrl.u32 %v3736, 7
        %v3738 = vsub.s32 %v3735, %v3737
        %v3739 = vrot.slane %v3731, %v3738
        %v3741 = vunpack.c.l.s4 1983009808
        %v3742 = vunpack.c.0.s8 %v3741
        %v3743 = vlaneseq
        %v3744 = vshrl.u32 %v3743, 7
        %v3745 = vsub.s32 %v3742, %v3744
        %v3746 = vrot.slane %v3732, %v3745
        %v3747 = vcombine.low %v3691, %v3707
        %v3748 = vcombine.high %v3691, %v3707
        %v3750 = vunpack.c.l.s4 1934713408
        %v3751 = vunpack.c.0.s8 %v3750
        %v3752 = vlaneseq
        %v3753 = vshrl.u32 %v3752, 7
        %v3754 = vsub.s32 %v3751, %v3753
        %v3755 = vrot.slane %v3747, %v3754
        %v3757 = vunpack.c.l.s4 1934713408
        %v3758 = vunpack.c.0.s8 %v3757
        %v3759 = vlaneseq
        %v3760 = vshrl.u32 %v3759, 7
        %v3761 = vsub.s32 %v3758, %v3760
        %v3762 = vrot.slane %v3748, %v3761
        %v3763 = vcombine.low %v3698, %v3714
        %v3764 = vcombine.high %v3698, %v3714
        %v3766 = vunpack.c.l.s4 1934713408
        %v3767 = vunpack.c.0.s8 %v3766
        %v3768 = vlaneseq
        %v3769 = vshrl.u32 %v3768, 7
        %v3770 = vsub.s32 %v3767, %v3769
        %v3771 = vrot.slane %v3763, %v3770
        %v3773 = vunpack.c.l.s4 1934713408
        %v3774 = vunpack.c.0.s8 %v3773
        %v3775 = vlaneseq
        %v3776 = vshrl.u32 %v3775, 7
        %v3777 = vsub.s32 %v3774, %v3776
        %v3778 = vrot.slane %v3764, %v3777
        %v3779 = vcombine.low %v3723, %v3739
        %v3780 = vcombine.high %v3723, %v3739
        %v3782 = vunpack.c.l.s4 1934713408
        %v3783 = vunpack.c.0.s8 %v3782
        %v3784 = vlaneseq
        %v3785 = vshrl.u32 %v3784, 7
        %v3786 = vsub.s32 %v3783, %v3785
        %v3787 = vrot.slane %v3779, %v3786
        %v3789 = vunpack.c.l.s4 1934713408
        %v3790 = vunpack.c.0.s8 %v3789
        %v3791 = vlaneseq
        %v3792 = vshrl.u32 %v3791, 7
        %v3793 = vsub.s32 %v3790, %v3792
        %v3794 = vrot.slane %v3780, %v3793
        %v3795 = vcombine.low %v3730, %v3746
        %v3796 = vcombine.high %v3730, %v3746
        %v3798 = vunpack.c.l.s4 1934713408
        %v3799 = vunpack.c.0.s8 %v3798
        %v3800 = vlaneseq
        %v3801 = vshrl.u32 %v3800, 7
        %v3802 = vsub.s32 %v3799, %v3801
        %v3803 = vrot.slane %v3795, %v3802
        %v3805 = vunpack.c.l.s4 1934713408
        %v3806 = vunpack.c.0.s8 %v3805
        %v3807 = vlaneseq
        %v3808 = vshrl.u32 %v3807, 7
        %v3809 = vsub.s32 %v3806, %v3808
        %v3810 = vrot.slane %v3796, %v3809
        %v3811 = vcombine.low %v3755, %v3787
        %v3812 = vcombine.high %v3755, %v3787
        %v3813 = vcombine.low %v3762, %v3794
        %v3814 = vcombine.high %v3762, %v3794
        %v3815 = vcombine.low %v3771, %v3803
        %v3816 = vcombine.high %v3771, %v3803
        %v3817 = vcombine.low %v3778, %v3810
        %v3818 = vcombine.high %v3778, %v3810
        %v3819 = vcombine.low %v3675, %v3677
        %v3820 = vcombine.high %v3675, %v3677
        %v3822 = vunpack.c.l.s4 1983009808
        %v3823 = vunpack.c.0.s8 %v3822
        %v3824 = vlaneseq
        %v3825 = vshrl.u32 %v3824, 7
        %v3826 = vsub.s32 %v3823, %v3825
        %v3827 = vrot.slane %v3819, %v3826
        %v3829 = vunpack.c.l.s4 1983009808
        %v3830 = vunpack.c.0.s8 %v3829
        %v3831 = vlaneseq
        %v3832 = vshrl.u32 %v3831, 7
        %v3833 = vsub.s32 %v3830, %v3832
        %v3834 = vrot.slane %v3820, %v3833
        %v3835 = vcombine.low %v3676, %v3678
        %v3836 = vcombine.high %v3676, %v3678
        %v3838 = vunpack.c.l.s4 1983009808
        %v3839 = vunpack.c.0.s8 %v3838
        %v3840 = vlaneseq
        %v3841 = vshrl.u32 %v3840, 7
        %v3842 = vsub.s32 %v3839, %v3841
        %v3843 = vrot.slane %v3835, %v3842
        %v3845 = vunpack.c.l.s4 1983009808
        %v3846 = vunpack.c.0.s8 %v3845
        %v3847 = vlaneseq
        %v3848 = vshrl.u32 %v3847, 7
        %v3849 = vsub.s32 %v3846, %v3848
        %v3850 = vrot.slane %v3836, %v3849
        %v3851 = vcombine.low %v3679, %v3681
        %v3852 = vcombine.high %v3679, %v3681
        %v3854 = vunpack.c.l.s4 1983009808
        %v3855 = vunpack.c.0.s8 %v3854
        %v3856 = vlaneseq
        %v3857 = vshrl.u32 %v3856, 7
        %v3858 = vsub.s32 %v3855, %v3857
        %v3859 = vrot.slane %v3851, %v3858
        %v3861 = vunpack.c.l.s4 1983009808
        %v3862 = vunpack.c.0.s8 %v3861
        %v3863 = vlaneseq
        %v3864 = vshrl.u32 %v3863, 7
        %v3865 = vsub.s32 %v3862, %v3864
        %v3866 = vrot.slane %v3852, %v3865
        %v3867 = vcombine.low %v3680, %v3682
        %v3868 = vcombine.high %v3680, %v3682
        %v3870 = vunpack.c.l.s4 1983009808
        %v3871 = vunpack.c.0.s8 %v3870
        %v3872 = vlaneseq
        %v3873 = vshrl.u32 %v3872, 7
        %v3874 = vsub.s32 %v3871, %v3873
        %v3875 = vrot.slane %v3867, %v3874
        %v3877 = vunpack.c.l.s4 1983009808
        %v3878 = vunpack.c.0.s8 %v3877
        %v3879 = vlaneseq
        %v3880 = vshrl.u32 %v3879, 7
        %v3881 = vsub.s32 %v3878, %v3880
        %v3882 = vrot.slane %v3868, %v3881
        %v3883 = vcombine.low %v3827, %v3843
        %v3884 = vcombine.high %v3827, %v3843
        %v3886 = vunpack.c.l.s4 1934713408
        %v3887 = vunpack.c.0.s8 %v3886
        %v3888 = vlaneseq
        %v3889 = vshrl.u32 %v3888, 7
        %v3890 = vsub.s32 %v3887, %v3889
        %v3891 = vrot.slane %v3883, %v3890
        %v3893 = vunpack.c.l.s4 1934713408
        %v3894 = vunpack.c.0.s8 %v3893
        %v3895 = vlaneseq
        %v3896 = vshrl.u32 %v3895, 7
        %v3897 = vsub.s32 %v3894, %v3896
        %v3898 = vrot.slane %v3884, %v3897
        %v3899 = vcombine.low %v3834, %v3850
        %v3900 = vcombine.high %v3834, %v3850
        %v3902 = vunpack.c.l.s4 1934713408
        %v3903 = vunpack.c.0.s8 %v3902
        %v3904 = vlaneseq
        %v3905 = vshrl.u32 %v3904, 7
        %v3906 = vsub.s32 %v3903, %v3905
        %v3907 = vrot.slane %v3899, %v3906
        %v3909 = vunpack.c.l.s4 1934713408
        %v3910 = vunpack.c.0.s8 %v3909
        %v3911 = vlaneseq
        %v3912 = vshrl.u32 %v3911, 7
        %v3913 = vsub.s32 %v3910, %v3912
        %v3914 = vrot.slane %v3900, %v3913
        %v3915 = vcombine.low %v3859, %v3875
        %v3916 = vcombine.high %v3859, %v3875
        %v3918 = vunpack.c.l.s4 1934713408
        %v3919 = vunpack.c.0.s8 %v3918
        %v3920 = vlaneseq
        %v3921 = vshrl.u32 %v3920, 7
        %v3922 = vsub.s32 %v3919, %v3921
        %v3923 = vrot.slane %v3915, %v3922
        %v3925 = vunpack.c.l.s4 1934713408
        %v3926 = vunpack.c.0.s8 %v3925
        %v3927 = vlaneseq
        %v3928 = vshrl.u32 %v3927, 7
        %v3929 = vsub.s32 %v3926, %v3928
        %v3930 = vrot.slane %v3916, %v3929
        %v3931 = vcombine.low %v3866, %v3882
        %v3932 = vcombine.high %v3866, %v3882
        %v3934 = vunpack.c.l.s4 1934713408
        %v3935 = vunpack.c.0.s8 %v3934
        %v3936 = vlaneseq
        %v3937 = vshrl.u32 %v3936, 7
        %v3938 = vsub.s32 %v3935, %v3937
        %v3939 = vrot.slane %v3931, %v3938
        %v3941 = vunpack.c.l.s4 1934713408
        %v3942 = vunpack.c.0.s8 %v3941
        %v3943 = vlaneseq
        %v3944 = vshrl.u32 %v3943, 7
        %v3945 = vsub.s32 %v3942, %v3944
        %v3946 = vrot.slane %v3932, %v3945
        %v3947 = vcombine.low %v3891, %v3923
        %v3948 = vcombine.high %v3891, %v3923
        %v3949 = vcombine.low %v3898, %v3930
        %v3950 = vcombine.high %v3898, %v3930
        %v3951 = vcombine.low %v3907, %v3939
        %v3952 = vcombine.high %v3907, %v3939
        %v3953 = vcombine.low %v3914, %v3946
        %v3954 = vcombine.high %v3914, %v3946
        %v3955 = vcombine.low %v3811, %v3813
        %v3956 = vcombine.high %v3811, %v3813
        %v3958 = vunpack.c.l.s4 1983009808
        %v3959 = vunpack.c.0.s8 %v3958
        %v3960 = vlaneseq
        %v3961 = vshrl.u32 %v3960, 7
        %v3962 = vsub.s32 %v3959, %v3961
        %v3963 = vrot.slane %v3955, %v3962
        %v3965 = vunpack.c.l.s4 1983009808
        %v3966 = vunpack.c.0.s8 %v3965
        %v3967 = vlaneseq
        %v3968 = vshrl.u32 %v3967, 7
        %v3969 = vsub.s32 %v3966, %v3968
        %v3970 = vrot.slane %v3956, %v3969
        %v3971 = vcombine.low %v3812, %v3814
        %v3972 = vcombine.high %v3812, %v3814
        %v3974 = vunpack.c.l.s4 1983009808
        %v3975 = vunpack.c.0.s8 %v3974
        %v3976 = vlaneseq
        %v3977 = vshrl.u32 %v3976, 7
        %v3978 = vsub.s32 %v3975, %v3977
        %v3979 = vrot.slane %v3971, %v3978
        %v3981 = vunpack.c.l.s4 1983009808
        %v3982 = vunpack.c.0.s8 %v3981
        %v3983 = vlaneseq
        %v3984 = vshrl.u32 %v3983, 7
        %v3985 = vsub.s32 %v3982, %v3984
        %v3986 = vrot.slane %v3972, %v3985
        %v3987 = vcombine.low %v3815, %v3817
        %v3988 = vcombine.high %v3815, %v3817
        %v3990 = vunpack.c.l.s4 1983009808
        %v3991 = vunpack.c.0.s8 %v3990
        %v3992 = vlaneseq
        %v3993 = vshrl.u32 %v3992, 7
        %v3994 = vsub.s32 %v3991, %v3993
        %v3995 = vrot.slane %v3987, %v3994
        %v3997 = vunpack.c.l.s4 1983009808
        %v3998 = vunpack.c.0.s8 %v3997
        %v3999 = vlaneseq
        %v4000 = vshrl.u32 %v3999, 7
        %v4001 = vsub.s32 %v3998, %v4000
        %v4002 = vrot.slane %v3988, %v4001
        %v4003 = vcombine.low %v3816, %v3818
        %v4004 = vcombine.high %v3816, %v3818
        %v4006 = vunpack.c.l.s4 1983009808
        %v4007 = vunpack.c.0.s8 %v4006
        %v4008 = vlaneseq
        %v4009 = vshrl.u32 %v4008, 7
        %v4010 = vsub.s32 %v4007, %v4009
        %v4011 = vrot.slane %v4003, %v4010
        %v4013 = vunpack.c.l.s4 1983009808
        %v4014 = vunpack.c.0.s8 %v4013
        %v4015 = vlaneseq
        %v4016 = vshrl.u32 %v4015, 7
        %v4017 = vsub.s32 %v4014, %v4016
        %v4018 = vrot.slane %v4004, %v4017
        %v4019 = vcombine.low %v3963, %v3979
        %v4020 = vcombine.high %v3963, %v3979
        %v4022 = vunpack.c.l.s4 1934713408
        %v4023 = vunpack.c.0.s8 %v4022
        %v4024 = vlaneseq
        %v4025 = vshrl.u32 %v4024, 7
        %v4026 = vsub.s32 %v4023, %v4025
        %v4027 = vrot.slane %v4019, %v4026
        %v4029 = vunpack.c.l.s4 1934713408
        %v4030 = vunpack.c.0.s8 %v4029
        %v4031 = vlaneseq
        %v4032 = vshrl.u32 %v4031, 7
        %v4033 = vsub.s32 %v4030, %v4032
        %v4034 = vrot.slane %v4020, %v4033
        %v4035 = vcombine.low %v3970, %v3986
        %v4036 = vcombine.high %v3970, %v3986
        %v4038 = vunpack.c.l.s4 1934713408
        %v4039 = vunpack.c.0.s8 %v4038
        %v4040 = vlaneseq
        %v4041 = vshrl.u32 %v4040, 7
        %v4042 = vsub.s32 %v4039, %v4041
        %v4043 = vrot.slane %v4035, %v4042
        %v4045 = vunpack.c.l.s4 1934713408
        %v4046 = vunpack.c.0.s8 %v4045
        %v4047 = vlaneseq
        %v4048 = vshrl.u32 %v4047, 7
        %v4049 = vsub.s32 %v4046, %v4048
        %v4050 = vrot.slane %v4036, %v4049
        %v4051 = vcombine.low %v3995, %v4011
        %v4052 = vcombine.high %v3995, %v4011
        %v4054 = vunpack.c.l.s4 1934713408
        %v4055 = vunpack.c.0.s8 %v4054
        %v4056 = vlaneseq
        %v4057 = vshrl.u32 %v4056, 7
        %v4058 = vsub.s32 %v4055, %v4057
        %v4059 = vrot.slane %v4051, %v4058
        %v4061 = vunpack.c.l.s4 1934713408
        %v4062 = vunpack.c.0.s8 %v4061
        %v4063 = vlaneseq
        %v4064 = vshrl.u32 %v4063, 7
        %v4065 = vsub.s32 %v4062, %v4064
        %v4066 = vrot.slane %v4052, %v4065
        %v4067 = vcombine.low %v4002, %v4018
        %v4068 = vcombine.high %v4002, %v4018
        %v4070 = vunpack.c.l.s4 1934713408
        %v4071 = vunpack.c.0.s8 %v4070
        %v4072 = vlaneseq
        %v4073 = vshrl.u32 %v4072, 7
        %v4074 = vsub.s32 %v4071, %v4073
        %v4075 = vrot.slane %v4067, %v4074
        %v4077 = vunpack.c.l.s4 1934713408
        %v4078 = vunpack.c.0.s8 %v4077
        %v4079 = vlaneseq
        %v4080 = vshrl.u32 %v4079, 7
        %v4081 = vsub.s32 %v4078, %v4080
        %v4082 = vrot.slane %v4068, %v4081
        %v4083 = vcombine.low %v4027, %v4059
        %v4084 = vcombine.high %v4027, %v4059
        %v4085 = vcombine.low %v4034, %v4066
        %v4086 = vcombine.high %v4034, %v4066
        %v4087 = vcombine.low %v4043, %v4075
        %v4088 = vcombine.high %v4043, %v4075
        %v4089 = vcombine.low %v4050, %v4082
        %v4090 = vcombine.high %v4050, %v4082
        %4093 = vrot.lane.b32.xlu0 %v3948, 16
        %v4094 = vpop.permute.xlu0 %4093
        %4095 = vrot.lane.b32.xlu0 %v4084, 16
        %v4096 = vpop.permute.xlu0 %4095
        %4101 = vrot.lane.b32.xlu0 %v3949, 32
        %v4102 = vpop.permute.xlu0 %4101
        %4103 = vrot.lane.b32.xlu0 %v4085, 32
        %v4104 = vpop.permute.xlu0 %4103
        %4109 = vrot.lane.b32.xlu0 %v3950, 48
        %v4110 = vpop.permute.xlu0 %4109
        %4111 = vrot.lane.b32.xlu0 %v4086, 48
        %v4112 = vpop.permute.xlu0 %4111
        %4117 = vrot.lane.b32.xlu0 %v3951, 64
        %v4118 = vpop.permute.xlu0 %4117
        %4119 = vrot.lane.b32.xlu0 %v4087, 64
        %v4120 = vpop.permute.xlu0 %4119
        %4125 = vrot.lane.b32.xlu0 %v3952, 80
        %v4126 = vpop.permute.xlu0 %4125
        %4127 = vrot.lane.b32.xlu0 %v4088, 80
        %v4128 = vpop.permute.xlu0 %4127
        %4133 = vrot.lane.b32.xlu0 %v3953, 96
        %v4134 = vpop.permute.xlu0 %4133
        %4135 = vrot.lane.b32.xlu0 %v4089, 96
        %v4136 = vpop.permute.xlu0 %4135
        %4141 = vrot.lane.b32.xlu0 %v3954, 112
        %v4142 = vpop.permute.xlu0 %4141
        %4143 = vrot.lane.b32.xlu0 %v4090, 112
        %v4144 = vpop.permute.xlu0 %4143
        %v4147 = vsel %vm1864, %v3947, %v4094
        %v4148 = vsel %vm1864, %v4083, %v4096
        %vm4149 = vcmask 261120
        %v4150 = vsel %vm4149, %v4147, %v4102
        %v4151 = vsel %vm4149, %v4148, %v4104
        %vm4152 = vcmask 392192
        %v4153 = vsel %vm4152, %v4150, %v4110
        %v4154 = vsel %vm4152, %v4151, %v4112
        %vm4155 = vcmask 523264
        %v4156 = vsel %vm4155, %v4153, %v4118
        %v4157 = vsel %vm4155, %v4154, %v4120
        %vm4158 = vcmask 654336
        %v4159 = vsel %vm4158, %v4156, %v4126
        %v4160 = vsel %vm4158, %v4157, %v4128
        %vm4161 = vcmask 785408
        %v4162 = vsel %vm4161, %v4159, %v4134
        %v4163 = vsel %vm4161, %v4160, %v4136
        %vm4164 = vcmask 916480
        %v4165 = vsel %vm4164, %v4162, %v4142
        %v4166 = vsel %vm4164, %v4163, %v4144
        %v4167 = vpack.c.bf16 %v4166, %v4165
        %v4168 = vld [vmem:[%s458] sm:$0xf]
        %v4169 = vld [vmem:[%s458 + $0x4] sm:$0xf]
        %v4170 = vld [vmem:[%s458 + $0x8] sm:$0xf]
        %v4171 = vld [vmem:[%s458 + $0xc] sm:$0xf]
        %v4172 = vld [vmem:[%s458 + $0x10] sm:$0xf]
        %v4173 = vld [vmem:[%s458 + $0x14] sm:$0xf]
        %v4174 = vld [vmem:[%s458 + $0x18] sm:$0xf]
        %v4175 = vld [vmem:[%s458 + $0x1c] sm:$0xf]
        %v4176 = vld [vmem:[%s458 + $0x20] sm:$0xf]
        %v4177 = vld [vmem:[%s458 + $0x24] sm:$0xf]
        %v4178 = vld [vmem:[%s458 + $0x28] sm:$0xf]
        %v4179 = vld [vmem:[%s458 + $0x2c] sm:$0xf]
        %v4180 = vld [vmem:[%s458 + $0x30] sm:$0xf]
        %v4181 = vld [vmem:[%s458 + $0x34] sm:$0xf]
        %v4182 = vld [vmem:[%s458 + $0x38] sm:$0xf]
        %v4183 = vld [vmem:[%s458 + $0x3c] sm:$0xf]
        %v4200 = vunpack.c.l.b16 %v4168
        %v4201 = vunpack.c.l.b16 %v4169
        %v4202 = vunpack.c.l.b16 %v4170
        %v4203 = vunpack.c.l.b16 %v4171
        %v4204 = vunpack.c.l.b16 %v4172
        %v4205 = vunpack.c.l.b16 %v4173
        %v4206 = vunpack.c.l.b16 %v4174
        %v4207 = vunpack.c.l.b16 %v4175
        %v4208 = vunpack.c.l.b16 %v4176
        %v4209 = vunpack.c.l.b16 %v4177
        %v4210 = vunpack.c.l.b16 %v4178
        %v4211 = vunpack.c.l.b16 %v4179
        %v4212 = vunpack.c.l.b16 %v4180
        %v4213 = vunpack.c.l.b16 %v4181
        %v4214 = vunpack.c.l.b16 %v4182
        %v4215 = vunpack.c.l.b16 %v4183
        %v4216 = vpack.c.b16 %v4201, %v4200
        %v4217 = vpack.c.b16 %v4203, %v4202
        %v4218 = vpack.c.b16 %v4205, %v4204
        %v4219 = vpack.c.b16 %v4207, %v4206
        %v4220 = vpack.c.b16 %v4209, %v4208
        %v4221 = vpack.c.b16 %v4211, %v4210
        %v4222 = vpack.c.b16 %v4213, %v4212
        %v4223 = vpack.c.b16 %v4215, %v4214
        %4232 = vmatprep.subr.bf16.mxu0 0
        %4233 = vmatpush1.bf16.msra.mxu0 %v4216
        %4234 = vmatprep.subr.bf16.mxu0 0
        %4235 = vmatpush1.bf16.msra.mxu0 %v4217
        %4236 = vmatprep.subr.bf16.mxu0 0
        %4237 = vmatpush1.bf16.msra.mxu0 %v4218
        %4238 = vmatprep.subr.bf16.mxu0 0
        %4239 = vmatpush1.bf16.msra.mxu0 %v4219
        %4240 = vmatprep.subr.bf16.mxu0 0
        %4241 = vmatpush1.bf16.msra.mxu0 %v4220
        %4242 = vmatprep.subr.bf16.mxu0 0
        %4243 = vmatpush1.bf16.msra.mxu0 %v4221
        %4244 = vmatprep.subr.bf16.mxu0 0
        %4245 = vmatpush1.bf16.msra.mxu0 %v4222
        %4246 = vmatprep.subr.bf16.mxu0 0
        %4247 = vmatpush1.bf16.msra.mxu0 %v4223
        %4248 = vmatprep.subr.bf16.mxu0 0
        %4249 = vmatpush1.bf16.msra.mxu0 0
        %4250 = vmatprep.subr.bf16.mxu0 0
        %4251 = vmatpush1.bf16.msra.mxu0 0
        %4252 = vmatprep.subr.bf16.mxu0 0
        %4253 = vmatpush1.bf16.msra.mxu0 0
        %4254 = vmatprep.subr.bf16.mxu0 0
        %4255 = vmatpush1.bf16.msra.mxu0 0
        %4256 = vmatprep.subr.bf16.mxu0 0
        %4257 = vmatpush1.bf16.msra.mxu0 0
        %4258 = vmatprep.subr.bf16.mxu0 0
        %4259 = vmatpush1.bf16.msra.mxu0 0
        %4260 = vmatprep.subr.bf16.mxu0 0
        %4261 = vmatpush1.bf16.msra.mxu0 0
        %4262 = vmatprep.subr.bf16.mxu0 0
        %4263 = vmatpush1.bf16.msra.mxu0 0
        %4264 = vmatprep.mubr.bf16.mxu0 0
        %4265 = vmatmul.mubr.bf16.gmra.mrb[0].mxu0 %v4167
        %v4266 = vpop.f32.mrb[0].mxu0
        %v4267 = vadd.f32 0.0, %v4266
        %v4268 = vpop.f32.mrb[0].mxu0
        %v4269 = vpop.f32.mrb[0].mxu0
        %v4270 = vadd.f32 0.0, %v4269
        %v4271 = vpop.f32.mrb[0].mxu0
        %4272 = vdwg.mxu0
        %v4273 = vadd.f32 %v476, %v4267
        %v4274 = vadd.f32 %v477, %v4270
        %v4275 = vlaneseq
        %v4276 = vshrl.u32 %v4275, 7
        %v4277 = vsub.s32 4, %v4276
        %v4278 = vrot.slane %v478, %v4277
        %v4279 = vadd.f32 %v4273, %v4278
        %v4280 = vadd.f32 %v4274, %v4278
        %4281 = vadd.xlane.f32.xlu0 %v4279
        %v4282 = vpop.xlane.xlu0 %4281
        %4283 = vadd.xlane.f32.xlu0 %v4280
        %v4284 = vpop.xlane.xlu0 %4283
        %v4285 = vmul.f32 %v4282, %v484
        %v4286 = vmul.f32 %v4284, %v484
        %v4287 = vsub.f32 %v4279, %v4285
        %v4288 = vsub.f32 %v4280, %v4286
        %v4289 = vmul.f32 %v4287, %v4287
        %v4290 = vmul.f32 %v4288, %v4288
        %4291 = vadd.xlane.f32.xlu0 %v4289
        %v4292 = vpop.xlane.xlu0 %4291
        %4293 = vadd.xlane.f32.xlu0 %v4290
        %v4294 = vpop.xlane.xlu0 %4293
        %v4295 = vmul.f32 %v4292, %v484
        %v4296 = vmul.f32 %v4294, %v484
        %v4297 = vadd.f32 %v4295, 1e-05
        %v4298 = vadd.f32 %v4296, 1e-05
        %v4299 = vrsqrt.pop %v4297
        %v4300 = vrsqrt.pop %v4298
        %v4301 = vmul.f32 %v4287, %v4299
        %v4302 = vmul.f32 %v4288, %v4300
        %v4303 = vlaneseq
        %v4304 = vshrl.u32 %v4303, 7
        %v4305 = vsub.s32 2, %v4304
        %v4306 = vrot.slane %v478, %v4305
        %v4307 = vmul.f32 %v4301, %v4306
        %v4308 = vmul.f32 %v4302, %v4306
        %v4309 = vlaneseq
        %v4310 = vshrl.u32 %v4309, 7
        %v4311 = vsub.s32 3, %v4310
        %v4312 = vrot.slane %v478, %v4311
        %v4313 = vadd.f32 %v4307, %v4312
        %v4314 = vadd.f32 %v4308, %v4312
        %v4315 = vpack.c.bf16 %v4314, %v4313
        %v4316 = vld [vmem:[%s372] sm:$0xff]
        %v4317 = vld [vmem:[%s372 + $0x8] sm:$0xff]
        %v4318 = vld [vmem:[%s372 + $0x10] sm:$0xff]
        %v4319 = vld [vmem:[%s372 + $0x18] sm:$0xff]
        %v4320 = vld [vmem:[%s372 + $0x20] sm:$0xff]
        %v4321 = vld [vmem:[%s372 + $0x28] sm:$0xff]
        %v4322 = vld [vmem:[%s372 + $0x30] sm:$0xff]
        %v4323 = vld [vmem:[%s372 + $0x38] sm:$0xff]
        %v4324 = vld [vmem:[%s372 + $0x40] sm:$0xff]
        %v4325 = vld [vmem:[%s372 + $0x48] sm:$0xff]
        %v4326 = vld [vmem:[%s372 + $0x50] sm:$0xff]
        %v4327 = vld [vmem:[%s372 + $0x58] sm:$0xff]
        %v4328 = vld [vmem:[%s372 + $0x60] sm:$0xff]
        %v4329 = vld [vmem:[%s372 + $0x68] sm:$0xff]
        %v4330 = vld [vmem:[%s372 + $0x70] sm:$0xff]
        %v4331 = vld [vmem:[%s372 + $0x78] sm:$0xff]
        %v4333 = vlaneseq
        %v4334 = vshrl.u32 %v4333, 7
        %v4335 = vsub.s32 0, %v4334
        %v4336 = vrot.slane %v479, %v4335
        %v4337 = vlaneseq
        %v4338 = vshrl.u32 %v4337, 7
        %v4339 = vsub.s32 1, %v4338
        %v4340 = vrot.slane %v479, %v4339
        %v4359 = vunpack.c.l.b16 %v4316
        %v4360 = vunpack.c.h.b16 %v4316
        %v4361 = vunpack.c.l.b16 %v4317
        %v4362 = vunpack.c.h.b16 %v4317
        %v4363 = vunpack.c.l.b16 %v4318
        %v4364 = vunpack.c.h.b16 %v4318
        %v4365 = vunpack.c.l.b16 %v4319
        %v4366 = vunpack.c.h.b16 %v4319
        %v4367 = vunpack.c.l.b16 %v4320
        %v4368 = vunpack.c.h.b16 %v4320
        %v4369 = vunpack.c.l.b16 %v4321
        %v4370 = vunpack.c.h.b16 %v4321
        %v4371 = vunpack.c.l.b16 %v4322
        %v4372 = vunpack.c.h.b16 %v4322
        %v4373 = vunpack.c.l.b16 %v4323
        %v4374 = vunpack.c.h.b16 %v4323
        %v4375 = vunpack.c.l.b16 %v4324
        %v4376 = vunpack.c.h.b16 %v4324
        %v4377 = vunpack.c.l.b16 %v4325
        %v4378 = vunpack.c.h.b16 %v4325
        %v4379 = vunpack.c.l.b16 %v4326
        %v4380 = vunpack.c.h.b16 %v4326
        %v4381 = vunpack.c.l.b16 %v4327
        %v4382 = vunpack.c.h.b16 %v4327
        %v4383 = vunpack.c.l.b16 %v4328
        %v4384 = vunpack.c.h.b16 %v4328
        %v4385 = vunpack.c.l.b16 %v4329
        %v4386 = vunpack.c.h.b16 %v4329
        %v4387 = vunpack.c.l.b16 %v4330
        %v4388 = vunpack.c.h.b16 %v4330
        %v4389 = vunpack.c.l.b16 %v4331
        %v4390 = vunpack.c.h.b16 %v4331
        %v4391 = vpack.c.b16 %v4361, %v4359
        %v4392 = vpack.c.b16 %v4362, %v4360
        %v4393 = vpack.c.b16 %v4365, %v4363
        %v4394 = vpack.c.b16 %v4366, %v4364
        %v4395 = vpack.c.b16 %v4369, %v4367
        %v4396 = vpack.c.b16 %v4370, %v4368
        %v4397 = vpack.c.b16 %v4373, %v4371
        %v4398 = vpack.c.b16 %v4374, %v4372
        %v4399 = vpack.c.b16 %v4377, %v4375
        %v4400 = vpack.c.b16 %v4378, %v4376
        %v4401 = vpack.c.b16 %v4381, %v4379
        %v4402 = vpack.c.b16 %v4382, %v4380
        %v4403 = vpack.c.b16 %v4385, %v4383
        %v4404 = vpack.c.b16 %v4386, %v4384
        %v4405 = vpack.c.b16 %v4389, %v4387
        %v4406 = vpack.c.b16 %v4390, %v4388
        %4423 = vmatprep.subr.bf16.mxu0 %v4392
        %4424 = vmatpush1.bf16.msra.mxu0 %v4391
        %4425 = vmatprep.subr.bf16.mxu0 %v4394
        %4426 = vmatpush1.bf16.msra.mxu0 %v4393
        %4427 = vmatprep.subr.bf16.mxu0 %v4396
        %4428 = vmatpush1.bf16.msra.mxu0 %v4395
        %4429 = vmatprep.subr.bf16.mxu0 %v4398
        %4430 = vmatpush1.bf16.msra.mxu0 %v4397
        %4431 = vmatprep.subr.bf16.mxu0 %v4400
        %4432 = vmatpush1.bf16.msra.mxu0 %v4399
        %4433 = vmatprep.subr.bf16.mxu0 %v4402
        %4434 = vmatpush1.bf16.msra.mxu0 %v4401
        %4435 = vmatprep.subr.bf16.mxu0 %v4404
        %4436 = vmatpush1.bf16.msra.mxu0 %v4403
        %4437 = vmatprep.subr.bf16.mxu0 %v4406
        %4438 = vmatpush1.bf16.msra.mxu0 %v4405
        %4439 = vmatprep.subr.bf16.mxu0 0
        %4440 = vmatpush1.bf16.msra.mxu0 0
        %4441 = vmatprep.subr.bf16.mxu0 0
        %4442 = vmatpush1.bf16.msra.mxu0 0
        %4443 = vmatprep.subr.bf16.mxu0 0
        %4444 = vmatpush1.bf16.msra.mxu0 0
        %4445 = vmatprep.subr.bf16.mxu0 0
        %4446 = vmatpush1.bf16.msra.mxu0 0
        %4447 = vmatprep.subr.bf16.mxu0 0
        %4448 = vmatpush1.bf16.msra.mxu0 0
        %4449 = vmatprep.subr.bf16.mxu0 0
        %4450 = vmatpush1.bf16.msra.mxu0 0
        %4451 = vmatprep.subr.bf16.mxu0 0
        %4452 = vmatpush1.bf16.msra.mxu0 0
        %4453 = vmatprep.subr.bf16.mxu0 0
        %4454 = vmatpush1.bf16.msra.mxu0 0
        %4455 = vmatprep.mubr.bf16.mxu0 0
        %4456 = vmatmul.mubr.bf16.gmra.mrb[0].mxu0 %v4315
        %v4457 = vpop.f32.mrb[0].mxu0
        %v4458 = vadd.f32 %v4336, %v4457
        %v4459 = vpop.f32.mrb[0].mxu0
        %v4460 = vadd.f32 %v4340, %v4459
        %v4461 = vpop.f32.mrb[0].mxu0
        %v4462 = vadd.f32 %v4336, %v4461
        %v4463 = vpop.f32.mrb[0].mxu0
        %v4464 = vadd.f32 %v4340, %v4463
        %4465 = vdwg.mxu0
        %v4466 = vmax.f32 %v4458, 0.0
        %v4467 = vmax.f32 %v4460, 0.0
        %v4468 = vmax.f32 %v4462, 0.0
        %v4469 = vmax.f32 %v4464, 0.0
        %v4470 = vpack.c.bf16 %v4468, %v4466
        %v4471 = vpack.c.bf16 %v4469, %v4467
        %v4472 = vld [vmem:[%s381] sm:$0xf]
        %v4473 = vld [vmem:[%s381 + $0x4] sm:$0xf]
        %v4474 = vld [vmem:[%s381 + $0x8] sm:$0xf]
        %v4475 = vld [vmem:[%s381 + $0xc] sm:$0xf]
        %v4476 = vld [vmem:[%s381 + $0x10] sm:$0xf]
        %v4477 = vld [vmem:[%s381 + $0x14] sm:$0xf]
        %v4478 = vld [vmem:[%s381 + $0x18] sm:$0xf]
        %v4479 = vld [vmem:[%s381 + $0x1c] sm:$0xf]
        %v4480 = vld [vmem:[%s381 + $0x20] sm:$0xf]
        %v4481 = vld [vmem:[%s381 + $0x24] sm:$0xf]
        %v4482 = vld [vmem:[%s381 + $0x28] sm:$0xf]
        %v4483 = vld [vmem:[%s381 + $0x2c] sm:$0xf]
        %v4484 = vld [vmem:[%s381 + $0x30] sm:$0xf]
        %v4485 = vld [vmem:[%s381 + $0x34] sm:$0xf]
        %v4486 = vld [vmem:[%s381 + $0x38] sm:$0xf]
        %v4487 = vld [vmem:[%s381 + $0x3c] sm:$0xf]
        %v4488 = vld [vmem:[%s381 + $0x40] sm:$0xf]
        %v4489 = vld [vmem:[%s381 + $0x44] sm:$0xf]
        %v4490 = vld [vmem:[%s381 + $0x48] sm:$0xf]
        %v4491 = vld [vmem:[%s381 + $0x4c] sm:$0xf]
        %v4492 = vld [vmem:[%s381 + $0x50] sm:$0xf]
        %v4493 = vld [vmem:[%s381 + $0x54] sm:$0xf]
        %v4494 = vld [vmem:[%s381 + $0x58] sm:$0xf]
        %v4495 = vld [vmem:[%s381 + $0x5c] sm:$0xf]
        %v4496 = vld [vmem:[%s381 + $0x60] sm:$0xf]
        %v4497 = vld [vmem:[%s381 + $0x64] sm:$0xf]
        %v4498 = vld [vmem:[%s381 + $0x68] sm:$0xf]
        %v4499 = vld [vmem:[%s381 + $0x6c] sm:$0xf]
        %v4500 = vld [vmem:[%s381 + $0x70] sm:$0xf]
        %v4501 = vld [vmem:[%s381 + $0x74] sm:$0xf]
        %v4502 = vld [vmem:[%s381 + $0x78] sm:$0xf]
        %v4503 = vld [vmem:[%s381 + $0x7c] sm:$0xf]
        %v4536 = vunpack.c.l.b16 %v4472
        %v4537 = vunpack.c.l.b16 %v4473
        %v4538 = vunpack.c.l.b16 %v4474
        %v4539 = vunpack.c.l.b16 %v4475
        %v4540 = vunpack.c.l.b16 %v4476
        %v4541 = vunpack.c.l.b16 %v4477
        %v4542 = vunpack.c.l.b16 %v4478
        %v4543 = vunpack.c.l.b16 %v4479
        %v4544 = vunpack.c.l.b16 %v4480
        %v4545 = vunpack.c.l.b16 %v4481
        %v4546 = vunpack.c.l.b16 %v4482
        %v4547 = vunpack.c.l.b16 %v4483
        %v4548 = vunpack.c.l.b16 %v4484
        %v4549 = vunpack.c.l.b16 %v4485
        %v4550 = vunpack.c.l.b16 %v4486
        %v4551 = vunpack.c.l.b16 %v4487
        %v4552 = vunpack.c.l.b16 %v4488
        %v4553 = vunpack.c.l.b16 %v4489
        %v4554 = vunpack.c.l.b16 %v4490
        %v4555 = vunpack.c.l.b16 %v4491
        %v4556 = vunpack.c.l.b16 %v4492
        %v4557 = vunpack.c.l.b16 %v4493
        %v4558 = vunpack.c.l.b16 %v4494
        %v4559 = vunpack.c.l.b16 %v4495
        %v4560 = vunpack.c.l.b16 %v4496
        %v4561 = vunpack.c.l.b16 %v4497
        %v4562 = vunpack.c.l.b16 %v4498
        %v4563 = vunpack.c.l.b16 %v4499
        %v4564 = vunpack.c.l.b16 %v4500
        %v4565 = vunpack.c.l.b16 %v4501
        %v4566 = vunpack.c.l.b16 %v4502
        %v4567 = vunpack.c.l.b16 %v4503
        %v4568 = vpack.c.b16 %v4537, %v4536
        %v4569 = vpack.c.b16 %v4539, %v4538
        %v4570 = vpack.c.b16 %v4541, %v4540
        %v4571 = vpack.c.b16 %v4543, %v4542
        %v4572 = vpack.c.b16 %v4545, %v4544
        %v4573 = vpack.c.b16 %v4547, %v4546
        %v4574 = vpack.c.b16 %v4549, %v4548
        %v4575 = vpack.c.b16 %v4551, %v4550
        %v4576 = vpack.c.b16 %v4553, %v4552
        %v4577 = vpack.c.b16 %v4555, %v4554
        %v4578 = vpack.c.b16 %v4557, %v4556
        %v4579 = vpack.c.b16 %v4559, %v4558
        %v4580 = vpack.c.b16 %v4561, %v4560
        %v4581 = vpack.c.b16 %v4563, %v4562
        %v4582 = vpack.c.b16 %v4565, %v4564
        %v4583 = vpack.c.b16 %v4567, %v4566
        %4600 = vmatprep.subr.bf16.mxu0 0
        %4601 = vmatpush1.bf16.msra.mxu0 %v4568
        %4602 = vmatprep.subr.bf16.mxu0 0
        %4603 = vmatpush1.bf16.msra.mxu0 %v4569
        %4604 = vmatprep.subr.bf16.mxu0 0
        %4605 = vmatpush1.bf16.msra.mxu0 %v4570
        %4606 = vmatprep.subr.bf16.mxu0 0
        %4607 = vmatpush1.bf16.msra.mxu0 %v4571
        %4608 = vmatprep.subr.bf16.mxu0 0
        %4609 = vmatpush1.bf16.msra.mxu0 %v4572
        %4610 = vmatprep.subr.bf16.mxu0 0
        %4611 = vmatpush1.bf16.msra.mxu0 %v4573
        %4612 = vmatprep.subr.bf16.mxu0 0
        %4613 = vmatpush1.bf16.msra.mxu0 %v4574
        %4614 = vmatprep.subr.bf16.mxu0 0
        %4615 = vmatpush1.bf16.msra.mxu0 %v4575
        %4616 = vmatprep.subr.bf16.mxu0 0
        %4617 = vmatpush1.bf16.msra.mxu0 %v4576
        %4618 = vmatprep.subr.bf16.mxu0 0
        %4619 = vmatpush1.bf16.msra.mxu0 %v4577
        %4620 = vmatprep.subr.bf16.mxu0 0
        %4621 = vmatpush1.bf16.msra.mxu0 %v4578
        %4622 = vmatprep.subr.bf16.mxu0 0
        %4623 = vmatpush1.bf16.msra.mxu0 %v4579
        %4624 = vmatprep.subr.bf16.mxu0 0
        %4625 = vmatpush1.bf16.msra.mxu0 %v4580
        %4626 = vmatprep.subr.bf16.mxu0 0
        %4627 = vmatpush1.bf16.msra.mxu0 %v4581
        %4628 = vmatprep.subr.bf16.mxu0 0
        %4629 = vmatpush1.bf16.msra.mxu0 %v4582
        %4630 = vmatprep.subr.bf16.mxu0 0
        %4631 = vmatpush1.bf16.msra.mxu0 %v4583
        %4632 = vmatprep.mubr.bf16.mxu0 %v4471
        %4633 = vmatmul.mubr.bf16.gmra.mrb[0].mxu0 %v4470
        %v4634 = vpop.f32.mrb[0].mxu0
        %v4635 = vadd.f32 0.0, %v4634
        %v4636 = vpop.f32.mrb[0].mxu0
        %v4637 = vpop.f32.mrb[0].mxu0
        %v4638 = vadd.f32 0.0, %v4637
        %v4639 = vpop.f32.mrb[0].mxu0
        %4640 = vdwg.mxu0
        %v4641 = vadd.f32 %v4279, %v4635
        %v4642 = vadd.f32 %v4280, %v4638
        %v4643 = vlaneseq
        %v4644 = vshrl.u32 %v4643, 7
        %v4645 = vsub.s32 5, %v4644
        %v4646 = vrot.slane %v478, %v4645
        %v4647 = vadd.f32 %v4641, %v4646
        %v4648 = vadd.f32 %v4642, %v4646
        %4649 = vst [vmem:[#allocation2] sm:$0xff] %v4647
        %4650 = vst [vmem:[#allocation2 + $0x8] sm:$0xff] %v4648
        %p4651 = scmp.eq.s32.totalorder %s29, 1
        // Predicated region
        $region65: #{transformer_mapper_forward.3} parent=47 // pred_check
          %p4652 = pneg %p4651
        $region66: #{transformer_mapper_forward.3} parent=47 // pred_check_branch
          %4654 = sbr.rel (%p4652) target = $region68
        $region67: #{transformer_mapper_forward.3} parent=47 // pred_region
          %4655 = vst [vmem:[%s463] sm:$0xff] %v4647
          %4656 = vst [vmem:[%s463 + $0x8] sm:$0xff] %v4648
        $region68: #{transformer_mapper_forward.3} parent=47 // pred_fallthru
          _
        %s4657 = smul.u32 2, %s28
        %p4658 = scmp.lt.s32.totalorder %s4657, 1
        %s4659 = scalar_select %p4658, %s4657, 1
        %s4660 = smul.addr %s4659, 8
        %s4661 = scalar_lea.vmem %s7, %s4660
        // Predicated region
        $region69: #{transformer_mapper_forward.3} parent=47 // pred_check
          %p4662 = pneg %p236
        $region70: #{transformer_mapper_forward.3} parent=47 // pred_check_branch
          %4664 = sbr.rel (%p4662) target = $region72
        $region71: #{transformer_mapper_forward.3} parent=47 // pred_region
          %s4665 = smul.u32 2, %s28
        $region72: #{transformer_mapper_forward.3} parent=47 // pred_fallthru
          _
        // Predicated region
        $region73: #{transformer_mapper_forward.3} parent=47 // pred_check
          %p4666 = pneg %p236
        $region74: #{transformer_mapper_forward.3} parent=47 // pred_check_branch
          %4668 = sbr.rel (%p4666) target = $region76
        $region75: #{transformer_mapper_forward.3} parent=47 // pred_region
          %s4669 = smul.u32 2, %s28
          %p4670 = scmp.lt.s32.totalorder %s4669, 1
          %s4671 = scalar_select %p4670, %s4669, 1
          %s4672 = smul.addr %s4671, 8
          %s4673 = scalar_lea.vmem %s7, %s4672
        $region76: #{transformer_mapper_forward.3} parent=47 // pred_fallthru
          _
      $region48: #{transformer_mapper_forward.3} parent=5 // pred_fallthru
        _
      %p4674 = scmp.le.s32.totalorder 2, %s19
      // Predicated region
      $region77: #{transformer_mapper_forward.3} parent=5 // pred_check
        %p4675 = pneg %p4674
      $region78: #{transformer_mapper_forward.3} parent=5 // pred_check_branch
        %4677 = sbr.rel (%p4675) target = $region80
      $region79: #{transformer_mapper_forward.3} parent=5 // pred_region
        %s4678 = ssub.s32 %s19, 2
      $region80: #{transformer_mapper_forward.3} parent=5 // pred_fallthru
        _
    $region6: #{transformer_mapper_forward.3} parent=1 // loop_footer
      %s23 = sadd.s32 1, %s19
    $region7: #{transformer_mapper_forward.3} parent=1 // loop_footer_branch
      %18 = sbr.rel target = $region3
    $region8: #{transformer_mapper_forward.3} parent=1 // loop_exit
      _
    %4679 = vsyncpa [#allocation4], 1
    %s4680 = scalar_lea.sflag [#allocation4], 1
    %4681 = vsyncpa %s4680, 1
    %4682 = vsyncpa [#allocation6], 1
    %s4683 = scalar_lea.sflag [#allocation6], 1
    %4684 = vsyncpa %s4683, 1

</llo_original>
